<compile_context>
chip_gen: v7x
topology: tpu7x:2x2x1
jax: 0.10.0
libtpu: 0.0.40
codegen_flags: <defaults>
</compile_context>

<pallas_src>
import jax
import jax.numpy as jnp
from jax.experimental import pallas as pl
from jax.experimental.pallas import tpu as pltpu

PAD_IDX = 0  # target padding index (tgt_embedder.padding_idx)

_COMPILER_PARAMS = pltpu.CompilerParams(
    dimension_semantics=("parallel", "arbitrary"),   # batch -> megacore, vocab -> streamed
    vmem_limit_bytes=48 * 1024 * 1024,               # headroom for larger Bt/Vt, <= v7x physical
)


# --------------------------------------------------------------------------------------
# Shared in-kernel pieces
# --------------------------------------------------------------------------------------
def _hidden_states(mask, emb_x, emb_y, w_enc, b_enc, w_dec_cat, b_dec, bt, tx, ty):
    """Encoder MLP + masked mean pooling + fused decoder/context projection.

    mask: (bt, tx) f32, emb_x: (bt*tx, D) bf16, emb_y: (bt*ty, D) bf16
    returns bf16 decoder hidden states of shape (bt*ty, H) ready for the output projection.
    """
    h = w_enc.shape[1]
    # encoder: bf16 MXU matmul, f32 accumulation, f32 tanh
    h_enc = jnp.tanh(
        jnp.dot(emb_x, w_enc, preferred_element_type=jnp.float32) + b_enc
    ).reshape(bt, tx, h)                                                  # (bt, tx, H) f32
    # masked mean pooling over source time
    denom = jnp.maximum(jnp.sum(mask, axis=1, keepdims=True), 1.0)        # (bt, 1)
    ctx = jnp.sum(h_enc * mask[..., None], axis=1) / denom                # (bt, H) f32
    # fused decoder + context projection: [emb_y | ctx] @ [W_dec; W_ctx], K = D + H
    ctx_rows = jnp.broadcast_to(
        ctx.astype(jnp.bfloat16)[:, None, :], (bt, ty, h)).reshape(bt * ty, h)
    dec_in = jnp.concatenate([emb_y, ctx_rows], axis=-1)                  # (bt*ty, D+H) bf16
    hid = jnp.tanh(
        jnp.dot(dec_in, w_dec_cat, preferred_element_type=jnp.float32) + b_dec)
    return hid.astype(jnp.bfloat16)                                       # (bt*ty, H) bf16


def _online_softmax_update(logits3, tgt, v_off, m_sc, l_sc, tz_sc):
    """One vocab tile of the online log-sum-exp + target-logit gather.

    logits3: (bt, ty, vt) f32 tile, tgt: (bt, ty) int32, v_off: scalar vocab offset of this tile.
    """
    tile_max = jnp.max(logits3, axis=-1)                                  # (bt, ty)
    m_new = jnp.maximum(m_sc[...], tile_max)
    scale = jnp.exp(m_sc[...] - m_new)
    p_sum = jnp.sum(jnp.exp(logits3 - m_new[..., None]), axis=-1)
    l_sc[...] = l_sc[...] * scale + p_sum
    m_sc[...] = m_new
    # gather the target logit of this tile (offset iota; at most one hit per token)
    iota = jax.lax.broadcasted_iota(jnp.int32, logits3.shape, 2) + v_off
    tz_sc[...] += jnp.sum(jnp.where(iota == tgt[..., None], logits3, 0.0), axis=-1)


def _finalize_token_logprobs(tgt, m_sc, l_sc, tz_sc):
    """tok_lp = gathered_logit - logsumexp, with PAD targets masked to 0."""
    tok_lp = tz_sc[...] - (m_sc[...] + jnp.log(l_sc[...]))                # (bt, ty)
    return jnp.where(tgt != PAD_IDX, tok_lp, 0.0)


# --------------------------------------------------------------------------------------
# Kernel 1: forward-only (logits, no loss epilogue).  Grid = (B//Bt, V//Vt).
# --------------------------------------------------------------------------------------
def nmt_forward_kernel(mask_ref, emb_x_ref, emb_y_ref,
                       w_enc_ref, b_enc_ref, w_dec_ref, b_dec_ref,
                       w_out_ref, b_out_ref,
                       logits_ref, hid_sc):
    bt, ty, vt = logits_ref.shape
    tx = mask_ref.shape[1]

    # decoder hidden states computed once per batch block, reused for every vocab tile
    @pl.when(pl.program_id(1) == 0)
    def _():
        hid_sc[...] = _hidden_states(mask_ref[...], emb_x_ref[...], emb_y_ref[...],
                                     w_enc_ref[...], b_enc_ref[...],
                                     w_dec_ref[...], b_dec_ref[...], bt, tx, ty)

    logits_ref[...] = (
        jnp.dot(hid_sc[...], w_out_ref[...], preferred_element_type=jnp.float32)
        + b_out_ref[...]).reshape(bt, ty, vt)


# --------------------------------------------------------------------------------------
# Kernel 2: fused forward + masked NLL (training fast path).  No logits writeback.
# --------------------------------------------------------------------------------------
def nmt_train_kernel(mask_ref, tgt_ref, emb_x_ref, emb_y_ref,
                     w_enc_ref, b_enc_ref, w_dec_ref, b_dec_ref,
                     w_out_ref, b_out_ref,
                     tok_lp_ref, hid_sc, m_sc, l_sc, tz_sc):
    v = pl.program_id(1)
    nv = pl.num_programs(1)
    bt, ty = tgt_ref.shape
    tx = mask_ref.shape[1]
    vt = w_out_ref.shape[1]

    @pl.when(v == 0)
    def _():
        hid_sc[...] = _hidden_states(mask_ref[...], emb_x_ref[...], emb_y_ref[...],
                                     w_enc_ref[...], b_enc_ref[...],
                                     w_dec_ref[...], b_dec_ref[...], bt, tx, ty)
        m_sc[...] = jnp.full_like(m_sc, -jnp.inf)
        l_sc[...] = jnp.zeros_like(l_sc)
        tz_sc[...] = jnp.zeros_like(tz_sc)

    # output projection for this vocab tile, consumed in VMEM (never written to HBM)
    logits3 = (jnp.dot(hid_sc[...], w_out_ref[...], preferred_element_type=jnp.float32)
               + b_out_ref[...]).reshape(bt, ty, vt)
    tgt = tgt_ref[...]
    _online_softmax_update(logits3, tgt, v * vt, m_sc, l_sc, tz_sc)

    @pl.when(v == nv - 1)
    def _():
        tok_lp_ref[...] = _finalize_token_logprobs(tgt, m_sc, l_sc, tz_sc)


# --------------------------------------------------------------------------------------
# Kernel 3: standalone masked NLL over already-materialized logits (module loss() API).
# --------------------------------------------------------------------------------------
def nll_loss_kernel(logits_ref, tgt_ref, tok_lp_ref, m_sc, l_sc, tz_sc):
    v = pl.program_id(1)
    nv = pl.num_programs(1)
    vt = logits_ref.shape[-1]

    @pl.when(v == 0)
    def _():
        m_sc[...] = jnp.full_like(m_sc, -jnp.inf)
        l_sc[...] = jnp.zeros_like(l_sc)
        tz_sc[...] = jnp.zeros_like(tz_sc)

    tgt = tgt_ref[...]
    _online_softmax_update(logits_ref[...].astype(jnp.float32), tgt, v * vt,
                           m_sc, l_sc, tz_sc)

    @pl.when(v == nv - 1)
    def _():
        tok_lp_ref[...] = _finalize_token_logprobs(tgt, m_sc, l_sc, tz_sc)


# --------------------------------------------------------------------------------------
# Python-side model wrapper (parameters + pallas_call plumbing).
# --------------------------------------------------------------------------------------
class ConditionalNMT:
    def __init__(self, params, batch_block=16, vocab_block=128):
        self.params = params              # dict of jnp arrays (weights bf16, biases f32)
        self.batch_block = batch_block    # raise until VMEM-limited (Bt*T rows >= 256-512)
        self.vocab_block = vocab_block    # vocab tile streamed along the "arbitrary" grid axis

    def _blocks(self, B, V):
        Bt = min(self.batch_block, B)
        Vt = min(self.vocab_block, V)
        assert B % Bt == 0 and Bt % 8 == 0, "demo requires aligned batch blocks"
        assert V % Vt == 0 and Vt % 128 == 0, "vocab tile must be lane-aligned"
        return Bt, Vt

    def _embed(self, x, y):
        # TODO(synk): fuse the embedding gathers into the kernel (scalar-prefetch token ids +
        # per-row DMA from HBM) to remove this extra HBM round trip of the embedded sequences.
        p = self.params
        emb_x = jnp.take(p["src_emb"], x, axis=0)   # (B, Tx, D) bf16
        emb_y = jnp.take(p["tgt_emb"], y, axis=0)   # (B, Ty, D) bf16
        return emb_x, emb_y

    def _weight_specs(self, D, H, Vt):
        # Constant index maps -> VMEM-resident across the batch axis; W_out/b_out streamed per
        # vocab tile along the trailing grid axis.
        return [
            pl.BlockSpec((D, H), lambda b, v: (0, 0)),        # W_enc
            pl.BlockSpec((1, H), lambda b, v: (0, 0)),        # b_enc
            pl.BlockSpec((D + H, H), lambda b, v: (0, 0)),    # W_dec_cat = [W_dec; W_ctx]
            pl.BlockSpec((1, H), lambda b, v: (0, 0)),        # b_dec
            pl.BlockSpec((H, Vt), lambda b, v: (0, v)),       # W_out vocab tile
            pl.BlockSpec((1, Vt), lambda b, v: (0, v)),       # b_out vocab tile
        ]

    # ---- forward: (likelihood, state) — matches the module API, no dead loss epilogue ----
    def forward(self, x, seq_mask_x, seq_len_x, y):
        # seq_len_x only feeds seq_mask_x upstream; the kernel consumes the mask directly.
        p = self.params
        emb_x, emb_y = self._embed(x, y)
        B, Tx, D = emb_x.shape
        Ty = emb_y.shape[1]
        H = p["W_enc"].shape[1]
        V = p["W_out"].shape[1]
        Bt, Vt = self._blocks(B, V)

        mask = seq_mask_x.astype(jnp.float32)               # (B, Tx)
        emb_x2 = emb_x.reshape(B * Tx, D)                   # row-flattened for the MXU
        emb_y2 = emb_y.reshape(B * Ty, D)

        logits = pl.pallas_call(
            nmt_forward_kernel,
            out_shape=jax.ShapeDtypeStruct((B, Ty, V), jnp.float32),
            grid=(B // Bt, V // Vt),
            in_specs=[
                pl.BlockSpec((Bt, Tx), lambda b, v: (b, 0)),
                pl.BlockSpec((Bt * Tx, D), lambda b, v: (b, 0)),
                pl.BlockSpec((Bt * Ty, D), lambda b, v: (b, 0)),
                *self._weight_specs(D, H, Vt),
            ],
            out_specs=pl.BlockSpec((Bt, Ty, Vt), lambda b, v: (b, 0, v)),
            scratch_shapes=[pltpu.VMEM((Bt * Ty, H), jnp.bfloat16)],   # decoder hidden states
            compiler_params=_COMPILER_PARAMS,
        )(mask, emb_x2, emb_y2,
          p["W_enc"], p["b_enc"], p["W_dec_cat"], p["b_dec"], p["W_out"], p["b_out"])
        state = {}
        return logits, state

    # ---- fused forward + loss: training fast path, no [B,Ty,V] HBM writeback at all ----
    def forward_and_loss(self, x, seq_mask_x, seq_len_x, y, targets, reduction="mean"):
        p = self.params
        emb_x, emb_y = self._embed(x, y)
        B, Tx, D = emb_x.shape
        Ty = emb_y.shape[1]
        H = p["W_enc"].shape[1]
        V = p["W_out"].shape[1]
        Bt, Vt = self._blocks(B, V)

        mask = seq_mask_x.astype(jnp.float32)
        tgt = targets.astype(jnp.int32)
        emb_x2 = emb_x.reshape(B * Tx, D)
        emb_y2 = emb_y.reshape(B * Ty, D)

        tok_lp = pl.pallas_call(
            nmt_train_kernel,
            out_shape=jax.ShapeDtypeStruct((B, Ty), jnp.float32),
            grid=(B // Bt, V // Vt),
            in_specs=[
                pl.BlockSpec((Bt, Tx), lambda b, v: (b, 0)),
                pl.BlockSpec((Bt, Ty), lambda b, v: (b, 0)),
                pl.BlockSpec((Bt * Tx, D), lambda b, v: (b, 0)),
                pl.BlockSpec((Bt * Ty, D), lambda b, v: (b, 0)),
                *self._weight_specs(D, H, Vt),
            ],
            out_specs=pl.BlockSpec((Bt, Ty), lambda b, v: (b, 0)),
            scratch_shapes=[
                pltpu.VMEM((Bt * Ty, H), jnp.bfloat16),   # decoder hidden states
                pltpu.VMEM((Bt, Ty), jnp.float32),        # running max
                pltpu.VMEM((Bt, Ty), jnp.float32),        # running sum(exp)
                pltpu.VMEM((Bt, Ty), jnp.float32),        # gathered target logit
            ],
            compiler_params=_COMPILER_PARAMS,
        )(mask, tgt, emb_x2, emb_y2,
          p["W_enc"], p["b_enc"], p["W_dec_cat"], p["b_dec"], p["W_out"], p["b_out"])

        log_likelihood = jnp.sum(tok_lp, axis=-1)            # (B,) tiny glue reduce over Ty
        loss = -log_likelihood
        if reduction == "mean":
            loss = jnp.mean(loss)
        elif reduction == "sum":
            loss = jnp.sum(loss)
        return {}, {"loss": loss}

    # ---- loss: masked NLL of targets under Categorical(logits) — matches the module API ----
    def loss(self, likelihood, targets, reduction, label_smoothing=0.0):
        # TODO(synk): label_smoothing_loss is an external helper in the reference repo; the
        # label_smoothing > 0 path is not implemented here.
        logits = likelihood                                   # (B, Ty, V)
        B, Ty, V = logits.shape
        Bt, Vt = self._blocks(B, V)
        tgt = targets.astype(jnp.int32)

        tok_lp = pl.pallas_call(
            nll_loss_kernel,
            out_shape=jax.ShapeDtypeStruct((B, Ty), jnp.float32),
            grid=(B // Bt, V // Vt),
            in_specs=[
                pl.BlockSpec((Bt, Ty, Vt), lambda b, v: (b, 0, v)),
                pl.BlockSpec((Bt, Ty), lambda b, v: (b, 0)),
            ],
            out_specs=pl.BlockSpec((Bt, Ty), lambda b, v: (b, 0)),
            scratch_shapes=[pltpu.VMEM((Bt, Ty), jnp.float32)] * 3,
            compiler_params=_COMPILER_PARAMS,
        )(logits, tgt)

        log_likelihood = jnp.sum(tok_lp, axis=-1)
        loss = -log_likelihood
        if reduction == "mean":
            loss = jnp.mean(loss)
        elif reduction == "sum":
            loss = jnp.sum(loss)
        return {"loss": loss}


# --------------------------------------------------------------------------------------
# Deterministic parameters + plain-JAX reference (same bf16/f32 mixed precision).
# --------------------------------------------------------------------------------------
def make_params(key, V_src, V_tgt, D, H):
    ks = jax.random.split(key, 6)
    s = 0.1

    def bf16(k, shape):
        return (s * jax.random.normal(k, shape, jnp.float32)).astype(jnp.bfloat16)

    W_dec = bf16(ks[3], (D, H))
    W_ctx = bf16(ks[4], (H, H))
    return {
        "src_emb": bf16(ks[0], (V_src, D)),
        "tgt_emb": bf16(ks[1], (V_tgt, D)),
        "W_enc":   bf16(ks[2], (D, H)),
        "b_enc":   jnp.zeros((1, H), jnp.float32),
        # decoder + context projections stacked so the kernel runs ONE K = D+H matmul
        "W_dec_cat": jnp.concatenate([W_dec, W_ctx], axis=0),   # (D+H, H) bf16
        "b_dec":   jnp.zeros((1, H), jnp.float32),
        "W_out":   bf16(ks[5], (H, V_tgt)),
        "b_out":   jnp.zeros((1, V_tgt), jnp.float32),
    }


def reference_forward(p, x, seq_mask_x, y):
    emb_x = jnp.take(p["src_emb"], x, axis=0)
    emb_y = jnp.take(p["tgt_emb"], y, axis=0)
    B, _, _ = emb_x.shape
    Ty = emb_y.shape[1]
    H = p["W_enc"].shape[1]
    h_enc = jnp.tanh(jnp.einsum("btd,dh->bth", emb_x, p["W_enc"],
                                preferred_element_type=jnp.float32) + p["b_enc"][0])
    m = seq_mask_x.astype(jnp.float32)
    denom = jnp.maximum(jnp.sum(m, axis=1, keepdims=True), 1.0)
    ctx = jnp.sum(h_enc * m[..., None], axis=1) / denom
    ctx_rows = jnp.broadcast_to(ctx.astype(jnp.bfloat16)[:, None, :], (B, Ty, H))
    dec_in = jnp.concatenate([emb_y, ctx_rows], axis=-1)
    hid = jnp.tanh(jnp.einsum("btk,kh->bth", dec_in, p["W_dec_cat"],
                              preferred_element_type=jnp.float32) + p["b_dec"][0])
    logits = jnp.einsum("bth,hv->btv", hid.astype(jnp.bfloat16), p["W_out"],
                        preferred_element_type=jnp.float32) + p["b_out"][0]
    return logits


def reference_loss(logits, targets, reduction="mean"):
    lp = jax.nn.log_softmax(logits, axis=-1)
    tok = jnp.take_along_axis(lp, targets[..., None].astype(jnp.int32), axis=-1)[..., 0]
    tok = jnp.where(targets != PAD_IDX, tok, 0.0)
    loss = -jnp.sum(tok, axis=-1)
    if reduction == "mean":
        loss = jnp.mean(loss)
    elif reduction == "sum":
        loss = jnp.sum(loss)
    return loss


if __name__ == "__main__":
    key = jax.random.PRNGKey(0)
    B, Tx, Ty = 32, 16, 16        # Bt=16 -> 256-row matmul blocks, batch grid = 2 (even, megacore)
    D = H = 128                   # lane-aligned feature dims
    V_src, V_tgt = 512, 256       # Vt=128 -> 2 vocab tiles exercise the online LSE path

    k_p, k_x, k_y, k_len = jax.random.split(key, 4)
    params = make_params(k_p, V_src, V_tgt, D, H)

    # source tokens + lengths/mask
    x = jax.random.randint(k_x, (B, Tx), 1, V_src, dtype=jnp.int32)
    seq_len_x = jax.random.randint(k_len, (B,), 4, Tx + 1, dtype=jnp.int32)
    seq_mask_x = jnp.arange(Tx)[None, :] < seq_len_x[:, None]     # (B, Tx) bool
    x = jnp.where(seq_mask_x, x, 0)

    # target tokens with some padding
    y = jax.random.randint(k_y, (B, Ty), 1, V_tgt, dtype=jnp.int32)
    y = y.at[1, 12:].set(PAD_IDX)
    y = y.at[3, 7:].set(PAD_IDX)
    y = y.at[30, 2:].set(PAD_IDX)

    model = ConditionalNMT(params, batch_block=16, vocab_block=128)

    # Fused training path: logits consumed tile-by-tile in VMEM, no f32 logits HBM writeback.
    _, out_fused = model.forward_and_loss(x, seq_mask_x, seq_len_x, y, y, reduction="mean")

    # API-faithful path: forward() -> Categorical logits, then loss() on those logits.
    likelihood, state = model.forward(x, seq_mask_x, seq_len_x, y)
    out_sep = model.loss(likelihood, y, reduction="mean")

    likelihood = jax.block_until_ready(likelihood)
    loss_fused = float(jax.block_until_ready(out_fused["loss"]))
    loss_sep = float(jax.block_until_ready(out_sep["loss"]))

    # Plain-JAX reference with the same bf16/f32 mixed precision.
    ref_logits = reference_forward(params, x, seq_mask_x, y)
    ref_loss = float(reference_loss(ref_logits, y, reduction="mean"))

    assert likelihood.shape == (B, Ty, V_tgt)
    assert jnp.isfinite(loss_fused) and jnp.isfinite(loss_sep)
    assert abs(loss_fused - loss_sep) <= 1e-3 * max(1.0, abs(loss_sep)), (loss_fused, loss_sep)
    assert jnp.allclose(likelihood, ref_logits, atol=2e-2, rtol=2e-2), (
        float(jnp.max(jnp.abs(likelihood - ref_logits))))
    assert abs(loss_fused - ref_loss) <= 1e-2 * max(1.0, abs(ref_loss)), (loss_fused, ref_loss)
    print("KERNEL_OK")
</pallas_src>

<mosaic_0001>
module attributes {stable_mosaic.version = 11 : i64} {
  func.func @nmt_train_kernel(%arg0: i32, %arg1: i32, %arg2: memref<16x16xf32, #tpu.memory_space<vmem>>, %arg3: memref<16x16xi32, #tpu.memory_space<vmem>>, %arg4: memref<256x128xbf16, #tpu.memory_space<vmem>>, %arg5: memref<256x128xbf16, #tpu.memory_space<vmem>>, %arg6: memref<128x128xbf16, #tpu.memory_space<vmem>>, %arg7: memref<1x128xf32, #tpu.memory_space<vmem>>, %arg8: memref<256x128xbf16, #tpu.memory_space<vmem>>, %arg9: memref<1x128xf32, #tpu.memory_space<vmem>>, %arg10: memref<128x128xbf16, #tpu.memory_space<vmem>>, %arg11: memref<1x128xf32, #tpu.memory_space<vmem>>, %arg12: memref<16x16xf32, #tpu.memory_space<vmem>>, %arg13: memref<256x128xbf16, #tpu.memory_space<vmem>>, %arg14: memref<16x16xf32, #tpu.memory_space<vmem>>, %arg15: memref<16x16xf32, #tpu.memory_space<vmem>>, %arg16: memref<16x16xf32, #tpu.memory_space<vmem>>) attributes {dimension_semantics = [#tpu.dimension_semantics<parallel>, #tpu.dimension_semantics<arbitrary>], iteration_bounds = array<i64: 2, 2>, scalar_prefetch = 0 : i64, scratch_operands = 4 : i64, tpu.core_type = #tpu.core_type<tc>, window_params = [{transform_indices = @transform_0, window_bounds = array<i64: 16, 16>}, {transform_indices = @transform_1, window_bounds = array<i64: 16, 16>}, {transform_indices = @transform_2, window_bounds = array<i64: 256, 128>}, {transform_indices = @transform_3, window_bounds = array<i64: 256, 128>}, {pipeline_mode = #tpu.pipeline_mode<synchronous>, transform_indices = @transform_4, window_bounds = array<i64: 128, 128>}, {pipeline_mode = #tpu.pipeline_mode<synchronous>, transform_indices = @transform_5, window_bounds = array<i64: 1, 128>}, {pipeline_mode = #tpu.pipeline_mode<synchronous>, transform_indices = @transform_6, window_bounds = array<i64: 256, 128>}, {pipeline_mode = #tpu.pipeline_mode<synchronous>, transform_indices = @transform_7, window_bounds = array<i64: 1, 128>}, {transform_indices = @transform_8, window_bounds = array<i64: 128, 128>}, {transform_indices = @transform_9, window_bounds = array<i64: 1, 128>}, {transform_indices = @transform_10, window_bounds = array<i64: 16, 16>}]} {
    %c0_i32 = arith.constant 0 : i32
    %0 = arith.cmpi eq, %arg1, %c0_i32 : i32
    %1 = arith.extui %0 : i1 to i32
    %c0_i32_0 = arith.constant 0 : i32
    %2 = arith.cmpi ne, %1, %c0_i32_0 : i32
    scf.if %2 {
      %c0_27 = arith.constant 0 : index
      %c0_28 = arith.constant 0 : index
      %43 = vector.load %arg2[%c0_27, %c0_28] : memref<16x16xf32, #tpu.memory_space<vmem>>, vector<16x16xf32>
      %c0_29 = arith.constant 0 : index
      %c0_30 = arith.constant 0 : index
      %44 = vector.load %arg4[%c0_29, %c0_30] : memref<256x128xbf16, #tpu.memory_space<vmem>>, vector<256x128xbf16>
      %c0_31 = arith.constant 0 : index
      %c0_32 = arith.constant 0 : index
      %45 = vector.load %arg5[%c0_31, %c0_32] : memref<256x128xbf16, #tpu.memory_space<vmem>>, vector<256x128xbf16>
      %c0_33 = arith.constant 0 : index
      %c0_34 = arith.constant 0 : index
      %46 = vector.load %arg6[%c0_33, %c0_34] : memref<128x128xbf16, #tpu.memory_space<vmem>>, vector<128x128xbf16>
      %c0_35 = arith.constant 0 : index
      %c0_36 = arith.constant 0 : index
      %47 = vector.load %arg7[%c0_35, %c0_36] : memref<1x128xf32, #tpu.memory_space<vmem>>, vector<1x128xf32>
      %c0_37 = arith.constant 0 : index
      %c0_38 = arith.constant 0 : index
      %48 = vector.load %arg8[%c0_37, %c0_38] : memref<256x128xbf16, #tpu.memory_space<vmem>>, vector<256x128xbf16>
      %c0_39 = arith.constant 0 : index
      %c0_40 = arith.constant 0 : index
      %49 = vector.load %arg9[%c0_39, %c0_40] : memref<1x128xf32, #tpu.memory_space<vmem>>, vector<1x128xf32>
      %cst_41 = arith.constant dense<0.000000e+00> : vector<256x128xf32>
      %50 = tpu.matmul %44, %46, %cst_41 {dimension_numbers = #tpu.dot_dimension_numbers<[1], [0], [0], [1], [0, 0, 1, 1], [], []>} : vector<256x128xbf16>, vector<128x128xbf16>, vector<256x128xf32> -> vector<256x128xf32>
      %51 = vector.broadcast %47 : vector<1x128xf32> to vector<256x128xf32>
      %52 = arith.addf %50, %51 : vector<256x128xf32>
      %53 = math.tanh %52 : vector<256x128xf32>
      %54 = vector.shape_cast %53 : vector<256x128xf32> to vector<16x16x128xf32>
      %cst_42 = arith.constant dense<0.000000e+00> : vector<16xf32>
      %55 = vector.multi_reduction <add>, %43, %cst_42 [1] : vector<16x16xf32> to vector<16xf32>
      %56 = vector.shape_cast %55 : vector<16xf32> to vector<16x1xf32>
      %cst_43 = arith.constant 1.000000e+00 : f32
      %57 = vector.broadcast %cst_43 : f32 to vector<16x1xf32>
      %58 = arith.maximumf %56, %57 : vector<16x1xf32>
      %59 = vector.shape_cast %43 : vector<16x16xf32> to vector<16x16x1xf32>
      %60 = vector.broadcast %59 : vector<16x16x1xf32> to vector<16x16x128xf32>
      %61 = arith.mulf %54, %60 : vector<16x16x128xf32>
      %cst_44 = arith.constant dense<0.000000e+00> : vector<16x128xf32>
      %62 = vector.multi_reduction <add>, %61, %cst_44 [1] : vector<16x16x128xf32> to vector<16x128xf32>
      %63 = vector.broadcast %58 : vector<16x1xf32> to vector<16x128xf32>
      %64 = arith.divf %62, %63 : vector<16x128xf32>
      %65 = arith.truncf %64 : vector<16x128xf32> to vector<16x128xbf16>
      %66 = vector.shape_cast %65 : vector<16x128xbf16> to vector<16x1x128xbf16>
      %67 = vector.shape_cast %66 : vector<16x1x128xbf16> to vector<16x1x128xbf16>
      %68 = vector.broadcast %67 : vector<16x1x128xbf16> to vector<16x16x128xbf16>
      %69 = vector.shape_cast %68 : vector<16x16x128xbf16> to vector<256x128xbf16>
      %70 = tpu.concatenate %45, %69 in 1 : vector<256x128xbf16>, vector<256x128xbf16> -> vector<256x256xbf16>
      %cst_45 = arith.constant dense<0.000000e+00> : vector<256x128xf32>
      %71 = tpu.matmul %70, %48, %cst_45 {dimension_numbers = #tpu.dot_dimension_numbers<[1], [0], [0], [1], [0, 0, 1, 1], [], []>} : vector<256x256xbf16>, vector<256x128xbf16>, vector<256x128xf32> -> vector<256x128xf32>
      %72 = vector.broadcast %49 : vector<1x128xf32> to vector<256x128xf32>
      %73 = arith.addf %71, %72 : vector<256x128xf32>
      %74 = math.tanh %73 : vector<256x128xf32>
      %75 = arith.truncf %74 : vector<256x128xf32> to vector<256x128xbf16>
      %c0_46 = arith.constant 0 : index
      %c0_47 = arith.constant 0 : index
      %76 = vector.load %arg13[%c0_46, %c0_47] : memref<256x128xbf16, #tpu.memory_space<vmem>>, vector<256x128xbf16>
      tpu.vector_store %arg13[%c0_46, %c0_47], %75 {strides = array<i32>} : memref<256x128xbf16, #tpu.memory_space<vmem>>, vector<256x128xbf16>,
      %cst_48 = arith.constant 0xFF800000 : f32
      %77 = vector.broadcast %cst_48 : f32 to vector<16x16xf32>
      %c0_49 = arith.constant 0 : index
      %c0_50 = arith.constant 0 : index
      %78 = vector.load %arg14[%c0_49, %c0_50] : memref<16x16xf32, #tpu.memory_space<vmem>>, vector<16x16xf32>
      tpu.vector_store %arg14[%c0_49, %c0_50], %77 {strides = array<i32>} : memref<16x16xf32, #tpu.memory_space<vmem>>, vector<16x16xf32>,
      %cst_51 = arith.constant 0.000000e+00 : f32
      %79 = vector.broadcast %cst_51 : f32 to vector<16x16xf32>
      %c0_52 = arith.constant 0 : index
      %c0_53 = arith.constant 0 : index
      %80 = vector.load %arg15[%c0_52, %c0_53] : memref<16x16xf32, #tpu.memory_space<vmem>>, vector<16x16xf32>
      tpu.vector_store %arg15[%c0_52, %c0_53], %79 {strides = array<i32>} : memref<16x16xf32, #tpu.memory_space<vmem>>, vector<16x16xf32>,
      %cst_54 = arith.constant 0.000000e+00 : f32
      %81 = vector.broadcast %cst_54 : f32 to vector<16x16xf32>
      %c0_55 = arith.constant 0 : index
      %c0_56 = arith.constant 0 : index
      %82 = vector.load %arg16[%c0_55, %c0_56] : memref<16x16xf32, #tpu.memory_space<vmem>>, vector<16x16xf32>
      tpu.vector_store %arg16[%c0_55, %c0_56], %81 {strides = array<i32>} : memref<16x16xf32, #tpu.memory_space<vmem>>, vector<16x16xf32>,
    } else {
    }
    %c0 = arith.constant 0 : index
    %c0_1 = arith.constant 0 : index
    %3 = vector.load %arg13[%c0, %c0_1] : memref<256x128xbf16, #tpu.memory_space<vmem>>, vector<256x128xbf16>
    %c0_2 = arith.constant 0 : index
    %c0_3 = arith.constant 0 : index
    %4 = vector.load %arg10[%c0_2, %c0_3] : memref<128x128xbf16, #tpu.memory_space<vmem>>, vector<128x128xbf16>
    %cst = arith.constant dense<0.000000e+00> : vector<256x128xf32>
    %5 = tpu.matmul %3, %4, %cst {dimension_numbers = #tpu.dot_dimension_numbers<[1], [0], [0], [1], [0, 0, 1, 1], [], []>} : vector<256x128xbf16>, vector<128x128xbf16>, vector<256x128xf32> -> vector<256x128xf32>
    %c0_4 = arith.constant 0 : index
    %c0_5 = arith.constant 0 : index
    %6 = vector.load %arg11[%c0_4, %c0_5] : memref<1x128xf32, #tpu.memory_space<vmem>>, vector<1x128xf32>
    %7 = vector.broadcast %6 : vector<1x128xf32> to vector<256x128xf32>
    %8 = arith.addf %5, %7 : vector<256x128xf32>
    %9 = vector.shape_cast %8 : vector<256x128xf32> to vector<16x16x128xf32>
    %c0_6 = arith.constant 0 : index
    %c0_7 = arith.constant 0 : index
    %10 = vector.load %arg3[%c0_6, %c0_7] : memref<16x16xi32, #tpu.memory_space<vmem>>, vector<16x16xi32>
    %c128_i32 = arith.constant 128 : i32
    %11 = arith.muli %arg1, %c128_i32 : i32
    %cst_8 = arith.constant dense<0xFF800000> : vector<16x16xf32>
    %12 = vector.multi_reduction <maximumf>, %9, %cst_8 [2] : vector<16x16x128xf32> to vector<16x16xf32>
    %c0_9 = arith.constant 0 : index
    %c0_10 = arith.constant 0 : index
    %13 = vector.load %arg14[%c0_9, %c0_10] : memref<16x16xf32, #tpu.memory_space<vmem>>, vector<16x16xf32>
    %14 = arith.maximumf %13, %12 : vector<16x16xf32>
    %c0_11 = arith.constant 0 : index
    %c0_12 = arith.constant 0 : index
    %15 = vector.load %arg14[%c0_11, %c0_12] : memref<16x16xf32, #tpu.memory_space<vmem>>, vector<16x16xf32>
    %16 = arith.subf %15, %14 : vector<16x16xf32>
    %17 = math.exp %16 : vector<16x16xf32>
    %18 = vector.shape_cast %14 : vector<16x16xf32> to vector<16x16x1xf32>
    %19 = vector.broadcast %18 : vector<16x16x1xf32> to vector<16x16x128xf32>
    %20 = arith.subf %9, %19 : vector<16x16x128xf32>
    %21 = math.exp %20 : vector<16x16x128xf32>
    %cst_13 = arith.constant dense<0.000000e+00> : vector<16x16xf32>
    %22 = vector.multi_reduction <add>, %21, %cst_13 [2] : vector<16x16x128xf32> to vector<16x16xf32>
    %c0_14 = arith.constant 0 : index
    %c0_15 = arith.constant 0 : index
    %23 = vector.load %arg15[%c0_14, %c0_15] : memref<16x16xf32, #tpu.memory_space<vmem>>, vector<16x16xf32>
    %24 = arith.mulf %23, %17 : vector<16x16xf32>
    %25 = arith.addf %24, %22 : vector<16x16xf32>
    %c0_16 = arith.constant 0 : index
    %c0_17 = arith.constant 0 : index
    %26 = vector.load %arg15[%c0_16, %c0_17] : memref<16x16xf32, #tpu.memory_space<vmem>>, vector<16x16xf32>
    tpu.vector_store %arg15[%c0_16, %c0_17], %25 {strides = array<i32>} : memref<16x16xf32, #tpu.memory_space<vmem>>, vector<16x16xf32>,
    %c0_18 = arith.constant 0 : index
    %c0_19 = arith.constant 0 : index
    %27 = vector.load %arg14[%c0_18, %c0_19] : memref<16x16xf32, #tpu.memory_space<vmem>>, vector<16x16xf32>
    tpu.vector_store %arg14[%c0_18, %c0_19], %14 {strides = array<i32>} : memref<16x16xf32, #tpu.memory_space<vmem>>, vector<16x16xf32>,
    %28 = tpu.iota {dimensions = array<i32: 2>} : vector<16x16x128xi32>
    %29 = vector.broadcast %11 : i32 to vector<16x16x128xi32>
    %30 = arith.addi %28, %29 : vector<16x16x128xi32>
    %c0_20 = arith.constant 0 : index
    %c0_21 = arith.constant 0 : index
    %31 = vector.load %arg16[%c0_20, %c0_21] : memref<16x16xf32, #tpu.memory_space<vmem>>, vector<16x16xf32>
    %32 = vector.shape_cast %10 : vector<16x16xi32> to vector<16x16x1xi32>
    %33 = vector.broadcast %32 : vector<16x16x1xi32> to vector<16x16x128xi32>
    %34 = arith.cmpi eq, %30, %33 : vector<16x16x128xi32>
    %cst_22 = arith.constant 0.000000e+00 : f32
    %35 = vector.broadcast %cst_22 : f32 to vector<16x16x128xf32>
    %36 = arith.select %34, %9, %35 : vector<16x16x128xi1>, vector<16x16x128xf32>
    %cst_23 = arith.constant dense<0.000000e+00> : vector<16x16xf32>
    %37 = vector.multi_reduction <add>, %36, %cst_23 [2] : vector<16x16x128xf32> to vector<16x16xf32>
    %38 = arith.addf %31, %37 : vector<16x16xf32>
    %c0_24 = arith.constant 0 : index
    %c0_25 = arith.constant 0 : index
    %39 = vector.load %arg16[%c0_24, %c0_25] : memref<16x16xf32, #tpu.memory_space<vmem>>, vector<16x16xf32>
    tpu.vector_store %arg16[%c0_24, %c0_25], %38 {strides = array<i32>} : memref<16x16xf32, #tpu.memory_space<vmem>>, vector<16x16xf32>,
    %c1_i32 = arith.constant 1 : i32
    %40 = arith.cmpi eq, %arg1, %c1_i32 : i32
    %41 = arith.extui %40 : i1 to i32
    %c0_i32_26 = arith.constant 0 : i32
    %42 = arith.cmpi ne, %41, %c0_i32_26 : i32
    scf.if %42 {
      %c0_27 = arith.constant 0 : index
      %c0_28 = arith.constant 0 : index
      %43 = vector.load %arg16[%c0_27, %c0_28] : memref<16x16xf32, #tpu.memory_space<vmem>>, vector<16x16xf32>
      %c0_29 = arith.constant 0 : index
      %c0_30 = arith.constant 0 : index
      %44 = vector.load %arg14[%c0_29, %c0_30] : memref<16x16xf32, #tpu.memory_space<vmem>>, vector<16x16xf32>
      %c0_31 = arith.constant 0 : index
      %c0_32 = arith.constant 0 : index
      %45 = vector.load %arg15[%c0_31, %c0_32] : memref<16x16xf32, #tpu.memory_space<vmem>>, vector<16x16xf32>
      %46 = math.log %45 : vector<16x16xf32>
      %47 = arith.addf %44, %46 : vector<16x16xf32>
      %48 = arith.subf %43, %47 : vector<16x16xf32>
      %c0_i32_33 = arith.constant 0 : i32
      %49 = vector.broadcast %c0_i32_33 : i32 to vector<16x16xi32>
      %50 = arith.cmpi ne, %10, %49 : vector<16x16xi32>
      %cst_34 = arith.constant 0.000000e+00 : f32
      %51 = vector.broadcast %cst_34 : f32 to vector<16x16xf32>
      %52 = arith.select %50, %48, %51 : vector<16x16xi1>, vector<16x16xf32>
      %c0_35 = arith.constant 0 : index
      %c0_36 = arith.constant 0 : index
      %53 = vector.load %arg12[%c0_35, %c0_36] : memref<16x16xf32, #tpu.memory_space<vmem>>, vector<16x16xf32>
      tpu.vector_store %arg12[%c0_35, %c0_36], %52 {strides = array<i32>} : memref<16x16xf32, #tpu.memory_space<vmem>>, vector<16x16xf32>,
    } else {
    }
    return
  }
  func.func @transform_0(%arg0: i32, %arg1: i32) -> (i32, i32) {
    %c0_i32 = arith.constant 0 : i32
    %c0_i32_0 = arith.constant 0 : i32
    return %arg0, %c0_i32 : i32, i32
  }
  func.func @transform_1(%arg0: i32, %arg1: i32) -> (i32, i32) {
    %c0_i32 = arith.constant 0 : i32
    %c0_i32_0 = arith.constant 0 : i32
    return %arg0, %c0_i32 : i32, i32
  }
  func.func @transform_2(%arg0: i32, %arg1: i32) -> (i32, i32) {
    %c0_i32 = arith.constant 0 : i32
    %c0_i32_0 = arith.constant 0 : i32
    return %arg0, %c0_i32 : i32, i32
  }
  func.func @transform_3(%arg0: i32, %arg1: i32) -> (i32, i32) {
    %c0_i32 = arith.constant 0 : i32
    %c0_i32_0 = arith.constant 0 : i32
    return %arg0, %c0_i32 : i32, i32
  }
  func.func @transform_4(%arg0: i32, %arg1: i32) -> (i32, i32) {
    %c0_i32 = arith.constant 0 : i32
    %c0_i32_0 = arith.constant 0 : i32
    %c0_i32_1 = arith.constant 0 : i32
    return %c0_i32, %c0_i32_0 : i32, i32
  }
  func.func @transform_5(%arg0: i32, %arg1: i32) -> (i32, i32) {
    %c0_i32 = arith.constant 0 : i32
    %c0_i32_0 = arith.constant 0 : i32
    %c0_i32_1 = arith.constant 0 : i32
    return %c0_i32, %c0_i32_0 : i32, i32
  }
  func.func @transform_6(%arg0: i32, %arg1: i32) -> (i32, i32) {
    %c0_i32 = arith.constant 0 : i32
    %c0_i32_0 = arith.constant 0 : i32
    %c0_i32_1 = arith.constant 0 : i32
    return %c0_i32, %c0_i32_0 : i32, i32
  }
  func.func @transform_7(%arg0: i32, %arg1: i32) -> (i32, i32) {
    %c0_i32 = arith.constant 0 : i32
    %c0_i32_0 = arith.constant 0 : i32
    %c0_i32_1 = arith.constant 0 : i32
    return %c0_i32, %c0_i32_0 : i32, i32
  }
  func.func @transform_8(%arg0: i32, %arg1: i32) -> (i32, i32) {
    %c0_i32 = arith.constant 0 : i32
    %c0_i32_0 = arith.constant 0 : i32
    return %c0_i32, %arg1 : i32, i32
  }
  func.func @transform_9(%arg0: i32, %arg1: i32) -> (i32, i32) {
    %c0_i32 = arith.constant 0 : i32
    %c0_i32_0 = arith.constant 0 : i32
    return %c0_i32, %arg1 : i32, i32
  }
  func.func @transform_10(%arg0: i32, %arg1: i32) -> (i32, i32) {
    %c0_i32 = arith.constant 0 : i32
    %c0_i32_0 = arith.constant 0 : i32
    return %arg0, %c0_i32 : i32, i32
  }
}

</mosaic_0001>

<llo_original>
// kernel: tpu_custom_call.1
$region0: #{tpu_custom_call.1}
  #allocation0 [shape = 'u32[]', space=smem, size = 0x4, offset = 0x4, fixed_abs, tag = 'smem constant byte address 0x4 - core index']
  #allocation1 [shape = 'u32[144,128]{1,0:T(1,128)}', space=vmem, size = 0x12000, scoped, tag = 'internal scratch']
  #allocation2 [shape = 'bf16[256,128]{1,0:T(16,128)(2,1)}', space=vmem, size = 0x10000, scoped, tag = 'scratch operand']
  #allocation3 [shape = 'f32[16,16]{1,0:T(8,128)}', space=vmem, size = 0x2000, scoped, tag = 'scratch operand']
  #allocation4 [shape = 'f32[16,16]{1,0:T(8,128)}', space=vmem, size = 0x2000, scoped, tag = 'scratch operand']
  #allocation5 [shape = 'f32[16,16]{1,0:T(8,128)}', space=vmem, size = 0x2000, scoped, tag = 'scratch operand']
  %s0 = inlined_call_operand.vmem [shape: f32[32,16], index: 0, kind: input, shape index: {}]
  %s1 = inlined_call_operand.vmem [shape: s32[32,16], index: 1, kind: input, shape index: {}]
  %s2 = inlined_call_operand.hbm [shape: bf16[512,128], index: 2, kind: input, shape index: {}]
  %s3 = inlined_call_operand.hbm [shape: bf16[512,128], index: 3, kind: input, shape index: {}]
  %s4 = inlined_call_operand.vmem [shape: bf16[128,128], index: 4, kind: input, shape index: {}]
  %s5 = inlined_call_operand.vmem [shape: f32[1,128], index: 5, kind: input, shape index: {}]
  %s6 = inlined_call_operand.hbm [shape: bf16[256,128], index: 6, kind: input, shape index: {}]
  %s7 = inlined_call_operand.vmem [shape: f32[1,128], index: 7, kind: input, shape index: {}]
  %s8 = inlined_call_operand.hbm [shape: bf16[128,256], index: 8, kind: input, shape index: {}]
  %s9 = inlined_call_operand.vmem [shape: f32[1,256], index: 9, kind: input, shape index: {}]
  %s10 = inlined_call_operand.vmem [shape: f32[32,16], index: 10, kind: output, shape index: {}]
  %s11 = sld [smem:[#allocation0]]
  $region97: #{tpu_custom_call.1} parent=0
    _
  %s13 = ssub.s32 1, %s11
  %s14 = scalar_select 0, %s13, %s11
  $region1: #{tpu_custom_call.1} parent=0
    #allocation6 [shape = 'u8[131072]{0}', space=vmem, size = 0x20000, scoped, tag = 'input window, operand 2']
    #allocation7 [shape = 's32[2]{0}', space=sflag, size = 0x8, scoped, tag = 'scoped memory for tpu_custom_call.1']
    #allocation8 [shape = 'u8[131072]{0}', space=vmem, size = 0x20000, scoped, tag = 'input window, operand 3']
    #allocation9 [shape = 's32[2]{0}', space=sflag, size = 0x8, scoped, tag = 'scoped memory for tpu_custom_call.1']
    #allocation10 [shape = 'u8[65536]{0}', space=vmem, size = 0x10000, scoped, tag = 'input window, operand 6, single buffered']
    #allocation11 [shape = 'u8[65536]{0}', space=vmem, size = 0x10000, scoped, tag = 'input window, operand 8']
    #allocation12 [shape = 's32[2]{0}', space=sflag, size = 0x8, scoped, tag = 'scoped memory for tpu_custom_call.1']
    %15 = vsyncpa [#allocation7], 0
    %s16 = scalar_lea.sflag [#allocation7], 1
    %17 = vsyncpa %s16, 0
    %18 = vsyncpa [#allocation9], 0
    %s19 = scalar_lea.sflag [#allocation9], 1
    %20 = vsyncpa %s19, 0
    %21 = vsyncpa [#allocation12], 0
    %s22 = scalar_lea.sflag [#allocation12], 1
    %23 = vsyncpa %s22, 0
    loop: start=0, step=1, limit=6
    $region2: #{tpu_custom_call.1} parent=1 // loop_pre_header
      _
    $region3: #{tpu_custom_call.1} parent=1 // loop_header
      %s25 = sphi 0, %s29
      %p26 = scmp.ge.s32.totalorder %s25, 6
      %s32 = sphi 0, %s44
      %s33 = sphi 0, %s40
      %s34 = sphi 0, %s32
      %s35 = sphi 0, %s33
      %s36 = sphi 0, %s34
      %s37 = sphi 0, %s35
      %s47 = sphi 0, %s49
      %s50 = sphi 0, %s47
      %s51 = sphi 0, %s50
      %s67 = sphi 0, %s51
      %s73 = sphi 0, %s75
      %s76 = sphi 0, %s73
      %s77 = sphi 0, %s76
      %s93 = sphi 0, %s77
      %s99 = sphi 0, %s101
      %s102 = sphi 0, %s99
      %s103 = sphi 0, %s102
      %s119 = sphi 0, %s103
      %s125 = sphi 0, %s127
      %s128 = sphi 0, %s125
      %s129 = sphi 0, %s128
      %s145 = sphi 0, %s129
      %s149 = sphi 0, %s149
      %s151 = sphi 0, %s149
      %s152 = sphi 0, %s151
      %s166 = sphi 0, %s152
      %s170 = sphi 0, %s170
      %s172 = sphi 0, %s170
      %s173 = sphi 0, %s172
      %s187 = sphi 0, %s173
      %s191 = sphi 0, %s191
      %s193 = sphi 0, %s191
      %s194 = sphi 0, %s193
      %s208 = sphi 0, %s194
      %s212 = sphi 0, %s212
      %s214 = sphi 0, %s212
      %s215 = sphi 0, %s214
      %s229 = sphi 0, %s215
      %s235 = sphi 0, %s237
      %s238 = sphi 0, %s235
      %s239 = sphi 0, %s238
      %s255 = sphi 0, %s239
      %s261 = sphi 0, %s263
      %s264 = sphi 0, %s261
      %s265 = sphi 0, %s264
      %s281 = sphi 0, %s265
      %s287 = sphi 0, %s289
      %s290 = sphi 0, %s287
      %s291 = sphi 0, %s290
      %s307 = sphi 0, %s291
    $region4: #{tpu_custom_call.1} parent=1 // loop_header_branch
      %28 = sbr.rel (%p26) target = $region8
    $region5: #{tpu_custom_call.1} parent=1 // loop_body
      %s30 = ssub.s32 %s25, 1
      %s31 = ssub.s32 %s25, 2
      %s38 = sadd.s32 1, %s33
      %p39 = scmp.ge.s32.totalorder %s38, 2
      %s40 = scalar_select %p39, 0, %s38
      %s41 = sadd.s32 1, %s32
      %s42 = scalar_select %p39, %s41, %s32
      %p43 = scmp.ge.s32.totalorder %s42, 2
      %s44 = scalar_select %p43, 0, %s42
      %s45 = ssub.s32 %s32, %s44
      %p46 = scmp.eq.s32.totalorder %s45, 0
      %s48 = sadd.s32 %s47, 1
      %s49 = scalar_select %p46, %s47, %s48
      %p52 = pneg %p46
      %p53 = scmp.eq.s32.totalorder %s25, 3
      %p54 = por %p52, %p53
      %p55 = scmp.ne.s32.totalorder %s47, %s50
      %p56 = scmp.eq.s32.totalorder %s25, 0
      %p57 = por %p55, %p56
      %p58 = scmp.ne.s32.totalorder %s47, %s50
      %p59 = scmp.eq.s32.totalorder %s30, 3
      %p60 = por %p58, %p59
      %p61 = scmp.ne.s32.totalorder %s50, %s51
      %p62 = scmp.eq.s32.totalorder %s30, 0
      %p63 = por %p61, %p62
      %p64 = scmp.ne.s32.totalorder %s50, %s51
      %p65 = scmp.eq.s32.totalorder %s31, 3
      %p66 = por %p64, %p65
      %p68 = scmp.ne.s32.totalorder %s51, %s67
      %p69 = scmp.eq.s32.totalorder %s31, 0
      %p70 = por %p68, %p69
      %s71 = ssub.s32 %s32, %s44
      %p72 = scmp.eq.s32.totalorder %s71, 0
      %s74 = sadd.s32 %s73, 1
      %s75 = scalar_select %p72, %s73, %s74
      %p78 = pneg %p72
      %p79 = scmp.eq.s32.totalorder %s25, 3
      %p80 = por %p78, %p79
      %p81 = scmp.ne.s32.totalorder %s73, %s76
      %p82 = scmp.eq.s32.totalorder %s25, 0
      %p83 = por %p81, %p82
      %p84 = scmp.ne.s32.totalorder %s73, %s76
      %p85 = scmp.eq.s32.totalorder %s30, 3
      %p86 = por %p84, %p85
      %p87 = scmp.ne.s32.totalorder %s76, %s77
      %p88 = scmp.eq.s32.totalorder %s30, 0
      %p89 = por %p87, %p88
      %p90 = scmp.ne.s32.totalorder %s76, %s77
      %p91 = scmp.eq.s32.totalorder %s31, 3
      %p92 = por %p90, %p91
      %p94 = scmp.ne.s32.totalorder %s77, %s93
      %p95 = scmp.eq.s32.totalorder %s31, 0
      %p96 = por %p94, %p95
      %s97 = ssub.s32 %s32, %s44
      %p98 = scmp.eq.s32.totalorder %s97, 0
      %s100 = sadd.s32 %s99, 1
      %s101 = scalar_select %p98, %s99, %s100
      %p104 = pneg %p98
      %p105 = scmp.eq.s32.totalorder %s25, 3
      %p106 = por %p104, %p105
      %p107 = scmp.ne.s32.totalorder %s99, %s102
      %p108 = scmp.eq.s32.totalorder %s25, 0
      %p109 = por %p107, %p108
      %p110 = scmp.ne.s32.totalorder %s99, %s102
      %p111 = scmp.eq.s32.totalorder %s30, 3
      %p112 = por %p110, %p111
      %p113 = scmp.ne.s32.totalorder %s102, %s103
      %p114 = scmp.eq.s32.totalorder %s30, 0
      %p115 = por %p113, %p114
      %p116 = scmp.ne.s32.totalorder %s102, %s103
      %p117 = scmp.eq.s32.totalorder %s31, 3
      %p118 = por %p116, %p117
      %p120 = scmp.ne.s32.totalorder %s103, %s119
      %p121 = scmp.eq.s32.totalorder %s31, 0
      %p122 = por %p120, %p121
      %s123 = ssub.s32 %s32, %s44
      %p124 = scmp.eq.s32.totalorder %s123, 0
      %s126 = sadd.s32 %s125, 1
      %s127 = scalar_select %p124, %s125, %s126
      %p130 = pneg %p124
      %p131 = scmp.eq.s32.totalorder %s25, 3
      %p132 = por %p130, %p131
      %p133 = scmp.ne.s32.totalorder %s125, %s128
      %p134 = scmp.eq.s32.totalorder %s25, 0
      %p135 = por %p133, %p134
      %p136 = scmp.ne.s32.totalorder %s125, %s128
      %p137 = scmp.eq.s32.totalorder %s30, 3
      %p138 = por %p136, %p137
      %p139 = scmp.ne.s32.totalorder %s128, %s129
      %p140 = scmp.eq.s32.totalorder %s30, 0
      %p141 = por %p139, %p140
      %p142 = scmp.ne.s32.totalorder %s128, %s129
      %p143 = scmp.eq.s32.totalorder %s31, 3
      %p144 = por %p142, %p143
      %p146 = scmp.ne.s32.totalorder %s129, %s145
      %p147 = scmp.eq.s32.totalorder %s31, 0
      %p148 = por %p146, %p147
      %s150 = sadd.s32 %s149, 1
      %p153 = scmp.eq.s32.totalorder %s25, 3
      %p154 = scmp.ne.s32.totalorder %s149, %s151
      %p155 = scmp.eq.s32.totalorder %s25, 0
      %p156 = por %p154, %p155
      %p157 = scmp.ne.s32.totalorder %s149, %s151
      %p158 = scmp.eq.s32.totalorder %s30, 3
      %p159 = por %p157, %p158
      %p160 = scmp.ne.s32.totalorder %s151, %s152
      %p161 = scmp.eq.s32.totalorder %s30, 0
      %p162 = por %p160, %p161
      %p163 = scmp.ne.s32.totalorder %s151, %s152
      %p164 = scmp.eq.s32.totalorder %s31, 3
      %p165 = por %p163, %p164
      %p167 = scmp.ne.s32.totalorder %s152, %s166
      %p168 = scmp.eq.s32.totalorder %s31, 0
      %p169 = por %p167, %p168
      %s171 = sadd.s32 %s170, 1
      %p174 = scmp.eq.s32.totalorder %s25, 3
      %p175 = scmp.ne.s32.totalorder %s170, %s172
      %p176 = scmp.eq.s32.totalorder %s25, 0
      %p177 = por %p175, %p176
      %p178 = scmp.ne.s32.totalorder %s170, %s172
      %p179 = scmp.eq.s32.totalorder %s30, 3
      %p180 = por %p178, %p179
      %p181 = scmp.ne.s32.totalorder %s172, %s173
      %p182 = scmp.eq.s32.totalorder %s30, 0
      %p183 = por %p181, %p182
      %p184 = scmp.ne.s32.totalorder %s172, %s173
      %p185 = scmp.eq.s32.totalorder %s31, 3
      %p186 = por %p184, %p185
      %p188 = scmp.ne.s32.totalorder %s173, %s187
      %p189 = scmp.eq.s32.totalorder %s31, 0
      %p190 = por %p188, %p189
      %s192 = sadd.s32 %s191, 1
      %p195 = scmp.eq.s32.totalorder %s25, 3
      %p196 = scmp.ne.s32.totalorder %s191, %s193
      %p197 = scmp.eq.s32.totalorder %s25, 0
      %p198 = por %p196, %p197
      %p199 = scmp.ne.s32.totalorder %s191, %s193
      %p200 = scmp.eq.s32.totalorder %s30, 3
      %p201 = por %p199, %p200
      %p202 = scmp.ne.s32.totalorder %s193, %s194
      %p203 = scmp.eq.s32.totalorder %s30, 0
      %p204 = por %p202, %p203
      %p205 = scmp.ne.s32.totalorder %s193, %s194
      %p206 = scmp.eq.s32.totalorder %s31, 3
      %p207 = por %p205, %p206
      %p209 = scmp.ne.s32.totalorder %s194, %s208
      %p210 = scmp.eq.s32.totalorder %s31, 0
      %p211 = por %p209, %p210
      %s213 = sadd.s32 %s212, 1
      %p216 = scmp.eq.s32.totalorder %s25, 3
      %p217 = scmp.ne.s32.totalorder %s212, %s214
      %p218 = scmp.eq.s32.totalorder %s25, 0
      %p219 = por %p217, %p218
      %p220 = scmp.ne.s32.totalorder %s212, %s214
      %p221 = scmp.eq.s32.totalorder %s30, 3
      %p222 = por %p220, %p221
      %p223 = scmp.ne.s32.totalorder %s214, %s215
      %p224 = scmp.eq.s32.totalorder %s30, 0
      %p225 = por %p223, %p224
      %p226 = scmp.ne.s32.totalorder %s214, %s215
      %p227 = scmp.eq.s32.totalorder %s31, 3
      %p228 = por %p226, %p227
      %p230 = scmp.ne.s32.totalorder %s215, %s229
      %p231 = scmp.eq.s32.totalorder %s31, 0
      %p232 = por %p230, %p231
      %s233 = ssub.s32 %s33, %s40
      %p234 = scmp.eq.s32.totalorder %s233, 0
      %s236 = sadd.s32 %s235, 1
      %s237 = scalar_select %p234, %s235, %s236
      %p240 = pneg %p234
      %p241 = scmp.eq.s32.totalorder %s25, 3
      %p242 = por %p240, %p241
      %p243 = scmp.ne.s32.totalorder %s235, %s238
      %p244 = scmp.eq.s32.totalorder %s25, 0
      %p245 = por %p243, %p244
      %p246 = scmp.ne.s32.totalorder %s235, %s238
      %p247 = scmp.eq.s32.totalorder %s30, 3
      %p248 = por %p246, %p247
      %p249 = scmp.ne.s32.totalorder %s238, %s239
      %p250 = scmp.eq.s32.totalorder %s30, 0
      %p251 = por %p249, %p250
      %p252 = scmp.ne.s32.totalorder %s238, %s239
      %p253 = scmp.eq.s32.totalorder %s31, 3
      %p254 = por %p252, %p253
      %p256 = scmp.ne.s32.totalorder %s239, %s255
      %p257 = scmp.eq.s32.totalorder %s31, 0
      %p258 = por %p256, %p257
      %s259 = ssub.s32 %s33, %s40
      %p260 = scmp.eq.s32.totalorder %s259, 0
      %s262 = sadd.s32 %s261, 1
      %s263 = scalar_select %p260, %s261, %s262
      %p266 = pneg %p260
      %p267 = scmp.eq.s32.totalorder %s25, 3
      %p268 = por %p266, %p267
      %p269 = scmp.ne.s32.totalorder %s261, %s264
      %p270 = scmp.eq.s32.totalorder %s25, 0
      %p271 = por %p269, %p270
      %p272 = scmp.ne.s32.totalorder %s261, %s264
      %p273 = scmp.eq.s32.totalorder %s30, 3
      %p274 = por %p272, %p273
      %p275 = scmp.ne.s32.totalorder %s264, %s265
      %p276 = scmp.eq.s32.totalorder %s30, 0
      %p277 = por %p275, %p276
      %p278 = scmp.ne.s32.totalorder %s264, %s265
      %p279 = scmp.eq.s32.totalorder %s31, 3
      %p280 = por %p278, %p279
      %p282 = scmp.ne.s32.totalorder %s265, %s281
      %p283 = scmp.eq.s32.totalorder %s31, 0
      %p284 = por %p282, %p283
      %s285 = ssub.s32 %s32, %s44
      %p286 = scmp.eq.s32.totalorder %s285, 0
      %s288 = sadd.s32 %s287, 1
      %s289 = scalar_select %p286, %s287, %s288
      %p292 = pneg %p286
      %p293 = scmp.eq.s32.totalorder %s25, 3
      %p294 = por %p292, %p293
      %p295 = scmp.ne.s32.totalorder %s287, %s290
      %p296 = scmp.eq.s32.totalorder %s25, 0
      %p297 = por %p295, %p296
      %p298 = scmp.ne.s32.totalorder %s287, %s290
      %p299 = scmp.eq.s32.totalorder %s30, 3
      %p300 = por %p298, %p299
      %p301 = scmp.ne.s32.totalorder %s290, %s291
      %p302 = scmp.eq.s32.totalorder %s30, 0
      %p303 = por %p301, %p302
      %p304 = scmp.ne.s32.totalorder %s290, %s291
      %p305 = scmp.eq.s32.totalorder %s31, 3
      %p306 = por %p304, %p305
      %p308 = scmp.ne.s32.totalorder %s291, %s307
      %p309 = scmp.eq.s32.totalorder %s31, 0
      %p310 = por %p308, %p309
      %p311 = scmp.le.s32.totalorder 1, %s25
      %p312 = scmp.lt.s32.totalorder %s25, 5
      %p313 = pnand %p311, %p312
      %p314 = pneg %p313
      // Predicated region
      $region9: #{tpu_custom_call.1} parent=5 // pred_check
        _
      $region10: #{tpu_custom_call.1} parent=5 // pred_check_branch
        %316 = sbr.rel (%p313) target = $region12
      $region11: #{tpu_custom_call.1} parent=5 // pred_region
        %s317 = ssub.s32 %s25, 1
        // Predicated region
        $region13: #{tpu_custom_call.1} parent=11 // pred_check
          %p318 = pneg %p162
        $region14: #{tpu_custom_call.1} parent=11 // pred_check_branch
          %320 = sbr.rel (%p318) target = $region16
        $region15: #{tpu_custom_call.1} parent=11 // pred_region
          _
        $region16: #{tpu_custom_call.1} parent=11 // pred_fallthru
          _
        // Predicated region
        $region17: #{tpu_custom_call.1} parent=11 // pred_check
          %p321 = pneg %p183
        $region18: #{tpu_custom_call.1} parent=11 // pred_check_branch
          %323 = sbr.rel (%p321) target = $region20
        $region19: #{tpu_custom_call.1} parent=11 // pred_region
          _
        $region20: #{tpu_custom_call.1} parent=11 // pred_fallthru
          _
        // Predicated region
        $region21: #{tpu_custom_call.1} parent=11 // pred_check
          %p324 = pneg %p204
        $region22: #{tpu_custom_call.1} parent=11 // pred_check_branch
          %326 = sbr.rel (%p324) target = $region24
        $region23: #{tpu_custom_call.1} parent=11 // pred_region
          %s328 = ssub.s32 2048, 2048
          %329 = vsyncadd [#allocation9], %s328
          %s330 = sshll.u32 [#allocation10], 4
          %s331 = int_to_ptr.vmem [resolvable:$true] %s330
          %336 = dma.hbm_to_vmem [thread:$0]  %s6, 2048, %s331, [#allocation9], 64, 64, 4
        $region24: #{tpu_custom_call.1} parent=11 // pred_fallthru
          _
        // Predicated region
        $region25: #{tpu_custom_call.1} parent=11 // pred_check
          %p337 = pneg %p225
        $region26: #{tpu_custom_call.1} parent=11 // pred_check_branch
          %339 = sbr.rel (%p337) target = $region28
        $region27: #{tpu_custom_call.1} parent=11 // pred_region
          _
        $region28: #{tpu_custom_call.1} parent=11 // pred_fallthru
          _
      $region12: #{tpu_custom_call.1} parent=5 // pred_fallthru
        _
      %p340 = scmp.lt.s32.totalorder %s25, 4
      // Predicated region
      $region29: #{tpu_custom_call.1} parent=5 // pred_check
        %p341 = pneg %p340
      $region30: #{tpu_custom_call.1} parent=5 // pred_check_branch
        %343 = sbr.rel (%p341) target = $region32
      $region31: #{tpu_custom_call.1} parent=5 // pred_region
        // Predicated region
        $region33: #{tpu_custom_call.1} parent=31 // pred_check
          %p344 = pneg %p57
        $region34: #{tpu_custom_call.1} parent=31 // pred_check_branch
          %346 = sbr.rel (%p344) target = $region36
        $region35: #{tpu_custom_call.1} parent=31 // pred_region
          %s347 = smul.u32 2, %s32
          %p348 = scmp.lt.s32.totalorder %s347, 3
          %s349 = scalar_select %p348, %s347, 3
          %s350 = smul.addr %s349, 8
          %s351 = scalar_lea.vmem %s0, %s350
          %s352 = smul.u32 2, %s32
        $region36: #{tpu_custom_call.1} parent=31 // pred_fallthru
          _
        // Predicated region
        $region37: #{tpu_custom_call.1} parent=31 // pred_check
          %p353 = pneg %p83
        $region38: #{tpu_custom_call.1} parent=31 // pred_check_branch
          %355 = sbr.rel (%p353) target = $region40
        $region39: #{tpu_custom_call.1} parent=31 // pred_region
          %s356 = smul.u32 2, %s32
          %p357 = scmp.lt.s32.totalorder %s356, 3
          %s358 = scalar_select %p357, %s356, 3
          %s359 = smul.addr %s358, 8
          %s360 = scalar_lea.vmem %s1, %s359
          %s361 = smul.u32 2, %s32
        $region40: #{tpu_custom_call.1} parent=31 // pred_fallthru
          _
        // Predicated region
        $region41: #{tpu_custom_call.1} parent=31 // pred_check
          %p362 = pneg %p109
        $region42: #{tpu_custom_call.1} parent=31 // pred_check_branch
          %364 = sbr.rel (%p362) target = $region44
        $region43: #{tpu_custom_call.1} parent=31 // pred_region
          %s365 = sand.u32 %s99, 1
          %s366 = scalar_lea.sflag [#allocation7], %s365
          %s367 = sand.u32 %s99, 1
          %s368 = smul.addr %s367, 128
          %s369 = scalar_lea.vmem [#allocation6], %s368
          %s370 = smul.u32 32, %s32
          %s372 = ssub.s32 2048, 2048
          %373 = vsyncadd %s366, %s372
          %s374 = smul.addr %s370, 64
          %s375 = scalar_lea.hbm %s2, %s374
          %s376 = sshll.u32 %s369, 4
          %s377 = int_to_ptr.vmem [resolvable:$true] %s376
          %382 = dma.hbm_to_vmem [thread:$0]  %s375, 2048, %s377, %s366, 64, 64, 4
        $region44: #{tpu_custom_call.1} parent=31 // pred_fallthru
          _
        // Predicated region
        $region45: #{tpu_custom_call.1} parent=31 // pred_check
          %p383 = pneg %p135
        $region46: #{tpu_custom_call.1} parent=31 // pred_check_branch
          %385 = sbr.rel (%p383) target = $region48
        $region47: #{tpu_custom_call.1} parent=31 // pred_region
          %s386 = sand.u32 %s25, 1
          %s387 = scalar_lea.sflag [#allocation9], %s386
          %s388 = sand.u32 %s125, 1
          %s389 = smul.addr %s388, 128
          %s390 = scalar_lea.vmem [#allocation8], %s389
          %s391 = smul.u32 32, %s32
          %s393 = ssub.s32 2048, 2048
          %394 = vsyncadd %s387, %s393
          %s395 = smul.addr %s391, 64
          %s396 = scalar_lea.hbm %s3, %s395
          %s397 = sshll.u32 %s390, 4
          %s398 = int_to_ptr.vmem [resolvable:$true] %s397
          %403 = dma.hbm_to_vmem [thread:$0]  %s396, 2048, %s398, %s387, 64, 64, 4
        $region48: #{tpu_custom_call.1} parent=31 // pred_fallthru
          _
        // Predicated region
        $region49: #{tpu_custom_call.1} parent=31 // pred_check
          %p404 = pneg %p245
        $region50: #{tpu_custom_call.1} parent=31 // pred_check_branch
          %406 = sbr.rel (%p404) target = $region52
        $region51: #{tpu_custom_call.1} parent=31 // pred_region
          %s407 = sand.u32 %s235, 1
          %s408 = scalar_lea.sflag [#allocation12], %s407
          %s409 = sand.u32 %s235, 1
          %s410 = smul.addr %s409, 64
          %s411 = scalar_lea.vmem [#allocation11], %s410
          %s413 = ssub.s32 1024, 1024
          %414 = vsyncadd %s408, %s413
          %s415 = smul.addr %s33, 64
          %s416 = scalar_lea.hbm %s8, %s415
          %s417 = sshll.u32 %s411, 4
          %s418 = int_to_ptr.vmem [resolvable:$true] %s417
          %423 = dma.hbm_to_vmem [thread:$0]  %s416, 1024, %s418, %s408, 128, 64, 4
        $region52: #{tpu_custom_call.1} parent=31 // pred_fallthru
          _
        // Predicated region
        $region53: #{tpu_custom_call.1} parent=31 // pred_check
          %p424 = pneg %p271
        $region54: #{tpu_custom_call.1} parent=31 // pred_check_branch
          %426 = sbr.rel (%p424) target = $region56
        $region55: #{tpu_custom_call.1} parent=31 // pred_region
          %p427 = scmp.lt.s32.totalorder %s33, 1
          %s428 = scalar_select %p427, %s33, 1
          %s429 = scalar_lea.vmem %s9, %s428
        $region56: #{tpu_custom_call.1} parent=31 // pred_fallthru
          _
      $region32: #{tpu_custom_call.1} parent=5 // pred_fallthru
        _
      %p430 = scmp.le.s32.totalorder 1, %s25
      %p431 = scmp.lt.s32.totalorder %s25, 5
      %p432 = pnand %p430, %p431
      %p433 = pneg %p432
      // Predicated region
      $region57: #{tpu_custom_call.1} parent=5 // pred_check
        _
      $region58: #{tpu_custom_call.1} parent=5 // pred_check_branch
        %435 = sbr.rel (%p432) target = $region60
      $region59: #{tpu_custom_call.1} parent=5 // pred_region
        %s436 = ssub.s32 %s25, 1
        %s437 = sand.u32 %s102, 1
        %s438 = scalar_lea.sflag [#allocation7], %s437
        %s439 = sand.u32 %s102, 1
        %s440 = smul.addr %s439, 128
        %s441 = scalar_lea.vmem [#allocation6], %s440
        // Predicated region
        $region61: #{tpu_custom_call.1} parent=59 // pred_check
          %p442 = pneg %p115
        $region62: #{tpu_custom_call.1} parent=59 // pred_check_branch
          %444 = sbr.rel (%p442) target = $region64
        $region63: #{tpu_custom_call.1} parent=59 // pred_region
          %445 = dma.done %s438, 2048
        $region64: #{tpu_custom_call.1} parent=59 // pred_fallthru
          _
        %s446 = sand.u32 %s30, 1
        %s447 = scalar_lea.sflag [#allocation9], %s446
        %s448 = sand.u32 %s128, 1
        %s449 = smul.addr %s448, 128
        %s450 = scalar_lea.vmem [#allocation8], %s449
        // Predicated region
        $region65: #{tpu_custom_call.1} parent=59 // pred_check
          %p451 = pneg %p141
        $region66: #{tpu_custom_call.1} parent=59 // pred_check_branch
          %453 = sbr.rel (%p451) target = $region68
        $region67: #{tpu_custom_call.1} parent=59 // pred_region
          %454 = dma.done %s447, 2048
        $region68: #{tpu_custom_call.1} parent=59 // pred_fallthru
          _
        // Predicated region
        $region69: #{tpu_custom_call.1} parent=59 // pred_check
          %p455 = pneg %p204
        $region70: #{tpu_custom_call.1} parent=59 // pred_check_branch
          %457 = sbr.rel (%p455) target = $region72
        $region71: #{tpu_custom_call.1} parent=59 // pred_region
          %458 = dma.done [#allocation9], 2048
        $region72: #{tpu_custom_call.1} parent=59 // pred_fallthru
          _
        %s459 = sand.u32 %s238, 1
        %s460 = scalar_lea.sflag [#allocation12], %s459
        %s461 = sand.u32 %s238, 1
        %s462 = smul.addr %s461, 64
        %s463 = scalar_lea.vmem [#allocation11], %s462
        // Predicated region
        $region73: #{tpu_custom_call.1} parent=59 // pred_check
          %p464 = pneg %p251
        $region74: #{tpu_custom_call.1} parent=59 // pred_check_branch
          %466 = sbr.rel (%p464) target = $region76
        $region75: #{tpu_custom_call.1} parent=59 // pred_region
          %467 = dma.done %s460, 1024
        $region76: #{tpu_custom_call.1} parent=59 // pred_fallthru
          _
        %s468 = smul.u32 2, %s34
        %p469 = scmp.lt.s32.totalorder %s468, 3
        %s470 = scalar_select %p469, %s468, 3
        %s471 = smul.addr %s470, 8
        %s472 = scalar_lea.vmem %s0, %s471
        %p473 = pneg %p63
        %p474 = pneg %p60
        %s475 = smul.u32 2, %s34
        %p476 = scmp.lt.s32.totalorder %s475, 3
        %s477 = scalar_select %p476, %s475, 3
        %s478 = smul.addr %s477, 8
        %s479 = scalar_lea.vmem %s1, %s478
        %p480 = pneg %p89
        %p481 = pneg %p86
        %s482 = sand.u32 %s102, 1
        %s483 = scalar_lea.sflag [#allocation7], %s482
        %s484 = sand.u32 %s102, 1
        %s485 = smul.addr %s484, 128
        %s486 = scalar_lea.vmem [#allocation6], %s485
        %p487 = pneg %p115
        %p488 = pneg %p112
        %s489 = sand.u32 %s30, 1
        %s490 = scalar_lea.sflag [#allocation9], %s489
        %s491 = sand.u32 %s128, 1
        %s492 = smul.addr %s491, 128
        %s493 = scalar_lea.vmem [#allocation8], %s492
        %p494 = pneg %p141
        %p495 = pneg %p138
        %p496 = pneg %p162
        %p497 = pneg %p159
        %p498 = pneg %p183
        %p499 = pneg %p180
        %p500 = pneg %p204
        %p501 = pneg %p201
        %p502 = pneg %p225
        %p503 = pneg %p222
        %s504 = sand.u32 %s238, 1
        %s505 = scalar_lea.sflag [#allocation12], %s504
        %s506 = sand.u32 %s238, 1
        %s507 = smul.addr %s506, 64
        %s508 = scalar_lea.vmem [#allocation11], %s507
        %p509 = pneg %p251
        %p510 = pneg %p248
        %p511 = scmp.lt.s32.totalorder %s35, 1
        %s512 = scalar_select %p511, %s35, 1
        %s513 = scalar_lea.vmem %s9, %s512
        %p514 = pneg %p277
        %p515 = pneg %p274
        %p516 = pneg %p303
        %p517 = pneg %p300
        %s518 = smul.u32 2, %s34
        %p519 = scmp.lt.s32.totalorder %s518, 3
        %s520 = scalar_select %p519, %s518, 3
        %s521 = smul.addr %s520, 8
        %s522 = scalar_lea.vmem %s10, %s521
        %s523 = smul.u32 2, %s34
        %p524 = scmp.lt.s32.totalorder %s523, 3
        %s525 = scalar_select %p524, %s523, 3
        %s526 = smul.addr %s525, 8
        %s527 = scalar_lea.vmem %s0, %s526
        %s528 = smul.u32 2, %s34
        %s529 = smul.u32 2, %s34
        %p530 = scmp.lt.s32.totalorder %s529, 3
        %s531 = scalar_select %p530, %s529, 3
        %s532 = smul.addr %s531, 8
        %s533 = scalar_lea.vmem %s1, %s532
        %s534 = smul.u32 2, %s34
        %s535 = smul.u32 32, %s34
        %s536 = smul.u32 32, %s34
        %p537 = scmp.lt.s32.totalorder %s35, 1
        %s538 = scalar_select %p537, %s35, 1
        %s539 = scalar_lea.vmem %s9, %s538
        %s540 = smul.u32 2, %s34
        %p541 = scmp.lt.s32.totalorder %s540, 3
        %s542 = scalar_select %p541, %s540, 3
        %s543 = smul.addr %s542, 8
        %s544 = scalar_lea.vmem %s10, %s543
        %s545 = smul.u32 2, %s34
        %p547 = scmp.eq.s32.totalorder %s35, 0
        // Predicated region
        $region77: #{tpu_custom_call.1} parent=59 // pred_check
          %p548 = pneg %p547
        $region78: #{tpu_custom_call.1} parent=59 // pred_check_branch
          %550 = sbr.rel (%p548) target = $region80
        $region79: #{tpu_custom_call.1} parent=59 // pred_region
          %v551 = vld [vmem:[%s527] sm:$0xff]
          %v552 = vld [vmem:[%s527 + $0x8] sm:$0xff]
          %v553 = vld [vmem:[%s441] sm:$0xf]
          %v554 = vld [vmem:[%s441 + $0x4] sm:$0xf]
          %v555 = vld [vmem:[%s441 + $0x8] sm:$0xf]
          %v556 = vld [vmem:[%s441 + $0xc] sm:$0xf]
          %v557 = vld [vmem:[%s441 + $0x10] sm:$0xf]
          %v558 = vld [vmem:[%s441 + $0x14] sm:$0xf]
          %v559 = vld [vmem:[%s441 + $0x18] sm:$0xf]
          %v560 = vld [vmem:[%s441 + $0x1c] sm:$0xf]
          %v561 = vld [vmem:[%s441 + $0x20] sm:$0xf]
          %v562 = vld [vmem:[%s441 + $0x24] sm:$0xf]
          %v563 = vld [vmem:[%s441 + $0x28] sm:$0xf]
          %v564 = vld [vmem:[%s441 + $0x2c] sm:$0xf]
          %v565 = vld [vmem:[%s441 + $0x30] sm:$0xf]
          %v566 = vld [vmem:[%s441 + $0x34] sm:$0xf]
          %v567 = vld [vmem:[%s441 + $0x38] sm:$0xf]
          %v568 = vld [vmem:[%s441 + $0x3c] sm:$0xf]
          %v569 = vld [vmem:[%s441 + $0x40] sm:$0xf]
          %v570 = vld [vmem:[%s441 + $0x44] sm:$0xf]
          %v571 = vld [vmem:[%s441 + $0x48] sm:$0xf]
          %v572 = vld [vmem:[%s441 + $0x4c] sm:$0xf]
          %v573 = vld [vmem:[%s441 + $0x50] sm:$0xf]
          %v574 = vld [vmem:[%s441 + $0x54] sm:$0xf]
          %v575 = vld [vmem:[%s441 + $0x58] sm:$0xf]
          %v576 = vld [vmem:[%s441 + $0x5c] sm:$0xf]
          %v577 = vld [vmem:[%s441 + $0x60] sm:$0xf]
          %v578 = vld [vmem:[%s441 + $0x64] sm:$0xf]
          %v579 = vld [vmem:[%s441 + $0x68] sm:$0xf]
          %v580 = vld [vmem:[%s441 + $0x6c] sm:$0xf]
          %v581 = vld [vmem:[%s441 + $0x70] sm:$0xf]
          %v582 = vld [vmem:[%s441 + $0x74] sm:$0xf]
          %v583 = vld [vmem:[%s441 + $0x78] sm:$0xf]
          %v584 = vld [vmem:[%s441 + $0x7c] sm:$0xf]
          %v585 = vld [vmem:[%s450] sm:$0xf]
          %v586 = vld [vmem:[%s450 + $0x4] sm:$0xf]
          %v587 = vld [vmem:[%s450 + $0x8] sm:$0xf]
          %v588 = vld [vmem:[%s450 + $0xc] sm:$0xf]
          %v589 = vld [vmem:[%s450 + $0x10] sm:$0xf]
          %v590 = vld [vmem:[%s450 + $0x14] sm:$0xf]
          %v591 = vld [vmem:[%s450 + $0x18] sm:$0xf]
          %v592 = vld [vmem:[%s450 + $0x1c] sm:$0xf]
          %v593 = vld [vmem:[%s450 + $0x20] sm:$0xf]
          %v594 = vld [vmem:[%s450 + $0x24] sm:$0xf]
          %v595 = vld [vmem:[%s450 + $0x28] sm:$0xf]
          %v596 = vld [vmem:[%s450 + $0x2c] sm:$0xf]
          %v597 = vld [vmem:[%s450 + $0x30] sm:$0xf]
          %v598 = vld [vmem:[%s450 + $0x34] sm:$0xf]
          %v599 = vld [vmem:[%s450 + $0x38] sm:$0xf]
          %v600 = vld [vmem:[%s450 + $0x3c] sm:$0xf]
          %v601 = vld [vmem:[%s450 + $0x40] sm:$0xf]
          %v602 = vld [vmem:[%s450 + $0x44] sm:$0xf]
          %v603 = vld [vmem:[%s450 + $0x48] sm:$0xf]
          %v604 = vld [vmem:[%s450 + $0x4c] sm:$0xf]
          %v605 = vld [vmem:[%s450 + $0x50] sm:$0xf]
          %v606 = vld [vmem:[%s450 + $0x54] sm:$0xf]
          %v607 = vld [vmem:[%s450 + $0x58] sm:$0xf]
          %v608 = vld [vmem:[%s450 + $0x5c] sm:$0xf]
          %v609 = vld [vmem:[%s450 + $0x60] sm:$0xf]
          %v610 = vld [vmem:[%s450 + $0x64] sm:$0xf]
          %v611 = vld [vmem:[%s450 + $0x68] sm:$0xf]
          %v612 = vld [vmem:[%s450 + $0x6c] sm:$0xf]
          %v613 = vld [vmem:[%s450 + $0x70] sm:$0xf]
          %v614 = vld [vmem:[%s450 + $0x74] sm:$0xf]
          %v615 = vld [vmem:[%s450 + $0x78] sm:$0xf]
          %v616 = vld [vmem:[%s450 + $0x7c] sm:$0xf]
          %v617 = vld [vmem:[%s4] sm:$0xf]
          %v618 = vld [vmem:[%s4 + $0x4] sm:$0xf]
          %v619 = vld [vmem:[%s4 + $0x8] sm:$0xf]
          %v620 = vld [vmem:[%s4 + $0xc] sm:$0xf]
          %v621 = vld [vmem:[%s4 + $0x10] sm:$0xf]
          %v622 = vld [vmem:[%s4 + $0x14] sm:$0xf]
          %v623 = vld [vmem:[%s4 + $0x18] sm:$0xf]
          %v624 = vld [vmem:[%s4 + $0x1c] sm:$0xf]
          %v625 = vld [vmem:[%s4 + $0x20] sm:$0xf]
          %v626 = vld [vmem:[%s4 + $0x24] sm:$0xf]
          %v627 = vld [vmem:[%s4 + $0x28] sm:$0xf]
          %v628 = vld [vmem:[%s4 + $0x2c] sm:$0xf]
          %v629 = vld [vmem:[%s4 + $0x30] sm:$0xf]
          %v630 = vld [vmem:[%s4 + $0x34] sm:$0xf]
          %v631 = vld [vmem:[%s4 + $0x38] sm:$0xf]
          %v632 = vld [vmem:[%s4 + $0x3c] sm:$0xf]
          %v633 = vld [vmem:[%s5] sm:$0x1]
          %v634 = vld [vmem:[#allocation10] sm:$0xf]
          %v635 = vld [vmem:[#allocation10 + $0x4] sm:$0xf]
          %v636 = vld [vmem:[#allocation10 + $0x8] sm:$0xf]
          %v637 = vld [vmem:[#allocation10 + $0xc] sm:$0xf]
          %v638 = vld [vmem:[#allocation10 + $0x10] sm:$0xf]
          %v639 = vld [vmem:[#allocation10 + $0x14] sm:$0xf]
          %v640 = vld [vmem:[#allocation10 + $0x18] sm:$0xf]
          %v641 = vld [vmem:[#allocation10 + $0x1c] sm:$0xf]
          %v642 = vld [vmem:[#allocation10 + $0x20] sm:$0xf]
          %v643 = vld [vmem:[#allocation10 + $0x24] sm:$0xf]
          %v644 = vld [vmem:[#allocation10 + $0x28] sm:$0xf]
          %v645 = vld [vmem:[#allocation10 + $0x2c] sm:$0xf]
          %v646 = vld [vmem:[#allocation10 + $0x30] sm:$0xf]
          %v647 = vld [vmem:[#allocation10 + $0x34] sm:$0xf]
          %v648 = vld [vmem:[#allocation10 + $0x38] sm:$0xf]
          %v649 = vld [vmem:[#allocation10 + $0x3c] sm:$0xf]
          %v650 = vld [vmem:[#allocation10 + $0x40] sm:$0xf]
          %v651 = vld [vmem:[#allocation10 + $0x44] sm:$0xf]
          %v652 = vld [vmem:[#allocation10 + $0x48] sm:$0xf]
          %v653 = vld [vmem:[#allocation10 + $0x4c] sm:$0xf]
          %v654 = vld [vmem:[#allocation10 + $0x50] sm:$0xf]
          %v655 = vld [vmem:[#allocation10 + $0x54] sm:$0xf]
          %v656 = vld [vmem:[#allocation10 + $0x58] sm:$0xf]
          %v657 = vld [vmem:[#allocation10 + $0x5c] sm:$0xf]
          %v658 = vld [vmem:[#allocation10 + $0x60] sm:$0xf]
          %v659 = vld [vmem:[#allocation10 + $0x64] sm:$0xf]
          %v660 = vld [vmem:[#allocation10 + $0x68] sm:$0xf]
          %v661 = vld [vmem:[#allocation10 + $0x6c] sm:$0xf]
          %v662 = vld [vmem:[#allocation10 + $0x70] sm:$0xf]
          %v663 = vld [vmem:[#allocation10 + $0x74] sm:$0xf]
          %v664 = vld [vmem:[#allocation10 + $0x78] sm:$0xf]
          %v665 = vld [vmem:[#allocation10 + $0x7c] sm:$0xf]
          %v666 = vld [vmem:[%s7] sm:$0x1]
          %v668 = vlaneseq
          %v669 = vshrl.u32 %v668, 7
          %v670 = vsub.s32 0, %v669
          %v671 = vrot.slane %v633, %v670
          %v705 = vunpack.c.l.b16 %v553
          %v706 = vunpack.c.l.b16 %v554
          %v707 = vunpack.c.l.b16 %v555
          %v708 = vunpack.c.l.b16 %v556
          %v709 = vunpack.c.l.b16 %v557
          %v710 = vunpack.c.l.b16 %v558
          %v711 = vunpack.c.l.b16 %v559
          %v712 = vunpack.c.l.b16 %v560
          %v713 = vunpack.c.l.b16 %v561
          %v714 = vunpack.c.l.b16 %v562
          %v715 = vunpack.c.l.b16 %v563
          %v716 = vunpack.c.l.b16 %v564
          %v717 = vunpack.c.l.b16 %v565
          %v718 = vunpack.c.l.b16 %v566
          %v719 = vunpack.c.l.b16 %v567
          %v720 = vunpack.c.l.b16 %v568
          %v721 = vunpack.c.l.b16 %v569
          %v722 = vunpack.c.l.b16 %v570
          %v723 = vunpack.c.l.b16 %v571
          %v724 = vunpack.c.l.b16 %v572
          %v725 = vunpack.c.l.b16 %v573
          %v726 = vunpack.c.l.b16 %v574
          %v727 = vunpack.c.l.b16 %v575
          %v728 = vunpack.c.l.b16 %v576
          %v729 = vunpack.c.l.b16 %v577
          %v730 = vunpack.c.l.b16 %v578
          %v731 = vunpack.c.l.b16 %v579
          %v732 = vunpack.c.l.b16 %v580
          %v733 = vunpack.c.l.b16 %v581
          %v734 = vunpack.c.l.b16 %v582
          %v735 = vunpack.c.l.b16 %v583
          %v736 = vunpack.c.l.b16 %v584
          %v737 = vpack.c.b16 %v706, %v705
          %v738 = vpack.c.b16 %v708, %v707
          %v739 = vpack.c.b16 %v710, %v709
          %v740 = vpack.c.b16 %v712, %v711
          %v741 = vpack.c.b16 %v714, %v713
          %v742 = vpack.c.b16 %v716, %v715
          %v743 = vpack.c.b16 %v718, %v717
          %v744 = vpack.c.b16 %v720, %v719
          %v745 = vpack.c.b16 %v722, %v721
          %v746 = vpack.c.b16 %v724, %v723
          %v747 = vpack.c.b16 %v726, %v725
          %v748 = vpack.c.b16 %v728, %v727
          %v749 = vpack.c.b16 %v730, %v729
          %v750 = vpack.c.b16 %v732, %v731
          %v751 = vpack.c.b16 %v734, %v733
          %v752 = vpack.c.b16 %v736, %v735
          %v785 = vunpack.c.l.b16 %v617
          %v786 = vunpack.c.l.b16 %v618
          %v787 = vunpack.c.l.b16 %v619
          %v788 = vunpack.c.l.b16 %v620
          %v789 = vunpack.c.l.b16 %v621
          %v790 = vunpack.c.l.b16 %v622
          %v791 = vunpack.c.l.b16 %v623
          %v792 = vunpack.c.l.b16 %v624
          %v793 = vunpack.c.l.b16 %v625
          %v794 = vunpack.c.l.b16 %v626
          %v795 = vunpack.c.l.b16 %v627
          %v796 = vunpack.c.l.b16 %v628
          %v797 = vunpack.c.l.b16 %v629
          %v798 = vunpack.c.l.b16 %v630
          %v799 = vunpack.c.l.b16 %v631
          %v800 = vunpack.c.l.b16 %v632
          %v801 = vpack.c.b16 %v786, %v785
          %v802 = vpack.c.b16 %v788, %v787
          %v803 = vpack.c.b16 %v790, %v789
          %v804 = vpack.c.b16 %v792, %v791
          %v805 = vpack.c.b16 %v794, %v793
          %v806 = vpack.c.b16 %v796, %v795
          %v807 = vpack.c.b16 %v798, %v797
          %v808 = vpack.c.b16 %v800, %v799
          %817 = vmatprep.subr.bf16.mxu0 0
          %818 = vmatpush1.bf16.msra.mxu0 %v801
          %819 = vmatprep.subr.bf16.mxu0 0
          %820 = vmatpush1.bf16.msra.mxu0 %v802
          %821 = vmatprep.subr.bf16.mxu0 0
          %822 = vmatpush1.bf16.msra.mxu0 %v803
          %823 = vmatprep.subr.bf16.mxu0 0
          %824 = vmatpush1.bf16.msra.mxu0 %v804
          %825 = vmatprep.subr.bf16.mxu0 0
          %826 = vmatpush1.bf16.msra.mxu0 %v805
          %827 = vmatprep.subr.bf16.mxu0 0
          %828 = vmatpush1.bf16.msra.mxu0 %v806
          %829 = vmatprep.subr.bf16.mxu0 0
          %830 = vmatpush1.bf16.msra.mxu0 %v807
          %831 = vmatprep.subr.bf16.mxu0 0
          %832 = vmatpush1.bf16.msra.mxu0 %v808
          %833 = vmatprep.subr.bf16.mxu0 0
          %834 = vmatpush1.bf16.msra.mxu0 0
          %835 = vmatprep.subr.bf16.mxu0 0
          %836 = vmatpush1.bf16.msra.mxu0 0
          %837 = vmatprep.subr.bf16.mxu0 0
          %838 = vmatpush1.bf16.msra.mxu0 0
          %839 = vmatprep.subr.bf16.mxu0 0
          %840 = vmatpush1.bf16.msra.mxu0 0
          %841 = vmatprep.subr.bf16.mxu0 0
          %842 = vmatpush1.bf16.msra.mxu0 0
          %843 = vmatprep.subr.bf16.mxu0 0
          %844 = vmatpush1.bf16.msra.mxu0 0
          %845 = vmatprep.subr.bf16.mxu0 0
          %846 = vmatpush1.bf16.msra.mxu0 0
          %847 = vmatprep.subr.bf16.mxu0 0
          %848 = vmatpush1.bf16.msra.mxu0 0
          %849 = vmatprep.mubr.bf16.mxu0 0
          %850 = vmatmul.mubr.bf16.gmra.mrb[0].mxu0 %v737
          %v851 = vpop.f32.mrb[0].mxu0
          %v852 = vadd.f32 %v671, %v851
          %v853 = vpop.f32.mrb[0].mxu0
          %v854 = vpop.f32.mrb[0].mxu0
          %v855 = vadd.f32 %v671, %v854
          %v856 = vpop.f32.mrb[0].mxu0
          %857 = vmatprep.mubr.bf16.mxu0 0
          %858 = vmatmul.mubr.bf16.gmra.mrb[0].mxu0 %v738
          %v859 = vpop.f32.mrb[0].mxu0
          %v860 = vadd.f32 %v671, %v859
          %v861 = vpop.f32.mrb[0].mxu0
          %v862 = vpop.f32.mrb[0].mxu0
          %v863 = vadd.f32 %v671, %v862
          %v864 = vpop.f32.mrb[0].mxu0
          %865 = vmatprep.mubr.bf16.mxu0 0
          %866 = vmatmul.mubr.bf16.gmra.mrb[0].mxu0 %v739
          %v867 = vpop.f32.mrb[0].mxu0
          %v868 = vadd.f32 %v671, %v867
          %v869 = vpop.f32.mrb[0].mxu0
          %v870 = vpop.f32.mrb[0].mxu0
          %v871 = vadd.f32 %v671, %v870
          %v872 = vpop.f32.mrb[0].mxu0
          %873 = vmatprep.mubr.bf16.mxu0 0
          %874 = vmatmul.mubr.bf16.gmra.mrb[0].mxu0 %v740
          %v875 = vpop.f32.mrb[0].mxu0
          %v876 = vadd.f32 %v671, %v875
          %v877 = vpop.f32.mrb[0].mxu0
          %v878 = vpop.f32.mrb[0].mxu0
          %v879 = vadd.f32 %v671, %v878
          %v880 = vpop.f32.mrb[0].mxu0
          %881 = vmatprep.mubr.bf16.mxu0 0
          %882 = vmatmul.mubr.bf16.gmra.mrb[0].mxu0 %v741
          %v883 = vpop.f32.mrb[0].mxu0
          %v884 = vadd.f32 %v671, %v883
          %v885 = vpop.f32.mrb[0].mxu0
          %v886 = vpop.f32.mrb[0].mxu0
          %v887 = vadd.f32 %v671, %v886
          %v888 = vpop.f32.mrb[0].mxu0
          %889 = vmatprep.mubr.bf16.mxu0 0
          %890 = vmatmul.mubr.bf16.gmra.mrb[0].mxu0 %v742
          %v891 = vpop.f32.mrb[0].mxu0
          %v892 = vadd.f32 %v671, %v891
          %v893 = vpop.f32.mrb[0].mxu0
          %v894 = vpop.f32.mrb[0].mxu0
          %v895 = vadd.f32 %v671, %v894
          %v896 = vpop.f32.mrb[0].mxu0
          %897 = vmatprep.mubr.bf16.mxu0 0
          %898 = vmatmul.mubr.bf16.gmra.mrb[0].mxu0 %v743
          %v899 = vpop.f32.mrb[0].mxu0
          %v900 = vadd.f32 %v671, %v899
          %v901 = vpop.f32.mrb[0].mxu0
          %v902 = vpop.f32.mrb[0].mxu0
          %v903 = vadd.f32 %v671, %v902
          %v904 = vpop.f32.mrb[0].mxu0
          %905 = vmatprep.mubr.bf16.mxu0 0
          %906 = vmatmul.mubr.bf16.gmra.mrb[0].mxu0 %v744
          %v907 = vpop.f32.mrb[0].mxu0
          %v908 = vadd.f32 %v671, %v907
          %v909 = vpop.f32.mrb[0].mxu0
          %v910 = vpop.f32.mrb[0].mxu0
          %v911 = vadd.f32 %v671, %v910
          %v912 = vpop.f32.mrb[0].mxu0
          %913 = vmatprep.mubr.bf16.mxu0 0
          %914 = vmatmul.mubr.bf16.gmra.mrb[0].mxu0 %v745
          %v915 = vpop.f32.mrb[0].mxu0
          %v916 = vadd.f32 %v671, %v915
          %v917 = vpop.f32.mrb[0].mxu0
          %v918 = vpop.f32.mrb[0].mxu0
          %v919 = vadd.f32 %v671, %v918
          %v920 = vpop.f32.mrb[0].mxu0
          %921 = vmatprep.mubr.bf16.mxu0 0
          %922 = vmatmul.mubr.bf16.gmra.mrb[0].mxu0 %v746
          %v923 = vpop.f32.mrb[0].mxu0
          %v924 = vadd.f32 %v671, %v923
          %v925 = vpop.f32.mrb[0].mxu0
          %v926 = vpop.f32.mrb[0].mxu0
          %v927 = vadd.f32 %v671, %v926
          %v928 = vpop.f32.mrb[0].mxu0
          %929 = vmatprep.mubr.bf16.mxu0 0
          %930 = vmatmul.mubr.bf16.gmra.mrb[0].mxu0 %v747
          %v931 = vpop.f32.mrb[0].mxu0
          %v932 = vadd.f32 %v671, %v931
          %v933 = vpop.f32.mrb[0].mxu0
          %v934 = vpop.f32.mrb[0].mxu0
          %v935 = vadd.f32 %v671, %v934
          %v936 = vpop.f32.mrb[0].mxu0
          %937 = vmatprep.mubr.bf16.mxu0 0
          %938 = vmatmul.mubr.bf16.gmra.mrb[0].mxu0 %v748
          %v939 = vpop.f32.mrb[0].mxu0
          %v940 = vadd.f32 %v671, %v939
          %v941 = vpop.f32.mrb[0].mxu0
          %v942 = vpop.f32.mrb[0].mxu0
          %v943 = vadd.f32 %v671, %v942
          %v944 = vpop.f32.mrb[0].mxu0
          %945 = vmatprep.mubr.bf16.mxu0 0
          %946 = vmatmul.mubr.bf16.gmra.mrb[0].mxu0 %v749
          %v947 = vpop.f32.mrb[0].mxu0
          %v948 = vadd.f32 %v671, %v947
          %v949 = vpop.f32.mrb[0].mxu0
          %v950 = vpop.f32.mrb[0].mxu0
          %v951 = vadd.f32 %v671, %v950
          %v952 = vpop.f32.mrb[0].mxu0
          %953 = vmatprep.mubr.bf16.mxu0 0
          %954 = vmatmul.mubr.bf16.gmra.mrb[0].mxu0 %v750
          %v955 = vpop.f32.mrb[0].mxu0
          %v956 = vadd.f32 %v671, %v955
          %v957 = vpop.f32.mrb[0].mxu0
          %v958 = vpop.f32.mrb[0].mxu0
          %v959 = vadd.f32 %v671, %v958
          %v960 = vpop.f32.mrb[0].mxu0
          %961 = vmatprep.mubr.bf16.mxu0 0
          %962 = vmatmul.mubr.bf16.gmra.mrb[0].mxu0 %v751
          %v963 = vpop.f32.mrb[0].mxu0
          %v964 = vadd.f32 %v671, %v963
          %v965 = vpop.f32.mrb[0].mxu0
          %v966 = vpop.f32.mrb[0].mxu0
          %v967 = vadd.f32 %v671, %v966
          %v968 = vpop.f32.mrb[0].mxu0
          %969 = vmatprep.mubr.bf16.mxu0 0
          %970 = vmatmul.mubr.bf16.gmra.mrb[0].mxu0 %v752
          %v971 = vpop.f32.mrb[0].mxu0
          %v972 = vadd.f32 %v671, %v971
          %v973 = vpop.f32.mrb[0].mxu0
          %v974 = vpop.f32.mrb[0].mxu0
          %v975 = vadd.f32 %v671, %v974
          %v976 = vpop.f32.mrb[0].mxu0
          %977 = vdwg.mxu0
          %v978 = vtanh.pop %v852
          %v979 = vtanh.pop %v855
          %v980 = vtanh.pop %v860
          %v981 = vtanh.pop %v863
          %v982 = vtanh.pop %v868
          %v983 = vtanh.pop %v871
          %v984 = vtanh.pop %v876
          %v985 = vtanh.pop %v879
          %v986 = vtanh.pop %v884
          %v987 = vtanh.pop %v887
          %v988 = vtanh.pop %v892
          %v989 = vtanh.pop %v895
          %v990 = vtanh.pop %v900
          %v991 = vtanh.pop %v903
          %v992 = vtanh.pop %v908
          %v993 = vtanh.pop %v911
          %v994 = vtanh.pop %v916
          %v995 = vtanh.pop %v919
          %v996 = vtanh.pop %v924
          %v997 = vtanh.pop %v927
          %v998 = vtanh.pop %v932
          %v999 = vtanh.pop %v935
          %v1000 = vtanh.pop %v940
          %v1001 = vtanh.pop %v943
          %v1002 = vtanh.pop %v948
          %v1003 = vtanh.pop %v951
          %v1004 = vtanh.pop %v956
          %v1005 = vtanh.pop %v959
          %v1006 = vtanh.pop %v964
          %v1007 = vtanh.pop %v967
          %v1008 = vtanh.pop %v972
          %v1009 = vtanh.pop %v975
          %vm1010 = vcmask 130048
          %v1011 = vsel %vm1010, %v551, 0.0
          %1012 = vadd.xlane.f32.xlu0 %v1011
          %v1013 = vpop.xlane.xlu0 %1012
          %v1014 = vsel %vm1010, %v552, 0.0
          %1015 = vadd.xlane.f32.xlu0 %v1014
          %v1016 = vpop.xlane.xlu0 %1015
          %v1017 = vmax.f32 %v1013, 1.0
          %v1018 = vmax.f32 %v1016, 1.0
          %v1019 = vlaneseq
          %v1020 = vshrl.u32 %v1019, 7
          %v1021 = vsub.s32 0, %v1020
          %v1022 = vrot.slane %v551, %v1021
          %1024 = vbcast.lane.b32.xlu0 %v1022, 256
          %v1025 = vpop.permute.xlu0 %1024
          %s1027 = sor.u32 256, 8
          %1028 = vbcast.lane.b32.xlu0 %v1022, %s1027
          %v1029 = vpop.permute.xlu0 %1028
          %v1030 = vlaneseq
          %v1031 = vshrl.u32 %v1030, 7
          %v1032 = vsub.s32 1, %v1031
          %v1033 = vrot.slane %v551, %v1032
          %1035 = vbcast.lane.b32.xlu0 %v1033, 256
          %v1036 = vpop.permute.xlu0 %1035
          %s1038 = sor.u32 256, 8
          %1039 = vbcast.lane.b32.xlu0 %v1033, %s1038
          %v1040 = vpop.permute.xlu0 %1039
          %v1041 = vlaneseq
          %v1042 = vshrl.u32 %v1041, 7
          %v1043 = vsub.s32 2, %v1042
          %v1044 = vrot.slane %v551, %v1043
          %1046 = vbcast.lane.b32.xlu0 %v1044, 256
          %v1047 = vpop.permute.xlu0 %1046
          %s1049 = sor.u32 256, 8
          %1050 = vbcast.lane.b32.xlu0 %v1044, %s1049
          %v1051 = vpop.permute.xlu0 %1050
          %v1052 = vlaneseq
          %v1053 = vshrl.u32 %v1052, 7
          %v1054 = vsub.s32 3, %v1053
          %v1055 = vrot.slane %v551, %v1054
          %1057 = vbcast.lane.b32.xlu0 %v1055, 256
          %v1058 = vpop.permute.xlu0 %1057
          %s1060 = sor.u32 256, 8
          %1061 = vbcast.lane.b32.xlu0 %v1055, %s1060
          %v1062 = vpop.permute.xlu0 %1061
          %v1063 = vlaneseq
          %v1064 = vshrl.u32 %v1063, 7
          %v1065 = vsub.s32 4, %v1064
          %v1066 = vrot.slane %v551, %v1065
          %1068 = vbcast.lane.b32.xlu0 %v1066, 256
          %v1069 = vpop.permute.xlu0 %1068
          %s1071 = sor.u32 256, 8
          %1072 = vbcast.lane.b32.xlu0 %v1066, %s1071
          %v1073 = vpop.permute.xlu0 %1072
          %v1074 = vlaneseq
          %v1075 = vshrl.u32 %v1074, 7
          %v1076 = vsub.s32 5, %v1075
          %v1077 = vrot.slane %v551, %v1076
          %1079 = vbcast.lane.b32.xlu0 %v1077, 256
          %v1080 = vpop.permute.xlu0 %1079
          %s1082 = sor.u32 256, 8
          %1083 = vbcast.lane.b32.xlu0 %v1077, %s1082
          %v1084 = vpop.permute.xlu0 %1083
          %v1085 = vlaneseq
          %v1086 = vshrl.u32 %v1085, 7
          %v1087 = vsub.s32 6, %v1086
          %v1088 = vrot.slane %v551, %v1087
          %1090 = vbcast.lane.b32.xlu0 %v1088, 256
          %v1091 = vpop.permute.xlu0 %1090
          %s1093 = sor.u32 256, 8
          %1094 = vbcast.lane.b32.xlu0 %v1088, %s1093
          %v1095 = vpop.permute.xlu0 %1094
          %v1096 = vlaneseq
          %v1097 = vshrl.u32 %v1096, 7
          %v1098 = vsub.s32 7, %v1097
          %v1099 = vrot.slane %v551, %v1098
          %1101 = vbcast.lane.b32.xlu0 %v1099, 256
          %v1102 = vpop.permute.xlu0 %1101
          %s1104 = sor.u32 256, 8
          %1105 = vbcast.lane.b32.xlu0 %v1099, %s1104
          %v1106 = vpop.permute.xlu0 %1105
          %v1107 = vlaneseq
          %v1108 = vshrl.u32 %v1107, 7
          %v1109 = vsub.s32 0, %v1108
          %v1110 = vrot.slane %v552, %v1109
          %1112 = vbcast.lane.b32.xlu0 %v1110, 256
          %v1113 = vpop.permute.xlu0 %1112
          %s1115 = sor.u32 256, 8
          %1116 = vbcast.lane.b32.xlu0 %v1110, %s1115
          %v1117 = vpop.permute.xlu0 %1116
          %v1118 = vlaneseq
          %v1119 = vshrl.u32 %v1118, 7
          %v1120 = vsub.s32 1, %v1119
          %v1121 = vrot.slane %v552, %v1120
          %1123 = vbcast.lane.b32.xlu0 %v1121, 256
          %v1124 = vpop.permute.xlu0 %1123
          %s1126 = sor.u32 256, 8
          %1127 = vbcast.lane.b32.xlu0 %v1121, %s1126
          %v1128 = vpop.permute.xlu0 %1127
          %v1129 = vlaneseq
          %v1130 = vshrl.u32 %v1129, 7
          %v1131 = vsub.s32 2, %v1130
          %v1132 = vrot.slane %v552, %v1131
          %1134 = vbcast.lane.b32.xlu0 %v1132, 256
          %v1135 = vpop.permute.xlu0 %1134
          %s1137 = sor.u32 256, 8
          %1138 = vbcast.lane.b32.xlu0 %v1132, %s1137
          %v1139 = vpop.permute.xlu0 %1138
          %v1140 = vlaneseq
          %v1141 = vshrl.u32 %v1140, 7
          %v1142 = vsub.s32 3, %v1141
          %v1143 = vrot.slane %v552, %v1142
          %1145 = vbcast.lane.b32.xlu0 %v1143, 256
          %v1146 = vpop.permute.xlu0 %1145
          %s1148 = sor.u32 256, 8
          %1149 = vbcast.lane.b32.xlu0 %v1143, %s1148
          %v1150 = vpop.permute.xlu0 %1149
          %v1151 = vlaneseq
          %v1152 = vshrl.u32 %v1151, 7
          %v1153 = vsub.s32 4, %v1152
          %v1154 = vrot.slane %v552, %v1153
          %1156 = vbcast.lane.b32.xlu0 %v1154, 256
          %v1157 = vpop.permute.xlu0 %1156
          %s1159 = sor.u32 256, 8
          %1160 = vbcast.lane.b32.xlu0 %v1154, %s1159
          %v1161 = vpop.permute.xlu0 %1160
          %v1162 = vlaneseq
          %v1163 = vshrl.u32 %v1162, 7
          %v1164 = vsub.s32 5, %v1163
          %v1165 = vrot.slane %v552, %v1164
          %1167 = vbcast.lane.b32.xlu0 %v1165, 256
          %v1168 = vpop.permute.xlu0 %1167
          %s1170 = sor.u32 256, 8
          %1171 = vbcast.lane.b32.xlu0 %v1165, %s1170
          %v1172 = vpop.permute.xlu0 %1171
          %v1173 = vlaneseq
          %v1174 = vshrl.u32 %v1173, 7
          %v1175 = vsub.s32 6, %v1174
          %v1176 = vrot.slane %v552, %v1175
          %1178 = vbcast.lane.b32.xlu0 %v1176, 256
          %v1179 = vpop.permute.xlu0 %1178
          %s1181 = sor.u32 256, 8
          %1182 = vbcast.lane.b32.xlu0 %v1176, %s1181
          %v1183 = vpop.permute.xlu0 %1182
          %v1184 = vlaneseq
          %v1185 = vshrl.u32 %v1184, 7
          %v1186 = vsub.s32 7, %v1185
          %v1187 = vrot.slane %v552, %v1186
          %1189 = vbcast.lane.b32.xlu0 %v1187, 256
          %v1190 = vpop.permute.xlu0 %1189
          %s1192 = sor.u32 256, 8
          %1193 = vbcast.lane.b32.xlu0 %v1187, %s1192
          %v1194 = vpop.permute.xlu0 %1193
          %v1195 = vmul.f32 %v978, %v1025
          %v1196 = vmul.f32 %v979, %v1029
          %v1197 = vmul.f32 %v980, %v1036
          %v1198 = vmul.f32 %v981, %v1040
          %v1199 = vmul.f32 %v982, %v1047
          %v1200 = vmul.f32 %v983, %v1051
          %v1201 = vmul.f32 %v984, %v1058
          %v1202 = vmul.f32 %v985, %v1062
          %v1203 = vmul.f32 %v986, %v1069
          %v1204 = vmul.f32 %v987, %v1073
          %v1205 = vmul.f32 %v988, %v1080
          %v1206 = vmul.f32 %v989, %v1084
          %v1207 = vmul.f32 %v990, %v1091
          %v1208 = vmul.f32 %v991, %v1095
          %v1209 = vmul.f32 %v992, %v1102
          %v1210 = vmul.f32 %v993, %v1106
          %v1211 = vmul.f32 %v994, %v1113
          %v1212 = vmul.f32 %v995, %v1117
          %v1213 = vmul.f32 %v996, %v1124
          %v1214 = vmul.f32 %v997, %v1128
          %v1215 = vmul.f32 %v998, %v1135
          %v1216 = vmul.f32 %v999, %v1139
          %v1217 = vmul.f32 %v1000, %v1146
          %v1218 = vmul.f32 %v1001, %v1150
          %v1219 = vmul.f32 %v1002, %v1157
          %v1220 = vmul.f32 %v1003, %v1161
          %v1221 = vmul.f32 %v1004, %v1168
          %v1222 = vmul.f32 %v1005, %v1172
          %v1223 = vmul.f32 %v1006, %v1179
          %v1224 = vmul.f32 %v1007, %v1183
          %v1225 = vmul.f32 %v1008, %v1190
          %v1226 = vmul.f32 %v1009, %v1194
          %v1227 = vadd.f32 %v1195, %v1196
          %v1228 = vrot.slane %v1227, 4
          %v1229 = vadd.f32 %v1227, %v1228
          %v1230 = vrot.slane %v1229, 2
          %v1231 = vadd.f32 %v1229, %v1230
          %v1232 = vrot.slane %v1231, 1
          %v1233 = vadd.f32 %v1231, %v1232
          %v1234 = vadd.f32 %v1197, %v1198
          %v1235 = vrot.slane %v1234, 4
          %v1236 = vadd.f32 %v1234, %v1235
          %v1237 = vrot.slane %v1236, 2
          %v1238 = vadd.f32 %v1236, %v1237
          %v1239 = vrot.slane %v1238, 1
          %v1240 = vadd.f32 %v1238, %v1239
          %v1241 = vadd.f32 %v1199, %v1200
          %v1242 = vrot.slane %v1241, 4
          %v1243 = vadd.f32 %v1241, %v1242
          %v1244 = vrot.slane %v1243, 2
          %v1245 = vadd.f32 %v1243, %v1244
          %v1246 = vrot.slane %v1245, 1
          %v1247 = vadd.f32 %v1245, %v1246
          %v1248 = vadd.f32 %v1201, %v1202
          %v1249 = vrot.slane %v1248, 4
          %v1250 = vadd.f32 %v1248, %v1249
          %v1251 = vrot.slane %v1250, 2
          %v1252 = vadd.f32 %v1250, %v1251
          %v1253 = vrot.slane %v1252, 1
          %v1254 = vadd.f32 %v1252, %v1253
          %v1255 = vadd.f32 %v1203, %v1204
          %v1256 = vrot.slane %v1255, 4
          %v1257 = vadd.f32 %v1255, %v1256
          %v1258 = vrot.slane %v1257, 2
          %v1259 = vadd.f32 %v1257, %v1258
          %v1260 = vrot.slane %v1259, 1
          %v1261 = vadd.f32 %v1259, %v1260
          %v1262 = vadd.f32 %v1205, %v1206
          %v1263 = vrot.slane %v1262, 4
          %v1264 = vadd.f32 %v1262, %v1263
          %v1265 = vrot.slane %v1264, 2
          %v1266 = vadd.f32 %v1264, %v1265
          %v1267 = vrot.slane %v1266, 1
          %v1268 = vadd.f32 %v1266, %v1267
          %v1269 = vadd.f32 %v1207, %v1208
          %v1270 = vrot.slane %v1269, 4
          %v1271 = vadd.f32 %v1269, %v1270
          %v1272 = vrot.slane %v1271, 2
          %v1273 = vadd.f32 %v1271, %v1272
          %v1274 = vrot.slane %v1273, 1
          %v1275 = vadd.f32 %v1273, %v1274
          %v1276 = vadd.f32 %v1209, %v1210
          %v1277 = vrot.slane %v1276, 4
          %v1278 = vadd.f32 %v1276, %v1277
          %v1279 = vrot.slane %v1278, 2
          %v1280 = vadd.f32 %v1278, %v1279
          %v1281 = vrot.slane %v1280, 1
          %v1282 = vadd.f32 %v1280, %v1281
          %v1283 = vadd.f32 %v1211, %v1212
          %v1284 = vrot.slane %v1283, 4
          %v1285 = vadd.f32 %v1283, %v1284
          %v1286 = vrot.slane %v1285, 2
          %v1287 = vadd.f32 %v1285, %v1286
          %v1288 = vrot.slane %v1287, 1
          %v1289 = vadd.f32 %v1287, %v1288
          %v1290 = vadd.f32 %v1213, %v1214
          %v1291 = vrot.slane %v1290, 4
          %v1292 = vadd.f32 %v1290, %v1291
          %v1293 = vrot.slane %v1292, 2
          %v1294 = vadd.f32 %v1292, %v1293
          %v1295 = vrot.slane %v1294, 1
          %v1296 = vadd.f32 %v1294, %v1295
          %v1297 = vadd.f32 %v1215, %v1216
          %v1298 = vrot.slane %v1297, 4
          %v1299 = vadd.f32 %v1297, %v1298
          %v1300 = vrot.slane %v1299, 2
          %v1301 = vadd.f32 %v1299, %v1300
          %v1302 = vrot.slane %v1301, 1
          %v1303 = vadd.f32 %v1301, %v1302
          %v1304 = vadd.f32 %v1217, %v1218
          %v1305 = vrot.slane %v1304, 4
          %v1306 = vadd.f32 %v1304, %v1305
          %v1307 = vrot.slane %v1306, 2
          %v1308 = vadd.f32 %v1306, %v1307
          %v1309 = vrot.slane %v1308, 1
          %v1310 = vadd.f32 %v1308, %v1309
          %v1311 = vadd.f32 %v1219, %v1220
          %v1312 = vrot.slane %v1311, 4
          %v1313 = vadd.f32 %v1311, %v1312
          %v1314 = vrot.slane %v1313, 2
          %v1315 = vadd.f32 %v1313, %v1314
          %v1316 = vrot.slane %v1315, 1
          %v1317 = vadd.f32 %v1315, %v1316
          %v1318 = vadd.f32 %v1221, %v1222
          %v1319 = vrot.slane %v1318, 4
          %v1320 = vadd.f32 %v1318, %v1319
          %v1321 = vrot.slane %v1320, 2
          %v1322 = vadd.f32 %v1320, %v1321
          %v1323 = vrot.slane %v1322, 1
          %v1324 = vadd.f32 %v1322, %v1323
          %v1325 = vadd.f32 %v1223, %v1224
          %v1326 = vrot.slane %v1325, 4
          %v1327 = vadd.f32 %v1325, %v1326
          %v1328 = vrot.slane %v1327, 2
          %v1329 = vadd.f32 %v1327, %v1328
          %v1330 = vrot.slane %v1329, 1
          %v1331 = vadd.f32 %v1329, %v1330
          %v1332 = vadd.f32 %v1225, %v1226
          %v1333 = vrot.slane %v1332, 4
          %v1334 = vadd.f32 %v1332, %v1333
          %v1335 = vrot.slane %v1334, 2
          %v1336 = vadd.f32 %v1334, %v1335
          %v1337 = vrot.slane %v1336, 1
          %v1338 = vadd.f32 %v1336, %v1337
          %v1341 = vrot.slane %v1017, 1
          %v1342 = vrot.slane %v1017, 2
          %v1343 = vrot.slane %v1017, 3
          %v1344 = vrot.slane %v1017, 4
          %v1345 = vrot.slane %v1017, 5
          %v1346 = vrot.slane %v1017, 6
          %v1347 = vrot.slane %v1017, 7
          %v1348 = vrot.slane %v1018, 1
          %v1349 = vrot.slane %v1018, 2
          %v1350 = vrot.slane %v1018, 3
          %v1351 = vrot.slane %v1018, 4
          %v1352 = vrot.slane %v1018, 5
          %v1353 = vrot.slane %v1018, 6
          %v1354 = vrot.slane %v1018, 7
          %v1371 = vrcp.pop %v1017
          %v1372 = vmul.f32 %v1233, %v1371
          %v1373 = vrcp.pop %v1341
          %v1374 = vmul.f32 %v1240, %v1373
          %v1375 = vrcp.pop %v1342
          %v1376 = vmul.f32 %v1247, %v1375
          %v1377 = vrcp.pop %v1343
          %v1378 = vmul.f32 %v1254, %v1377
          %v1379 = vrcp.pop %v1344
          %v1380 = vmul.f32 %v1261, %v1379
          %v1381 = vrcp.pop %v1345
          %v1382 = vmul.f32 %v1268, %v1381
          %v1383 = vrcp.pop %v1346
          %v1384 = vmul.f32 %v1275, %v1383
          %v1385 = vrcp.pop %v1347
          %v1386 = vmul.f32 %v1282, %v1385
          %v1387 = vrcp.pop %v1018
          %v1388 = vmul.f32 %v1289, %v1387
          %v1389 = vrcp.pop %v1348
          %v1390 = vmul.f32 %v1296, %v1389
          %v1391 = vrcp.pop %v1349
          %v1392 = vmul.f32 %v1303, %v1391
          %v1393 = vrcp.pop %v1350
          %v1394 = vmul.f32 %v1310, %v1393
          %v1395 = vrcp.pop %v1351
          %v1396 = vmul.f32 %v1317, %v1395
          %v1397 = vrcp.pop %v1352
          %v1398 = vmul.f32 %v1324, %v1397
          %v1399 = vrcp.pop %v1353
          %v1400 = vmul.f32 %v1331, %v1399
          %v1401 = vrcp.pop %v1354
          %v1402 = vmul.f32 %v1338, %v1401
          %v1403 = vpack.c.bf16 %v1372, %v1372
          %v1404 = vpack.c.bf16 %v1374, %v1374
          %v1405 = vpack.c.bf16 %v1376, %v1376
          %v1406 = vpack.c.bf16 %v1378, %v1378
          %v1407 = vpack.c.bf16 %v1380, %v1380
          %v1408 = vpack.c.bf16 %v1382, %v1382
          %v1409 = vpack.c.bf16 %v1384, %v1384
          %v1410 = vpack.c.bf16 %v1386, %v1386
          %v1411 = vpack.c.bf16 %v1388, %v1388
          %v1412 = vpack.c.bf16 %v1390, %v1390
          %v1413 = vpack.c.bf16 %v1392, %v1392
          %v1414 = vpack.c.bf16 %v1394, %v1394
          %v1415 = vpack.c.bf16 %v1396, %v1396
          %v1416 = vpack.c.bf16 %v1398, %v1398
          %v1417 = vpack.c.bf16 %v1400, %v1400
          %v1418 = vpack.c.bf16 %v1402, %v1402
          %v1420 = vpack.i.b16 %v1403, %v1403
          %v1422 = vlaneseq
          %v1423 = vshrl.u32 %v1422, 7
          %v1424 = vsub.s32 0, %v1423
          %v1425 = vrot.slane %v1420, %v1424
          %v1427 = vpack.i.b16 %v1404, %v1404
          %v1429 = vlaneseq
          %v1430 = vshrl.u32 %v1429, 7
          %v1431 = vsub.s32 0, %v1430
          %v1432 = vrot.slane %v1427, %v1431
          %v1434 = vpack.i.b16 %v1405, %v1405
          %v1436 = vlaneseq
          %v1437 = vshrl.u32 %v1436, 7
          %v1438 = vsub.s32 0, %v1437
          %v1439 = vrot.slane %v1434, %v1438
          %v1441 = vpack.i.b16 %v1406, %v1406
          %v1443 = vlaneseq
          %v1444 = vshrl.u32 %v1443, 7
          %v1445 = vsub.s32 0, %v1444
          %v1446 = vrot.slane %v1441, %v1445
          %v1448 = vpack.i.b16 %v1407, %v1407
          %v1450 = vlaneseq
          %v1451 = vshrl.u32 %v1450, 7
          %v1452 = vsub.s32 0, %v1451
          %v1453 = vrot.slane %v1448, %v1452
          %v1455 = vpack.i.b16 %v1408, %v1408
          %v1457 = vlaneseq
          %v1458 = vshrl.u32 %v1457, 7
          %v1459 = vsub.s32 0, %v1458
          %v1460 = vrot.slane %v1455, %v1459
          %v1462 = vpack.i.b16 %v1409, %v1409
          %v1464 = vlaneseq
          %v1465 = vshrl.u32 %v1464, 7
          %v1466 = vsub.s32 0, %v1465
          %v1467 = vrot.slane %v1462, %v1466
          %v1469 = vpack.i.b16 %v1410, %v1410
          %v1471 = vlaneseq
          %v1472 = vshrl.u32 %v1471, 7
          %v1473 = vsub.s32 0, %v1472
          %v1474 = vrot.slane %v1469, %v1473
          %v1476 = vpack.i.b16 %v1411, %v1411
          %v1478 = vlaneseq
          %v1479 = vshrl.u32 %v1478, 7
          %v1480 = vsub.s32 0, %v1479
          %v1481 = vrot.slane %v1476, %v1480
          %v1483 = vpack.i.b16 %v1412, %v1412
          %v1485 = vlaneseq
          %v1486 = vshrl.u32 %v1485, 7
          %v1487 = vsub.s32 0, %v1486
          %v1488 = vrot.slane %v1483, %v1487
          %v1490 = vpack.i.b16 %v1413, %v1413
          %v1492 = vlaneseq
          %v1493 = vshrl.u32 %v1492, 7
          %v1494 = vsub.s32 0, %v1493
          %v1495 = vrot.slane %v1490, %v1494
          %v1497 = vpack.i.b16 %v1414, %v1414
          %v1499 = vlaneseq
          %v1500 = vshrl.u32 %v1499, 7
          %v1501 = vsub.s32 0, %v1500
          %v1502 = vrot.slane %v1497, %v1501
          %v1504 = vpack.i.b16 %v1415, %v1415
          %v1506 = vlaneseq
          %v1507 = vshrl.u32 %v1506, 7
          %v1508 = vsub.s32 0, %v1507
          %v1509 = vrot.slane %v1504, %v1508
          %v1511 = vpack.i.b16 %v1416, %v1416
          %v1513 = vlaneseq
          %v1514 = vshrl.u32 %v1513, 7
          %v1515 = vsub.s32 0, %v1514
          %v1516 = vrot.slane %v1511, %v1515
          %v1518 = vpack.i.b16 %v1417, %v1417
          %v1520 = vlaneseq
          %v1521 = vshrl.u32 %v1520, 7
          %v1522 = vsub.s32 0, %v1521
          %v1523 = vrot.slane %v1518, %v1522
          %v1525 = vpack.i.b16 %v1418, %v1418
          %v1527 = vlaneseq
          %v1528 = vshrl.u32 %v1527, 7
          %v1529 = vsub.s32 0, %v1528
          %v1530 = vrot.slane %v1525, %v1529
          %v1563 = vunpack.c.l.b16 %v585
          %v1564 = vunpack.c.l.b16 %v586
          %v1565 = vunpack.c.l.b16 %v587
          %v1566 = vunpack.c.l.b16 %v588
          %v1567 = vunpack.c.l.b16 %v589
          %v1568 = vunpack.c.l.b16 %v590
          %v1569 = vunpack.c.l.b16 %v591
          %v1570 = vunpack.c.l.b16 %v592
          %v1571 = vunpack.c.l.b16 %v593
          %v1572 = vunpack.c.l.b16 %v594
          %v1573 = vunpack.c.l.b16 %v595
          %v1574 = vunpack.c.l.b16 %v596
          %v1575 = vunpack.c.l.b16 %v597
          %v1576 = vunpack.c.l.b16 %v598
          %v1577 = vunpack.c.l.b16 %v599
          %v1578 = vunpack.c.l.b16 %v600
          %v1579 = vunpack.c.l.b16 %v601
          %v1580 = vunpack.c.l.b16 %v602
          %v1581 = vunpack.c.l.b16 %v603
          %v1582 = vunpack.c.l.b16 %v604
          %v1583 = vunpack.c.l.b16 %v605
          %v1584 = vunpack.c.l.b16 %v606
          %v1585 = vunpack.c.l.b16 %v607
          %v1586 = vunpack.c.l.b16 %v608
          %v1587 = vunpack.c.l.b16 %v609
          %v1588 = vunpack.c.l.b16 %v610
          %v1589 = vunpack.c.l.b16 %v611
          %v1590 = vunpack.c.l.b16 %v612
          %v1591 = vunpack.c.l.b16 %v613
          %v1592 = vunpack.c.l.b16 %v614
          %v1593 = vunpack.c.l.b16 %v615
          %v1594 = vunpack.c.l.b16 %v616
          %v1595 = vpack.c.b16 %v1564, %v1563
          %v1596 = vpack.c.b16 %v1566, %v1565
          %v1597 = vpack.c.b16 %v1568, %v1567
          %v1598 = vpack.c.b16 %v1570, %v1569
          %v1599 = vpack.c.b16 %v1572, %v1571
          %v1600 = vpack.c.b16 %v1574, %v1573
          %v1601 = vpack.c.b16 %v1576, %v1575
          %v1602 = vpack.c.b16 %v1578, %v1577
          %v1603 = vpack.c.b16 %v1580, %v1579
          %v1604 = vpack.c.b16 %v1582, %v1581
          %v1605 = vpack.c.b16 %v1584, %v1583
          %v1606 = vpack.c.b16 %v1586, %v1585
          %v1607 = vpack.c.b16 %v1588, %v1587
          %v1608 = vpack.c.b16 %v1590, %v1589
          %v1609 = vpack.c.b16 %v1592, %v1591
          %v1610 = vpack.c.b16 %v1594, %v1593
          %v1628 = vlaneseq
          %v1629 = vshrl.u32 %v1628, 7
          %v1630 = vsub.s32 0, %v1629
          %v1631 = vrot.slane %v666, %v1630
          %v1665 = vunpack.c.l.b16 %v634
          %v1666 = vunpack.c.l.b16 %v635
          %v1667 = vunpack.c.l.b16 %v636
          %v1668 = vunpack.c.l.b16 %v637
          %v1669 = vunpack.c.l.b16 %v638
          %v1670 = vunpack.c.l.b16 %v639
          %v1671 = vunpack.c.l.b16 %v640
          %v1672 = vunpack.c.l.b16 %v641
          %v1673 = vunpack.c.l.b16 %v642
          %v1674 = vunpack.c.l.b16 %v643
          %v1675 = vunpack.c.l.b16 %v644
          %v1676 = vunpack.c.l.b16 %v645
          %v1677 = vunpack.c.l.b16 %v646
          %v1678 = vunpack.c.l.b16 %v647
          %v1679 = vunpack.c.l.b16 %v648
          %v1680 = vunpack.c.l.b16 %v649
          %v1681 = vunpack.c.l.b16 %v650
          %v1682 = vunpack.c.l.b16 %v651
          %v1683 = vunpack.c.l.b16 %v652
          %v1684 = vunpack.c.l.b16 %v653
          %v1685 = vunpack.c.l.b16 %v654
          %v1686 = vunpack.c.l.b16 %v655
          %v1687 = vunpack.c.l.b16 %v656
          %v1688 = vunpack.c.l.b16 %v657
          %v1689 = vunpack.c.l.b16 %v658
          %v1690 = vunpack.c.l.b16 %v659
          %v1691 = vunpack.c.l.b16 %v660
          %v1692 = vunpack.c.l.b16 %v661
          %v1693 = vunpack.c.l.b16 %v662
          %v1694 = vunpack.c.l.b16 %v663
          %v1695 = vunpack.c.l.b16 %v664
          %v1696 = vunpack.c.l.b16 %v665
          %v1697 = vpack.c.b16 %v1666, %v1665
          %v1698 = vpack.c.b16 %v1668, %v1667
          %v1699 = vpack.c.b16 %v1670, %v1669
          %v1700 = vpack.c.b16 %v1672, %v1671
          %v1701 = vpack.c.b16 %v1674, %v1673
          %v1702 = vpack.c.b16 %v1676, %v1675
          %v1703 = vpack.c.b16 %v1678, %v1677
          %v1704 = vpack.c.b16 %v1680, %v1679
          %v1705 = vpack.c.b16 %v1682, %v1681
          %v1706 = vpack.c.b16 %v1684, %v1683
          %v1707 = vpack.c.b16 %v1686, %v1685
          %v1708 = vpack.c.b16 %v1688, %v1687
          %v1709 = vpack.c.b16 %v1690, %v1689
          %v1710 = vpack.c.b16 %v1692, %v1691
          %v1711 = vpack.c.b16 %v1694, %v1693
          %v1712 = vpack.c.b16 %v1696, %v1695
          %1729 = vmatprep.subr.bf16.mxu0 0
          %1730 = vmatpush1.bf16.msra.mxu0 %v1697
          %1731 = vmatprep.subr.bf16.mxu0 0
          %1732 = vmatpush1.bf16.msra.mxu0 %v1698
          %1733 = vmatprep.subr.bf16.mxu0 0
          %1734 = vmatpush1.bf16.msra.mxu0 %v1699
          %1735 = vmatprep.subr.bf16.mxu0 0
          %1736 = vmatpush1.bf16.msra.mxu0 %v1700
          %1737 = vmatprep.subr.bf16.mxu0 0
          %1738 = vmatpush1.bf16.msra.mxu0 %v1701
          %1739 = vmatprep.subr.bf16.mxu0 0
          %1740 = vmatpush1.bf16.msra.mxu0 %v1702
          %1741 = vmatprep.subr.bf16.mxu0 0
          %1742 = vmatpush1.bf16.msra.mxu0 %v1703
          %1743 = vmatprep.subr.bf16.mxu0 0
          %1744 = vmatpush1.bf16.msra.mxu0 %v1704
          %1745 = vmatprep.subr.bf16.mxu0 0
          %1746 = vmatpush1.bf16.msra.mxu0 %v1705
          %1747 = vmatprep.subr.bf16.mxu0 0
          %1748 = vmatpush1.bf16.msra.mxu0 %v1706
          %1749 = vmatprep.subr.bf16.mxu0 0
          %1750 = vmatpush1.bf16.msra.mxu0 %v1707
          %1751 = vmatprep.subr.bf16.mxu0 0
          %1752 = vmatpush1.bf16.msra.mxu0 %v1708
          %1753 = vmatprep.subr.bf16.mxu0 0
          %1754 = vmatpush1.bf16.msra.mxu0 %v1709
          %1755 = vmatprep.subr.bf16.mxu0 0
          %1756 = vmatpush1.bf16.msra.mxu0 %v1710
          %1757 = vmatprep.subr.bf16.mxu0 0
          %1758 = vmatpush1.bf16.msra.mxu0 %v1711
          %1759 = vmatprep.subr.bf16.mxu0 0
          %1760 = vmatpush1.bf16.msra.mxu0 %v1712
          %1761 = vmatprep.mubr.bf16.mxu0 %v1425
          %1762 = vmatmul.mubr.bf16.gmra.mrb[0].mxu0 %v1595
          %v1763 = vpop.f32.mrb[0].mxu0
          %v1764 = vadd.f32 %v1631, %v1763
          %v1765 = vpop.f32.mrb[0].mxu0
          %v1766 = vpop.f32.mrb[0].mxu0
          %v1767 = vadd.f32 %v1631, %v1766
          %v1768 = vpop.f32.mrb[0].mxu0
          %1769 = vmatprep.mubr.bf16.mxu0 %v1432
          %1770 = vmatmul.mubr.bf16.gmra.mrb[0].mxu0 %v1596
          %v1771 = vpop.f32.mrb[0].mxu0
          %v1772 = vadd.f32 %v1631, %v1771
          %v1773 = vpop.f32.mrb[0].mxu0
          %v1774 = vpop.f32.mrb[0].mxu0
          %v1775 = vadd.f32 %v1631, %v1774
          %v1776 = vpop.f32.mrb[0].mxu0
          %1777 = vmatprep.mubr.bf16.mxu0 %v1439
          %1778 = vmatmul.mubr.bf16.gmra.mrb[0].mxu0 %v1597
          %v1779 = vpop.f32.mrb[0].mxu0
          %v1780 = vadd.f32 %v1631, %v1779
          %v1781 = vpop.f32.mrb[0].mxu0
          %v1782 = vpop.f32.mrb[0].mxu0
          %v1783 = vadd.f32 %v1631, %v1782
          %v1784 = vpop.f32.mrb[0].mxu0
          %1785 = vmatprep.mubr.bf16.mxu0 %v1446
          %1786 = vmatmul.mubr.bf16.gmra.mrb[0].mxu0 %v1598
          %v1787 = vpop.f32.mrb[0].mxu0
          %v1788 = vadd.f32 %v1631, %v1787
          %v1789 = vpop.f32.mrb[0].mxu0
          %v1790 = vpop.f32.mrb[0].mxu0
          %v1791 = vadd.f32 %v1631, %v1790
          %v1792 = vpop.f32.mrb[0].mxu0
          %1793 = vmatprep.mubr.bf16.mxu0 %v1453
          %1794 = vmatmul.mubr.bf16.gmra.mrb[0].mxu0 %v1599
          %v1795 = vpop.f32.mrb[0].mxu0
          %v1796 = vadd.f32 %v1631, %v1795
          %v1797 = vpop.f32.mrb[0].mxu0
          %v1798 = vpop.f32.mrb[0].mxu0
          %v1799 = vadd.f32 %v1631, %v1798
          %v1800 = vpop.f32.mrb[0].mxu0
          %1801 = vmatprep.mubr.bf16.mxu0 %v1460
          %1802 = vmatmul.mubr.bf16.gmra.mrb[0].mxu0 %v1600
          %v1803 = vpop.f32.mrb[0].mxu0
          %v1804 = vadd.f32 %v1631, %v1803
          %v1805 = vpop.f32.mrb[0].mxu0
          %v1806 = vpop.f32.mrb[0].mxu0
          %v1807 = vadd.f32 %v1631, %v1806
          %v1808 = vpop.f32.mrb[0].mxu0
          %1809 = vmatprep.mubr.bf16.mxu0 %v1467
          %1810 = vmatmul.mubr.bf16.gmra.mrb[0].mxu0 %v1601
          %v1811 = vpop.f32.mrb[0].mxu0
          %v1812 = vadd.f32 %v1631, %v1811
          %v1813 = vpop.f32.mrb[0].mxu0
          %v1814 = vpop.f32.mrb[0].mxu0
          %v1815 = vadd.f32 %v1631, %v1814
          %v1816 = vpop.f32.mrb[0].mxu0
          %1817 = vmatprep.mubr.bf16.mxu0 %v1474
          %1818 = vmatmul.mubr.bf16.gmra.mrb[0].mxu0 %v1602
          %v1819 = vpop.f32.mrb[0].mxu0
          %v1820 = vadd.f32 %v1631, %v1819
          %v1821 = vpop.f32.mrb[0].mxu0
          %v1822 = vpop.f32.mrb[0].mxu0
          %v1823 = vadd.f32 %v1631, %v1822
          %v1824 = vpop.f32.mrb[0].mxu0
          %1825 = vmatprep.mubr.bf16.mxu0 %v1481
          %1826 = vmatmul.mubr.bf16.gmra.mrb[0].mxu0 %v1603
          %v1827 = vpop.f32.mrb[0].mxu0
          %v1828 = vadd.f32 %v1631, %v1827
          %v1829 = vpop.f32.mrb[0].mxu0
          %v1830 = vpop.f32.mrb[0].mxu0
          %v1831 = vadd.f32 %v1631, %v1830
          %v1832 = vpop.f32.mrb[0].mxu0
          %1833 = vmatprep.mubr.bf16.mxu0 %v1488
          %1834 = vmatmul.mubr.bf16.gmra.mrb[0].mxu0 %v1604
          %v1835 = vpop.f32.mrb[0].mxu0
          %v1836 = vadd.f32 %v1631, %v1835
          %v1837 = vpop.f32.mrb[0].mxu0
          %v1838 = vpop.f32.mrb[0].mxu0
          %v1839 = vadd.f32 %v1631, %v1838
          %v1840 = vpop.f32.mrb[0].mxu0
          %1841 = vmatprep.mubr.bf16.mxu0 %v1495
          %1842 = vmatmul.mubr.bf16.gmra.mrb[0].mxu0 %v1605
          %v1843 = vpop.f32.mrb[0].mxu0
          %v1844 = vadd.f32 %v1631, %v1843
          %v1845 = vpop.f32.mrb[0].mxu0
          %v1846 = vpop.f32.mrb[0].mxu0
          %v1847 = vadd.f32 %v1631, %v1846
          %v1848 = vpop.f32.mrb[0].mxu0
          %1849 = vmatprep.mubr.bf16.mxu0 %v1502
          %1850 = vmatmul.mubr.bf16.gmra.mrb[0].mxu0 %v1606
          %v1851 = vpop.f32.mrb[0].mxu0
          %v1852 = vadd.f32 %v1631, %v1851
          %v1853 = vpop.f32.mrb[0].mxu0
          %v1854 = vpop.f32.mrb[0].mxu0
          %v1855 = vadd.f32 %v1631, %v1854
          %v1856 = vpop.f32.mrb[0].mxu0
          %1857 = vmatprep.mubr.bf16.mxu0 %v1509
          %1858 = vmatmul.mubr.bf16.gmra.mrb[0].mxu0 %v1607
          %v1859 = vpop.f32.mrb[0].mxu0
          %v1860 = vadd.f32 %v1631, %v1859
          %v1861 = vpop.f32.mrb[0].mxu0
          %v1862 = vpop.f32.mrb[0].mxu0
          %v1863 = vadd.f32 %v1631, %v1862
          %v1864 = vpop.f32.mrb[0].mxu0
          %1865 = vmatprep.mubr.bf16.mxu0 %v1516
          %1866 = vmatmul.mubr.bf16.gmra.mrb[0].mxu0 %v1608
          %v1867 = vpop.f32.mrb[0].mxu0
          %v1868 = vadd.f32 %v1631, %v1867
          %v1869 = vpop.f32.mrb[0].mxu0
          %v1870 = vpop.f32.mrb[0].mxu0
          %v1871 = vadd.f32 %v1631, %v1870
          %v1872 = vpop.f32.mrb[0].mxu0
          %1873 = vmatprep.mubr.bf16.mxu0 %v1523
          %1874 = vmatmul.mubr.bf16.gmra.mrb[0].mxu0 %v1609
          %v1875 = vpop.f32.mrb[0].mxu0
          %v1876 = vadd.f32 %v1631, %v1875
          %v1877 = vpop.f32.mrb[0].mxu0
          %v1878 = vpop.f32.mrb[0].mxu0
          %v1879 = vadd.f32 %v1631, %v1878
          %v1880 = vpop.f32.mrb[0].mxu0
          %1881 = vmatprep.mubr.bf16.mxu0 %v1530
          %1882 = vmatmul.mubr.bf16.gmra.mrb[0].mxu0 %v1610
          %v1883 = vpop.f32.mrb[0].mxu0
          %v1884 = vadd.f32 %v1631, %v1883
          %v1885 = vpop.f32.mrb[0].mxu0
          %v1886 = vpop.f32.mrb[0].mxu0
          %v1887 = vadd.f32 %v1631, %v1886
          %v1888 = vpop.f32.mrb[0].mxu0
          %1889 = vdwg.mxu0
          %v1890 = vtanh.pop %v1764
          %v1891 = vtanh.pop %v1767
          %v1892 = vtanh.pop %v1772
          %v1893 = vtanh.pop %v1775
          %v1894 = vtanh.pop %v1780
          %v1895 = vtanh.pop %v1783
          %v1896 = vtanh.pop %v1788
          %v1897 = vtanh.pop %v1791
          %v1898 = vtanh.pop %v1796
          %v1899 = vtanh.pop %v1799
          %v1900 = vtanh.pop %v1804
          %v1901 = vtanh.pop %v1807
          %v1902 = vtanh.pop %v1812
          %v1903 = vtanh.pop %v1815
          %v1904 = vtanh.pop %v1820
          %v1905 = vtanh.pop %v1823
          %v1906 = vtanh.pop %v1828
          %v1907 = vtanh.pop %v1831
          %v1908 = vtanh.pop %v1836
          %v1909 = vtanh.pop %v1839
          %v1910 = vtanh.pop %v1844
          %v1911 = vtanh.pop %v1847
          %v1912 = vtanh.pop %v1852
          %v1913 = vtanh.pop %v1855
          %v1914 = vtanh.pop %v1860
          %v1915 = vtanh.pop %v1863
          %v1916 = vtanh.pop %v1868
          %v1917 = vtanh.pop %v1871
          %v1918 = vtanh.pop %v1876
          %v1919 = vtanh.pop %v1879
          %v1920 = vtanh.pop %v1884
          %v1921 = vtanh.pop %v1887
          %v1922 = vpack.c.bf16 %v1891, %v1890
          %v1923 = vpack.c.bf16 %v1893, %v1892
          %v1924 = vpack.c.bf16 %v1895, %v1894
          %v1925 = vpack.c.bf16 %v1897, %v1896
          %v1926 = vpack.c.bf16 %v1899, %v1898
          %v1927 = vpack.c.bf16 %v1901, %v1900
          %v1928 = vpack.c.bf16 %v1903, %v1902
          %v1929 = vpack.c.bf16 %v1905, %v1904
          %v1930 = vpack.c.bf16 %v1907, %v1906
          %v1931 = vpack.c.bf16 %v1909, %v1908
          %v1932 = vpack.c.bf16 %v1911, %v1910
          %v1933 = vpack.c.bf16 %v1913, %v1912
          %v1934 = vpack.c.bf16 %v1915, %v1914
          %v1935 = vpack.c.bf16 %v1917, %v1916
          %v1936 = vpack.c.bf16 %v1919, %v1918
          %v1937 = vpack.c.bf16 %v1921, %v1920
          %1938 = vst [vmem:[#allocation2] sm:$0xff] %v1922
          %1939 = vst [vmem:[#allocation2 + $0x8] sm:$0xff] %v1923
          %1940 = vst [vmem:[#allocation2 + $0x10] sm:$0xff] %v1924
          %1941 = vst [vmem:[#allocation2 + $0x18] sm:$0xff] %v1925
          %1942 = vst [vmem:[#allocation2 + $0x20] sm:$0xff] %v1926
          %1943 = vst [vmem:[#allocation2 + $0x28] sm:$0xff] %v1927
          %1944 = vst [vmem:[#allocation2 + $0x30] sm:$0xff] %v1928
          %1945 = vst [vmem:[#allocation2 + $0x38] sm:$0xff] %v1929
          %1946 = vst [vmem:[#allocation2 + $0x40] sm:$0xff] %v1930
          %1947 = vst [vmem:[#allocation2 + $0x48] sm:$0xff] %v1931
          %1948 = vst [vmem:[#allocation2 + $0x50] sm:$0xff] %v1932
          %1949 = vst [vmem:[#allocation2 + $0x58] sm:$0xff] %v1933
          %1950 = vst [vmem:[#allocation2 + $0x60] sm:$0xff] %v1934
          %1951 = vst [vmem:[#allocation2 + $0x68] sm:$0xff] %v1935
          %1952 = vst [vmem:[#allocation2 + $0x70] sm:$0xff] %v1936
          %1953 = vst [vmem:[#allocation2 + $0x78] sm:$0xff] %v1937
          %1954 = vst.msk [vmem:[#allocation3] sm:$0xff] %vm1010, -inf
          %1955 = vst.msk [vmem:[#allocation3 + $0x8] sm:$0xff] %vm1010, -inf
          %1956 = vst.msk [vmem:[#allocation4] sm:$0xff] %vm1010, 0.0
          %1957 = vst.msk [vmem:[#allocation4 + $0x8] sm:$0xff] %vm1010, 0.0
          %1958 = vst.msk [vmem:[#allocation5] sm:$0xff] %vm1010, 0.0
          %1959 = vst.msk [vmem:[#allocation5 + $0x8] sm:$0xff] %vm1010, 0.0
        $region80: #{tpu_custom_call.1} parent=59 // pred_fallthru
          _
        %v1960 = vld [vmem:[#allocation2] sm:$0xff]
        %v1961 = vld [vmem:[#allocation2 + $0x8] sm:$0xff]
        %v1962 = vld [vmem:[#allocation2 + $0x10] sm:$0xff]
        %v1963 = vld [vmem:[#allocation2 + $0x18] sm:$0xff]
        %v1964 = vld [vmem:[#allocation2 + $0x20] sm:$0xff]
        %v1965 = vld [vmem:[#allocation2 + $0x28] sm:$0xff]
        %v1966 = vld [vmem:[#allocation2 + $0x30] sm:$0xff]
        %v1967 = vld [vmem:[#allocation2 + $0x38] sm:$0xff]
        %v1968 = vld [vmem:[#allocation2 + $0x40] sm:$0xff]
        %v1969 = vld [vmem:[#allocation2 + $0x48] sm:$0xff]
        %v1970 = vld [vmem:[#allocation2 + $0x50] sm:$0xff]
        %v1971 = vld [vmem:[#allocation2 + $0x58] sm:$0xff]
        %v1972 = vld [vmem:[#allocation2 + $0x60] sm:$0xff]
        %v1973 = vld [vmem:[#allocation2 + $0x68] sm:$0xff]
        %v1974 = vld [vmem:[#allocation2 + $0x70] sm:$0xff]
        %v1975 = vld [vmem:[#allocation2 + $0x78] sm:$0xff]
        %v1976 = vld [vmem:[%s463] sm:$0xf]
        %v1977 = vld [vmem:[%s463 + $0x4] sm:$0xf]
        %v1978 = vld [vmem:[%s463 + $0x8] sm:$0xf]
        %v1979 = vld [vmem:[%s463 + $0xc] sm:$0xf]
        %v1980 = vld [vmem:[%s463 + $0x10] sm:$0xf]
        %v1981 = vld [vmem:[%s463 + $0x14] sm:$0xf]
        %v1982 = vld [vmem:[%s463 + $0x18] sm:$0xf]
        %v1983 = vld [vmem:[%s463 + $0x1c] sm:$0xf]
        %v1984 = vld [vmem:[%s463 + $0x20] sm:$0xf]
        %v1985 = vld [vmem:[%s463 + $0x24] sm:$0xf]
        %v1986 = vld [vmem:[%s463 + $0x28] sm:$0xf]
        %v1987 = vld [vmem:[%s463 + $0x2c] sm:$0xf]
        %v1988 = vld [vmem:[%s463 + $0x30] sm:$0xf]
        %v1989 = vld [vmem:[%s463 + $0x34] sm:$0xf]
        %v1990 = vld [vmem:[%s463 + $0x38] sm:$0xf]
        %v1991 = vld [vmem:[%s463 + $0x3c] sm:$0xf]
        %v1992 = vld [vmem:[%s539] sm:$0x1]
        %v1994 = vlaneseq
        %v1995 = vshrl.u32 %v1994, 7
        %v1996 = vsub.s32 0, %v1995
        %v1997 = vrot.slane %v1992, %v1996
        %v2015 = vunpack.c.l.b16 %v1976
        %v2016 = vunpack.c.l.b16 %v1977
        %v2017 = vunpack.c.l.b16 %v1978
        %v2018 = vunpack.c.l.b16 %v1979
        %v2019 = vunpack.c.l.b16 %v1980
        %v2020 = vunpack.c.l.b16 %v1981
        %v2021 = vunpack.c.l.b16 %v1982
        %v2022 = vunpack.c.l.b16 %v1983
        %v2023 = vunpack.c.l.b16 %v1984
        %v2024 = vunpack.c.l.b16 %v1985
        %v2025 = vunpack.c.l.b16 %v1986
        %v2026 = vunpack.c.l.b16 %v1987
        %v2027 = vunpack.c.l.b16 %v1988
        %v2028 = vunpack.c.l.b16 %v1989
        %v2029 = vunpack.c.l.b16 %v1990
        %v2030 = vunpack.c.l.b16 %v1991
        %v2031 = vpack.c.b16 %v2016, %v2015
        %v2032 = vpack.c.b16 %v2018, %v2017
        %v2033 = vpack.c.b16 %v2020, %v2019
        %v2034 = vpack.c.b16 %v2022, %v2021
        %v2035 = vpack.c.b16 %v2024, %v2023
        %v2036 = vpack.c.b16 %v2026, %v2025
        %v2037 = vpack.c.b16 %v2028, %v2027
        %v2038 = vpack.c.b16 %v2030, %v2029
        %2047 = vmatprep.subr.bf16.mxu0 0
        %2048 = vmatpush1.bf16.msra.mxu0 %v2031
        %2049 = vmatprep.subr.bf16.mxu0 0
        %2050 = vmatpush1.bf16.msra.mxu0 %v2032
        %2051 = vmatprep.subr.bf16.mxu0 0
        %2052 = vmatpush1.bf16.msra.mxu0 %v2033
        %2053 = vmatprep.subr.bf16.mxu0 0
        %2054 = vmatpush1.bf16.msra.mxu0 %v2034
        %2055 = vmatprep.subr.bf16.mxu0 0
        %2056 = vmatpush1.bf16.msra.mxu0 %v2035
        %2057 = vmatprep.subr.bf16.mxu0 0
        %2058 = vmatpush1.bf16.msra.mxu0 %v2036
        %2059 = vmatprep.subr.bf16.mxu0 0
        %2060 = vmatpush1.bf16.msra.mxu0 %v2037
        %2061 = vmatprep.subr.bf16.mxu0 0
        %2062 = vmatpush1.bf16.msra.mxu0 %v2038
        %2063 = vmatprep.subr.bf16.mxu0 0
        %2064 = vmatpush1.bf16.msra.mxu0 0
        %2065 = vmatprep.subr.bf16.mxu0 0
        %2066 = vmatpush1.bf16.msra.mxu0 0
        %2067 = vmatprep.subr.bf16.mxu0 0
        %2068 = vmatpush1.bf16.msra.mxu0 0
        %2069 = vmatprep.subr.bf16.mxu0 0
        %2070 = vmatpush1.bf16.msra.mxu0 0
        %2071 = vmatprep.subr.bf16.mxu0 0
        %2072 = vmatpush1.bf16.msra.mxu0 0
        %2073 = vmatprep.subr.bf16.mxu0 0
        %2074 = vmatpush1.bf16.msra.mxu0 0
        %2075 = vmatprep.subr.bf16.mxu0 0
        %2076 = vmatpush1.bf16.msra.mxu0 0
        %2077 = vmatprep.subr.bf16.mxu0 0
        %2078 = vmatpush1.bf16.msra.mxu0 0
        %2079 = vmatprep.mubr.bf16.mxu0 0
        %2080 = vmatmul.mubr.bf16.gmra.mrb[0].mxu0 %v1960
        %v2081 = vpop.f32.mrb[0].mxu0
        %v2082 = vadd.f32 %v1997, %v2081
        %v2083 = vpop.f32.mrb[0].mxu0
        %v2084 = vpop.f32.mrb[0].mxu0
        %v2085 = vadd.f32 %v1997, %v2084
        %v2086 = vpop.f32.mrb[0].mxu0
        %2087 = vmatprep.mubr.bf16.mxu0 0
        %2088 = vmatmul.mubr.bf16.gmra.mrb[0].mxu0 %v1961
        %v2089 = vpop.f32.mrb[0].mxu0
        %v2090 = vadd.f32 %v1997, %v2089
        %v2091 = vpop.f32.mrb[0].mxu0
        %v2092 = vpop.f32.mrb[0].mxu0
        %v2093 = vadd.f32 %v1997, %v2092
        %v2094 = vpop.f32.mrb[0].mxu0
        %2095 = vmatprep.mubr.bf16.mxu0 0
        %2096 = vmatmul.mubr.bf16.gmra.mrb[0].mxu0 %v1962
        %v2097 = vpop.f32.mrb[0].mxu0
        %v2098 = vadd.f32 %v1997, %v2097
        %v2099 = vpop.f32.mrb[0].mxu0
        %v2100 = vpop.f32.mrb[0].mxu0
        %v2101 = vadd.f32 %v1997, %v2100
        %v2102 = vpop.f32.mrb[0].mxu0
        %2103 = vmatprep.mubr.bf16.mxu0 0
        %2104 = vmatmul.mubr.bf16.gmra.mrb[0].mxu0 %v1963
        %v2105 = vpop.f32.mrb[0].mxu0
        %v2106 = vadd.f32 %v1997, %v2105
        %v2107 = vpop.f32.mrb[0].mxu0
        %v2108 = vpop.f32.mrb[0].mxu0
        %v2109 = vadd.f32 %v1997, %v2108
        %v2110 = vpop.f32.mrb[0].mxu0
        %2111 = vmatprep.mubr.bf16.mxu0 0
        %2112 = vmatmul.mubr.bf16.gmra.mrb[0].mxu0 %v1964
        %v2113 = vpop.f32.mrb[0].mxu0
        %v2114 = vadd.f32 %v1997, %v2113
        %v2115 = vpop.f32.mrb[0].mxu0
        %v2116 = vpop.f32.mrb[0].mxu0
        %v2117 = vadd.f32 %v1997, %v2116
        %v2118 = vpop.f32.mrb[0].mxu0
        %2119 = vmatprep.mubr.bf16.mxu0 0
        %2120 = vmatmul.mubr.bf16.gmra.mrb[0].mxu0 %v1965
        %v2121 = vpop.f32.mrb[0].mxu0
        %v2122 = vadd.f32 %v1997, %v2121
        %v2123 = vpop.f32.mrb[0].mxu0
        %v2124 = vpop.f32.mrb[0].mxu0
        %v2125 = vadd.f32 %v1997, %v2124
        %v2126 = vpop.f32.mrb[0].mxu0
        %2127 = vmatprep.mubr.bf16.mxu0 0
        %2128 = vmatmul.mubr.bf16.gmra.mrb[0].mxu0 %v1966
        %v2129 = vpop.f32.mrb[0].mxu0
        %v2130 = vadd.f32 %v1997, %v2129
        %v2131 = vpop.f32.mrb[0].mxu0
        %v2132 = vpop.f32.mrb[0].mxu0
        %v2133 = vadd.f32 %v1997, %v2132
        %v2134 = vpop.f32.mrb[0].mxu0
        %2135 = vmatprep.mubr.bf16.mxu0 0
        %2136 = vmatmul.mubr.bf16.gmra.mrb[0].mxu0 %v1967
        %v2137 = vpop.f32.mrb[0].mxu0
        %v2138 = vadd.f32 %v1997, %v2137
        %v2139 = vpop.f32.mrb[0].mxu0
        %v2140 = vpop.f32.mrb[0].mxu0
        %v2141 = vadd.f32 %v1997, %v2140
        %v2142 = vpop.f32.mrb[0].mxu0
        %2143 = vmatprep.mubr.bf16.mxu0 0
        %2144 = vmatmul.mubr.bf16.gmra.mrb[0].mxu0 %v1968
        %v2145 = vpop.f32.mrb[0].mxu0
        %v2146 = vadd.f32 %v1997, %v2145
        %v2147 = vpop.f32.mrb[0].mxu0
        %v2148 = vpop.f32.mrb[0].mxu0
        %v2149 = vadd.f32 %v1997, %v2148
        %v2150 = vpop.f32.mrb[0].mxu0
        %2151 = vmatprep.mubr.bf16.mxu0 0
        %2152 = vmatmul.mubr.bf16.gmra.mrb[0].mxu0 %v1969
        %v2153 = vpop.f32.mrb[0].mxu0
        %v2154 = vadd.f32 %v1997, %v2153
        %v2155 = vpop.f32.mrb[0].mxu0
        %v2156 = vpop.f32.mrb[0].mxu0
        %v2157 = vadd.f32 %v1997, %v2156
        %v2158 = vpop.f32.mrb[0].mxu0
        %2159 = vmatprep.mubr.bf16.mxu0 0
        %2160 = vmatmul.mubr.bf16.gmra.mrb[0].mxu0 %v1970
        %v2161 = vpop.f32.mrb[0].mxu0
        %v2162 = vadd.f32 %v1997, %v2161
        %v2163 = vpop.f32.mrb[0].mxu0
        %v2164 = vpop.f32.mrb[0].mxu0
        %v2165 = vadd.f32 %v1997, %v2164
        %v2166 = vpop.f32.mrb[0].mxu0
        %2167 = vmatprep.mubr.bf16.mxu0 0
        %2168 = vmatmul.mubr.bf16.gmra.mrb[0].mxu0 %v1971
        %v2169 = vpop.f32.mrb[0].mxu0
        %v2170 = vadd.f32 %v1997, %v2169
        %v2171 = vpop.f32.mrb[0].mxu0
        %v2172 = vpop.f32.mrb[0].mxu0
        %v2173 = vadd.f32 %v1997, %v2172
        %v2174 = vpop.f32.mrb[0].mxu0
        %2175 = vmatprep.mubr.bf16.mxu0 0
        %2176 = vmatmul.mubr.bf16.gmra.mrb[0].mxu0 %v1972
        %v2177 = vpop.f32.mrb[0].mxu0
        %v2178 = vadd.f32 %v1997, %v2177
        %v2179 = vpop.f32.mrb[0].mxu0
        %v2180 = vpop.f32.mrb[0].mxu0
        %v2181 = vadd.f32 %v1997, %v2180
        %v2182 = vpop.f32.mrb[0].mxu0
        %2183 = vmatprep.mubr.bf16.mxu0 0
        %2184 = vmatmul.mubr.bf16.gmra.mrb[0].mxu0 %v1973
        %v2185 = vpop.f32.mrb[0].mxu0
        %v2186 = vadd.f32 %v1997, %v2185
        %v2187 = vpop.f32.mrb[0].mxu0
        %v2188 = vpop.f32.mrb[0].mxu0
        %v2189 = vadd.f32 %v1997, %v2188
        %v2190 = vpop.f32.mrb[0].mxu0
        %2191 = vmatprep.mubr.bf16.mxu0 0
        %2192 = vmatmul.mubr.bf16.gmra.mrb[0].mxu0 %v1974
        %v2193 = vpop.f32.mrb[0].mxu0
        %v2194 = vadd.f32 %v1997, %v2193
        %v2195 = vpop.f32.mrb[0].mxu0
        %v2196 = vpop.f32.mrb[0].mxu0
        %v2197 = vadd.f32 %v1997, %v2196
        %v2198 = vpop.f32.mrb[0].mxu0
        %2199 = vmatprep.mubr.bf16.mxu0 0
        %2200 = vmatmul.mubr.bf16.gmra.mrb[0].mxu0 %v1975
        %v2201 = vpop.f32.mrb[0].mxu0
        %v2202 = vadd.f32 %v1997, %v2201
        %v2203 = vpop.f32.mrb[0].mxu0
        %v2204 = vpop.f32.mrb[0].mxu0
        %v2205 = vadd.f32 %v1997, %v2204
        %v2206 = vpop.f32.mrb[0].mxu0
        %2207 = vdwg.mxu0
        %v2208 = vld [vmem:[%s533] sm:$0xff]
        %v2209 = vld [vmem:[%s533 + $0x8] sm:$0xff]
        %s2210 = smul.u32 %s35, 128
        %2211 = vmax.xlane.f32.xlu0 %v2082
        %v2212 = vpop.xlane.xlu0 %2211
        %2213 = vmax.xlane.f32.xlu0 %v2085
        %v2214 = vpop.xlane.xlu0 %2213
        %2215 = vmax.xlane.f32.xlu0 %v2090
        %v2216 = vpop.xlane.xlu0 %2215
        %2217 = vmax.xlane.f32.xlu0 %v2093
        %v2218 = vpop.xlane.xlu0 %2217
        %2219 = vmax.xlane.f32.xlu0 %v2098
        %v2220 = vpop.xlane.xlu0 %2219
        %2221 = vmax.xlane.f32.xlu0 %v2101
        %v2222 = vpop.xlane.xlu0 %2221
        %2223 = vmax.xlane.f32.xlu0 %v2106
        %v2224 = vpop.xlane.xlu0 %2223
        %2225 = vmax.xlane.f32.xlu0 %v2109
        %v2226 = vpop.xlane.xlu0 %2225
        %2227 = vmax.xlane.f32.xlu0 %v2114
        %v2228 = vpop.xlane.xlu0 %2227
        %2229 = vmax.xlane.f32.xlu0 %v2117
        %v2230 = vpop.xlane.xlu0 %2229
        %2231 = vmax.xlane.f32.xlu0 %v2122
        %v2232 = vpop.xlane.xlu0 %2231
        %2233 = vmax.xlane.f32.xlu0 %v2125
        %v2234 = vpop.xlane.xlu0 %2233
        %2235 = vmax.xlane.f32.xlu0 %v2130
        %v2236 = vpop.xlane.xlu0 %2235
        %2237 = vmax.xlane.f32.xlu0 %v2133
        %v2238 = vpop.xlane.xlu0 %2237
        %2239 = vmax.xlane.f32.xlu0 %v2138
        %v2240 = vpop.xlane.xlu0 %2239
        %2241 = vmax.xlane.f32.xlu0 %v2141
        %v2242 = vpop.xlane.xlu0 %2241
        %2243 = vmax.xlane.f32.xlu0 %v2146
        %v2244 = vpop.xlane.xlu0 %2243
        %2245 = vmax.xlane.f32.xlu0 %v2149
        %v2246 = vpop.xlane.xlu0 %2245
        %2247 = vmax.xlane.f32.xlu0 %v2154
        %v2248 = vpop.xlane.xlu0 %2247
        %2249 = vmax.xlane.f32.xlu0 %v2157
        %v2250 = vpop.xlane.xlu0 %2249
        %2251 = vmax.xlane.f32.xlu0 %v2162
        %v2252 = vpop.xlane.xlu0 %2251
        %2253 = vmax.xlane.f32.xlu0 %v2165
        %v2254 = vpop.xlane.xlu0 %2253
        %2255 = vmax.xlane.f32.xlu0 %v2170
        %v2256 = vpop.xlane.xlu0 %2255
        %2257 = vmax.xlane.f32.xlu0 %v2173
        %v2258 = vpop.xlane.xlu0 %2257
        %2259 = vmax.xlane.f32.xlu0 %v2178
        %v2260 = vpop.xlane.xlu0 %2259
        %2261 = vmax.xlane.f32.xlu0 %v2181
        %v2262 = vpop.xlane.xlu0 %2261
        %2263 = vmax.xlane.f32.xlu0 %v2186
        %v2264 = vpop.xlane.xlu0 %2263
        %2265 = vmax.xlane.f32.xlu0 %v2189
        %v2266 = vpop.xlane.xlu0 %2265
        %2267 = vmax.xlane.f32.xlu0 %v2194
        %v2268 = vpop.xlane.xlu0 %2267
        %2269 = vmax.xlane.f32.xlu0 %v2197
        %v2270 = vpop.xlane.xlu0 %2269
        %2271 = vmax.xlane.f32.xlu0 %v2202
        %v2272 = vpop.xlane.xlu0 %2271
        %2273 = vmax.xlane.f32.xlu0 %v2205
        %v2274 = vpop.xlane.xlu0 %2273
        %v2275 = vld [vmem:[#allocation3] sm:$0xff]
        %v2276 = vld [vmem:[#allocation3 + $0x8] sm:$0xff]
        %v2309 = vlaneseq
        %v2310 = vand.u32 %v2309, 127
        %v2311 = vlaneseq
        %v2312 = vshrl.u32 %v2311, 7
        %v2313 = vsub.s32 %v2310, %v2312
        %v2314 = vrot.slane %v2212, %v2313
        %v2315 = vadd.s32 %v2310, 4294967288
        %v2316 = vlaneseq
        %v2317 = vshrl.u32 %v2316, 7
        %v2318 = vsub.s32 %v2315, %v2317
        %v2319 = vrot.slane %v2214, %v2318
        %vm2320 = vcmask 130112
        %v2321 = vsel %vm2320, %v2319, %v2314
        %v2322 = vlaneseq
        %v2323 = vshrl.u32 %v2322, 7
        %v2324 = vsub.s32 %v2310, %v2323
        %v2325 = vrot.slane %v2216, %v2324
        %v2326 = vlaneseq
        %v2327 = vshrl.u32 %v2326, 7
        %v2328 = vsub.s32 %v2315, %v2327
        %v2329 = vrot.slane %v2218, %v2328
        %v2330 = vsel %vm2320, %v2329, %v2325
        %v2331 = vlaneseq
        %v2332 = vshrl.u32 %v2331, 7
        %v2333 = vsub.s32 %v2310, %v2332
        %v2334 = vrot.slane %v2220, %v2333
        %v2335 = vlaneseq
        %v2336 = vshrl.u32 %v2335, 7
        %v2337 = vsub.s32 %v2315, %v2336
        %v2338 = vrot.slane %v2222, %v2337
        %v2339 = vsel %vm2320, %v2338, %v2334
        %v2340 = vlaneseq
        %v2341 = vshrl.u32 %v2340, 7
        %v2342 = vsub.s32 %v2310, %v2341
        %v2343 = vrot.slane %v2224, %v2342
        %v2344 = vlaneseq
        %v2345 = vshrl.u32 %v2344, 7
        %v2346 = vsub.s32 %v2315, %v2345
        %v2347 = vrot.slane %v2226, %v2346
        %v2348 = vsel %vm2320, %v2347, %v2343
        %v2349 = vlaneseq
        %v2350 = vshrl.u32 %v2349, 7
        %v2351 = vsub.s32 %v2310, %v2350
        %v2352 = vrot.slane %v2228, %v2351
        %v2353 = vlaneseq
        %v2354 = vshrl.u32 %v2353, 7
        %v2355 = vsub.s32 %v2315, %v2354
        %v2356 = vrot.slane %v2230, %v2355
        %v2357 = vsel %vm2320, %v2356, %v2352
        %v2358 = vlaneseq
        %v2359 = vshrl.u32 %v2358, 7
        %v2360 = vsub.s32 %v2310, %v2359
        %v2361 = vrot.slane %v2232, %v2360
        %v2362 = vlaneseq
        %v2363 = vshrl.u32 %v2362, 7
        %v2364 = vsub.s32 %v2315, %v2363
        %v2365 = vrot.slane %v2234, %v2364
        %v2366 = vsel %vm2320, %v2365, %v2361
        %v2367 = vlaneseq
        %v2368 = vshrl.u32 %v2367, 7
        %v2369 = vsub.s32 %v2310, %v2368
        %v2370 = vrot.slane %v2236, %v2369
        %v2371 = vlaneseq
        %v2372 = vshrl.u32 %v2371, 7
        %v2373 = vsub.s32 %v2315, %v2372
        %v2374 = vrot.slane %v2238, %v2373
        %v2375 = vsel %vm2320, %v2374, %v2370
        %v2376 = vlaneseq
        %v2377 = vshrl.u32 %v2376, 7
        %v2378 = vsub.s32 %v2310, %v2377
        %v2379 = vrot.slane %v2240, %v2378
        %v2380 = vlaneseq
        %v2381 = vshrl.u32 %v2380, 7
        %v2382 = vsub.s32 %v2315, %v2381
        %v2383 = vrot.slane %v2242, %v2382
        %v2384 = vsel %vm2320, %v2383, %v2379
        %v2385 = vlaneseq
        %v2386 = vshrl.u32 %v2385, 7
        %v2387 = vsub.s32 %v2310, %v2386
        %v2388 = vrot.slane %v2244, %v2387
        %v2389 = vlaneseq
        %v2390 = vshrl.u32 %v2389, 7
        %v2391 = vsub.s32 %v2315, %v2390
        %v2392 = vrot.slane %v2246, %v2391
        %v2393 = vsel %vm2320, %v2392, %v2388
        %v2394 = vlaneseq
        %v2395 = vshrl.u32 %v2394, 7
        %v2396 = vsub.s32 %v2310, %v2395
        %v2397 = vrot.slane %v2248, %v2396
        %v2398 = vlaneseq
        %v2399 = vshrl.u32 %v2398, 7
        %v2400 = vsub.s32 %v2315, %v2399
        %v2401 = vrot.slane %v2250, %v2400
        %v2402 = vsel %vm2320, %v2401, %v2397
        %v2403 = vlaneseq
        %v2404 = vshrl.u32 %v2403, 7
        %v2405 = vsub.s32 %v2310, %v2404
        %v2406 = vrot.slane %v2252, %v2405
        %v2407 = vlaneseq
        %v2408 = vshrl.u32 %v2407, 7
        %v2409 = vsub.s32 %v2315, %v2408
        %v2410 = vrot.slane %v2254, %v2409
        %v2411 = vsel %vm2320, %v2410, %v2406
        %v2412 = vlaneseq
        %v2413 = vshrl.u32 %v2412, 7
        %v2414 = vsub.s32 %v2310, %v2413
        %v2415 = vrot.slane %v2256, %v2414
        %v2416 = vlaneseq
        %v2417 = vshrl.u32 %v2416, 7
        %v2418 = vsub.s32 %v2315, %v2417
        %v2419 = vrot.slane %v2258, %v2418
        %v2420 = vsel %vm2320, %v2419, %v2415
        %v2421 = vlaneseq
        %v2422 = vshrl.u32 %v2421, 7
        %v2423 = vsub.s32 %v2310, %v2422
        %v2424 = vrot.slane %v2260, %v2423
        %v2425 = vlaneseq
        %v2426 = vshrl.u32 %v2425, 7
        %v2427 = vsub.s32 %v2315, %v2426
        %v2428 = vrot.slane %v2262, %v2427
        %v2429 = vsel %vm2320, %v2428, %v2424
        %v2430 = vlaneseq
        %v2431 = vshrl.u32 %v2430, 7
        %v2432 = vsub.s32 %v2310, %v2431
        %v2433 = vrot.slane %v2264, %v2432
        %v2434 = vlaneseq
        %v2435 = vshrl.u32 %v2434, 7
        %v2436 = vsub.s32 %v2315, %v2435
        %v2437 = vrot.slane %v2266, %v2436
        %v2438 = vsel %vm2320, %v2437, %v2433
        %v2439 = vlaneseq
        %v2440 = vshrl.u32 %v2439, 7
        %v2441 = vsub.s32 %v2310, %v2440
        %v2442 = vrot.slane %v2268, %v2441
        %v2443 = vlaneseq
        %v2444 = vshrl.u32 %v2443, 7
        %v2445 = vsub.s32 %v2315, %v2444
        %v2446 = vrot.slane %v2270, %v2445
        %v2447 = vsel %vm2320, %v2446, %v2442
        %v2448 = vlaneseq
        %v2449 = vshrl.u32 %v2448, 7
        %v2450 = vsub.s32 %v2310, %v2449
        %v2451 = vrot.slane %v2272, %v2450
        %v2452 = vlaneseq
        %v2453 = vshrl.u32 %v2452, 7
        %v2454 = vsub.s32 %v2315, %v2453
        %v2455 = vrot.slane %v2274, %v2454
        %v2456 = vsel %vm2320, %v2455, %v2451
        %vm2457 = vcmask 1041409
        %v2458 = vsel %vm2457, %v2330, %v2321
        %vm2459 = vcmask 1042434
        %v2460 = vsel %vm2459, %v2339, %v2458
        %vm2461 = vcmask 1043459
        %v2462 = vsel %vm2461, %v2348, %v2460
        %vm2463 = vcmask 1044484
        %v2464 = vsel %vm2463, %v2357, %v2462
        %vm2465 = vcmask 1045509
        %v2466 = vsel %vm2465, %v2366, %v2464
        %vm2467 = vcmask 1046534
        %v2468 = vsel %vm2467, %v2375, %v2466
        %vm2469 = vcmask 1047559
        %v2470 = vsel %vm2469, %v2384, %v2468
        %v2471 = vsel %vm2457, %v2402, %v2393
        %v2472 = vsel %vm2459, %v2411, %v2471
        %v2473 = vsel %vm2461, %v2420, %v2472
        %v2474 = vsel %vm2463, %v2429, %v2473
        %v2475 = vsel %vm2465, %v2438, %v2474
        %v2476 = vsel %vm2467, %v2447, %v2475
        %v2477 = vsel %vm2469, %v2456, %v2476
        %v2480 = vmax.f32 %v2275, %v2470
        %v2481 = vmax.f32 %v2276, %v2477
        %v2482 = vsub.f32 %v2275, %v2480
        %v2483 = vsub.f32 %v2276, %v2481
        %v2484 = vmul.f32 %v2482, 1.442695
        %v2485 = vpow.pop %v2484
        %v2486 = vmul.f32 %v2483, 1.442695
        %v2487 = vpow.pop %v2486
        %v2488 = vlaneseq
        %v2489 = vshrl.u32 %v2488, 7
        %v2490 = vsub.s32 0, %v2489
        %v2491 = vrot.slane %v2480, %v2490
        %2493 = vbcast.lane.b32.xlu0 %v2491, 256
        %v2494 = vpop.permute.xlu0 %2493
        %s2496 = sor.u32 256, 8
        %2497 = vbcast.lane.b32.xlu0 %v2491, %s2496
        %v2498 = vpop.permute.xlu0 %2497
        %v2499 = vlaneseq
        %v2500 = vshrl.u32 %v2499, 7
        %v2501 = vsub.s32 1, %v2500
        %v2502 = vrot.slane %v2480, %v2501
        %2504 = vbcast.lane.b32.xlu0 %v2502, 256
        %v2505 = vpop.permute.xlu0 %2504
        %s2507 = sor.u32 256, 8
        %2508 = vbcast.lane.b32.xlu0 %v2502, %s2507
        %v2509 = vpop.permute.xlu0 %2508
        %v2510 = vlaneseq
        %v2511 = vshrl.u32 %v2510, 7
        %v2512 = vsub.s32 2, %v2511
        %v2513 = vrot.slane %v2480, %v2512
        %2515 = vbcast.lane.b32.xlu0 %v2513, 256
        %v2516 = vpop.permute.xlu0 %2515
        %s2518 = sor.u32 256, 8
        %2519 = vbcast.lane.b32.xlu0 %v2513, %s2518
        %v2520 = vpop.permute.xlu0 %2519
        %v2521 = vlaneseq
        %v2522 = vshrl.u32 %v2521, 7
        %v2523 = vsub.s32 3, %v2522
        %v2524 = vrot.slane %v2480, %v2523
        %2526 = vbcast.lane.b32.xlu0 %v2524, 256
        %v2527 = vpop.permute.xlu0 %2526
        %s2529 = sor.u32 256, 8
        %2530 = vbcast.lane.b32.xlu0 %v2524, %s2529
        %v2531 = vpop.permute.xlu0 %2530
        %v2532 = vlaneseq
        %v2533 = vshrl.u32 %v2532, 7
        %v2534 = vsub.s32 4, %v2533
        %v2535 = vrot.slane %v2480, %v2534
        %2537 = vbcast.lane.b32.xlu0 %v2535, 256
        %v2538 = vpop.permute.xlu0 %2537
        %s2540 = sor.u32 256, 8
        %2541 = vbcast.lane.b32.xlu0 %v2535, %s2540
        %v2542 = vpop.permute.xlu0 %2541
        %v2543 = vlaneseq
        %v2544 = vshrl.u32 %v2543, 7
        %v2545 = vsub.s32 5, %v2544
        %v2546 = vrot.slane %v2480, %v2545
        %2548 = vbcast.lane.b32.xlu0 %v2546, 256
        %v2549 = vpop.permute.xlu0 %2548
        %s2551 = sor.u32 256, 8
        %2552 = vbcast.lane.b32.xlu0 %v2546, %s2551
        %v2553 = vpop.permute.xlu0 %2552
        %v2554 = vlaneseq
        %v2555 = vshrl.u32 %v2554, 7
        %v2556 = vsub.s32 6, %v2555
        %v2557 = vrot.slane %v2480, %v2556
        %2559 = vbcast.lane.b32.xlu0 %v2557, 256
        %v2560 = vpop.permute.xlu0 %2559
        %s2562 = sor.u32 256, 8
        %2563 = vbcast.lane.b32.xlu0 %v2557, %s2562
        %v2564 = vpop.permute.xlu0 %2563
        %v2565 = vlaneseq
        %v2566 = vshrl.u32 %v2565, 7
        %v2567 = vsub.s32 7, %v2566
        %v2568 = vrot.slane %v2480, %v2567
        %2570 = vbcast.lane.b32.xlu0 %v2568, 256
        %v2571 = vpop.permute.xlu0 %2570
        %s2573 = sor.u32 256, 8
        %2574 = vbcast.lane.b32.xlu0 %v2568, %s2573
        %v2575 = vpop.permute.xlu0 %2574
        %v2576 = vlaneseq
        %v2577 = vshrl.u32 %v2576, 7
        %v2578 = vsub.s32 0, %v2577
        %v2579 = vrot.slane %v2481, %v2578
        %2581 = vbcast.lane.b32.xlu0 %v2579, 256
        %v2582 = vpop.permute.xlu0 %2581
        %s2584 = sor.u32 256, 8
        %2585 = vbcast.lane.b32.xlu0 %v2579, %s2584
        %v2586 = vpop.permute.xlu0 %2585
        %v2587 = vlaneseq
        %v2588 = vshrl.u32 %v2587, 7
        %v2589 = vsub.s32 1, %v2588
        %v2590 = vrot.slane %v2481, %v2589
        %2592 = vbcast.lane.b32.xlu0 %v2590, 256
        %v2593 = vpop.permute.xlu0 %2592
        %s2595 = sor.u32 256, 8
        %2596 = vbcast.lane.b32.xlu0 %v2590, %s2595
        %v2597 = vpop.permute.xlu0 %2596
        %v2598 = vlaneseq
        %v2599 = vshrl.u32 %v2598, 7
        %v2600 = vsub.s32 2, %v2599
        %v2601 = vrot.slane %v2481, %v2600
        %2603 = vbcast.lane.b32.xlu0 %v2601, 256
        %v2604 = vpop.permute.xlu0 %2603
        %s2606 = sor.u32 256, 8
        %2607 = vbcast.lane.b32.xlu0 %v2601, %s2606
        %v2608 = vpop.permute.xlu0 %2607
        %v2609 = vlaneseq
        %v2610 = vshrl.u32 %v2609, 7
        %v2611 = vsub.s32 3, %v2610
        %v2612 = vrot.slane %v2481, %v2611
        %2614 = vbcast.lane.b32.xlu0 %v2612, 256
        %v2615 = vpop.permute.xlu0 %2614
        %s2617 = sor.u32 256, 8
        %2618 = vbcast.lane.b32.xlu0 %v2612, %s2617
        %v2619 = vpop.permute.xlu0 %2618
        %v2620 = vlaneseq
        %v2621 = vshrl.u32 %v2620, 7
        %v2622 = vsub.s32 4, %v2621
        %v2623 = vrot.slane %v2481, %v2622
        %2625 = vbcast.lane.b32.xlu0 %v2623, 256
        %v2626 = vpop.permute.xlu0 %2625
        %s2628 = sor.u32 256, 8
        %2629 = vbcast.lane.b32.xlu0 %v2623, %s2628
        %v2630 = vpop.permute.xlu0 %2629
        %v2631 = vlaneseq
        %v2632 = vshrl.u32 %v2631, 7
        %v2633 = vsub.s32 5, %v2632
        %v2634 = vrot.slane %v2481, %v2633
        %2636 = vbcast.lane.b32.xlu0 %v2634, 256
        %v2637 = vpop.permute.xlu0 %2636
        %s2639 = sor.u32 256, 8
        %2640 = vbcast.lane.b32.xlu0 %v2634, %s2639
        %v2641 = vpop.permute.xlu0 %2640
        %v2642 = vlaneseq
        %v2643 = vshrl.u32 %v2642, 7
        %v2644 = vsub.s32 6, %v2643
        %v2645 = vrot.slane %v2481, %v2644
        %2647 = vbcast.lane.b32.xlu0 %v2645, 256
        %v2648 = vpop.permute.xlu0 %2647
        %s2650 = sor.u32 256, 8
        %2651 = vbcast.lane.b32.xlu0 %v2645, %s2650
        %v2652 = vpop.permute.xlu0 %2651
        %v2653 = vlaneseq
        %v2654 = vshrl.u32 %v2653, 7
        %v2655 = vsub.s32 7, %v2654
        %v2656 = vrot.slane %v2481, %v2655
        %2658 = vbcast.lane.b32.xlu0 %v2656, 256
        %v2659 = vpop.permute.xlu0 %2658
        %s2661 = sor.u32 256, 8
        %2662 = vbcast.lane.b32.xlu0 %v2656, %s2661
        %v2663 = vpop.permute.xlu0 %2662
        %v2664 = vsub.f32 %v2082, %v2494
        %v2665 = vsub.f32 %v2085, %v2498
        %v2666 = vsub.f32 %v2090, %v2505
        %v2667 = vsub.f32 %v2093, %v2509
        %v2668 = vsub.f32 %v2098, %v2516
        %v2669 = vsub.f32 %v2101, %v2520
        %v2670 = vsub.f32 %v2106, %v2527
        %v2671 = vsub.f32 %v2109, %v2531
        %v2672 = vsub.f32 %v2114, %v2538
        %v2673 = vsub.f32 %v2117, %v2542
        %v2674 = vsub.f32 %v2122, %v2549
        %v2675 = vsub.f32 %v2125, %v2553
        %v2676 = vsub.f32 %v2130, %v2560
        %v2677 = vsub.f32 %v2133, %v2564
        %v2678 = vsub.f32 %v2138, %v2571
        %v2679 = vsub.f32 %v2141, %v2575
        %v2680 = vsub.f32 %v2146, %v2582
        %v2681 = vsub.f32 %v2149, %v2586
        %v2682 = vsub.f32 %v2154, %v2593
        %v2683 = vsub.f32 %v2157, %v2597
        %v2684 = vsub.f32 %v2162, %v2604
        %v2685 = vsub.f32 %v2165, %v2608
        %v2686 = vsub.f32 %v2170, %v2615
        %v2687 = vsub.f32 %v2173, %v2619
        %v2688 = vsub.f32 %v2178, %v2626
        %v2689 = vsub.f32 %v2181, %v2630
        %v2690 = vsub.f32 %v2186, %v2637
        %v2691 = vsub.f32 %v2189, %v2641
        %v2692 = vsub.f32 %v2194, %v2648
        %v2693 = vsub.f32 %v2197, %v2652
        %v2694 = vsub.f32 %v2202, %v2659
        %v2695 = vsub.f32 %v2205, %v2663
        %v2696 = vmul.f32 %v2664, 1.442695
        %v2697 = vpow.pop %v2696
        %v2698 = vmul.f32 %v2665, 1.442695
        %v2699 = vpow.pop %v2698
        %v2700 = vmul.f32 %v2666, 1.442695
        %v2701 = vpow.pop %v2700
        %v2702 = vmul.f32 %v2667, 1.442695
        %v2703 = vpow.pop %v2702
        %v2704 = vmul.f32 %v2668, 1.442695
        %v2705 = vpow.pop %v2704
        %v2706 = vmul.f32 %v2669, 1.442695
        %v2707 = vpow.pop %v2706
        %v2708 = vmul.f32 %v2670, 1.442695
        %v2709 = vpow.pop %v2708
        %v2710 = vmul.f32 %v2671, 1.442695
        %v2711 = vpow.pop %v2710
        %v2712 = vmul.f32 %v2672, 1.442695
        %v2713 = vpow.pop %v2712
        %v2714 = vmul.f32 %v2673, 1.442695
        %v2715 = vpow.pop %v2714
        %v2716 = vmul.f32 %v2674, 1.442695
        %v2717 = vpow.pop %v2716
        %v2718 = vmul.f32 %v2675, 1.442695
        %v2719 = vpow.pop %v2718
        %v2720 = vmul.f32 %v2676, 1.442695
        %v2721 = vpow.pop %v2720
        %v2722 = vmul.f32 %v2677, 1.442695
        %v2723 = vpow.pop %v2722
        %v2724 = vmul.f32 %v2678, 1.442695
        %v2725 = vpow.pop %v2724
        %v2726 = vmul.f32 %v2679, 1.442695
        %v2727 = vpow.pop %v2726
        %v2728 = vmul.f32 %v2680, 1.442695
        %v2729 = vpow.pop %v2728
        %v2730 = vmul.f32 %v2681, 1.442695
        %v2731 = vpow.pop %v2730
        %v2732 = vmul.f32 %v2682, 1.442695
        %v2733 = vpow.pop %v2732
        %v2734 = vmul.f32 %v2683, 1.442695
        %v2735 = vpow.pop %v2734
        %v2736 = vmul.f32 %v2684, 1.442695
        %v2737 = vpow.pop %v2736
        %v2738 = vmul.f32 %v2685, 1.442695
        %v2739 = vpow.pop %v2738
        %v2740 = vmul.f32 %v2686, 1.442695
        %v2741 = vpow.pop %v2740
        %v2742 = vmul.f32 %v2687, 1.442695
        %v2743 = vpow.pop %v2742
        %v2744 = vmul.f32 %v2688, 1.442695
        %v2745 = vpow.pop %v2744
        %v2746 = vmul.f32 %v2689, 1.442695
        %v2747 = vpow.pop %v2746
        %v2748 = vmul.f32 %v2690, 1.442695
        %v2749 = vpow.pop %v2748
        %v2750 = vmul.f32 %v2691, 1.442695
        %v2751 = vpow.pop %v2750
        %v2752 = vmul.f32 %v2692, 1.442695
        %v2753 = vpow.pop %v2752
        %v2754 = vmul.f32 %v2693, 1.442695
        %v2755 = vpow.pop %v2754
        %v2756 = vmul.f32 %v2694, 1.442695
        %v2757 = vpow.pop %v2756
        %v2758 = vmul.f32 %v2695, 1.442695
        %v2759 = vpow.pop %v2758
        %2760 = vadd.xlane.f32.xlu0 %v2697
        %v2761 = vpop.xlane.xlu0 %2760
        %2762 = vadd.xlane.f32.xlu0 %v2699
        %v2763 = vpop.xlane.xlu0 %2762
        %2764 = vadd.xlane.f32.xlu0 %v2701
        %v2765 = vpop.xlane.xlu0 %2764
        %2766 = vadd.xlane.f32.xlu0 %v2703
        %v2767 = vpop.xlane.xlu0 %2766
        %2768 = vadd.xlane.f32.xlu0 %v2705
        %v2769 = vpop.xlane.xlu0 %2768
        %2770 = vadd.xlane.f32.xlu0 %v2707
        %v2771 = vpop.xlane.xlu0 %2770
        %2772 = vadd.xlane.f32.xlu0 %v2709
        %v2773 = vpop.xlane.xlu0 %2772
        %2774 = vadd.xlane.f32.xlu0 %v2711
        %v2775 = vpop.xlane.xlu0 %2774
        %2776 = vadd.xlane.f32.xlu0 %v2713
        %v2777 = vpop.xlane.xlu0 %2776
        %2778 = vadd.xlane.f32.xlu0 %v2715
        %v2779 = vpop.xlane.xlu0 %2778
        %2780 = vadd.xlane.f32.xlu0 %v2717
        %v2781 = vpop.xlane.xlu0 %2780
        %2782 = vadd.xlane.f32.xlu0 %v2719
        %v2783 = vpop.xlane.xlu0 %2782
        %2784 = vadd.xlane.f32.xlu0 %v2721
        %v2785 = vpop.xlane.xlu0 %2784
        %2786 = vadd.xlane.f32.xlu0 %v2723
        %v2787 = vpop.xlane.xlu0 %2786
        %2788 = vadd.xlane.f32.xlu0 %v2725
        %v2789 = vpop.xlane.xlu0 %2788
        %2790 = vadd.xlane.f32.xlu0 %v2727
        %v2791 = vpop.xlane.xlu0 %2790
        %2792 = vadd.xlane.f32.xlu0 %v2729
        %v2793 = vpop.xlane.xlu0 %2792
        %2794 = vadd.xlane.f32.xlu0 %v2731
        %v2795 = vpop.xlane.xlu0 %2794
        %2796 = vadd.xlane.f32.xlu0 %v2733
        %v2797 = vpop.xlane.xlu0 %2796
        %2798 = vadd.xlane.f32.xlu0 %v2735
        %v2799 = vpop.xlane.xlu0 %2798
        %2800 = vadd.xlane.f32.xlu0 %v2737
        %v2801 = vpop.xlane.xlu0 %2800
        %2802 = vadd.xlane.f32.xlu0 %v2739
        %v2803 = vpop.xlane.xlu0 %2802
        %2804 = vadd.xlane.f32.xlu0 %v2741
        %v2805 = vpop.xlane.xlu0 %2804
        %2806 = vadd.xlane.f32.xlu0 %v2743
        %v2807 = vpop.xlane.xlu0 %2806
        %2808 = vadd.xlane.f32.xlu0 %v2745
        %v2809 = vpop.xlane.xlu0 %2808
        %2810 = vadd.xlane.f32.xlu0 %v2747
        %v2811 = vpop.xlane.xlu0 %2810
        %2812 = vadd.xlane.f32.xlu0 %v2749
        %v2813 = vpop.xlane.xlu0 %2812
        %2814 = vadd.xlane.f32.xlu0 %v2751
        %v2815 = vpop.xlane.xlu0 %2814
        %2816 = vadd.xlane.f32.xlu0 %v2753
        %v2817 = vpop.xlane.xlu0 %2816
        %2818 = vadd.xlane.f32.xlu0 %v2755
        %v2819 = vpop.xlane.xlu0 %2818
        %2820 = vadd.xlane.f32.xlu0 %v2757
        %v2821 = vpop.xlane.xlu0 %2820
        %2822 = vadd.xlane.f32.xlu0 %v2759
        %v2823 = vpop.xlane.xlu0 %2822
        %v2824 = vld [vmem:[#allocation4] sm:$0xff]
        %v2825 = vld [vmem:[#allocation4 + $0x8] sm:$0xff]
        %v2826 = vmul.f32 %v2824, %v2485
        %v2827 = vmul.f32 %v2825, %v2487
        %v2860 = vlaneseq
        %v2861 = vshrl.u32 %v2860, 7
        %v2862 = vsub.s32 %v2310, %v2861
        %v2863 = vrot.slane %v2761, %v2862
        %v2864 = vlaneseq
        %v2865 = vshrl.u32 %v2864, 7
        %v2866 = vsub.s32 %v2315, %v2865
        %v2867 = vrot.slane %v2763, %v2866
        %v2868 = vsel %vm2320, %v2867, %v2863
        %v2869 = vlaneseq
        %v2870 = vshrl.u32 %v2869, 7
        %v2871 = vsub.s32 %v2310, %v2870
        %v2872 = vrot.slane %v2765, %v2871
        %v2873 = vlaneseq
        %v2874 = vshrl.u32 %v2873, 7
        %v2875 = vsub.s32 %v2315, %v2874
        %v2876 = vrot.slane %v2767, %v2875
        %v2877 = vsel %vm2320, %v2876, %v2872
        %v2878 = vlaneseq
        %v2879 = vshrl.u32 %v2878, 7
        %v2880 = vsub.s32 %v2310, %v2879
        %v2881 = vrot.slane %v2769, %v2880
        %v2882 = vlaneseq
        %v2883 = vshrl.u32 %v2882, 7
        %v2884 = vsub.s32 %v2315, %v2883
        %v2885 = vrot.slane %v2771, %v2884
        %v2886 = vsel %vm2320, %v2885, %v2881
        %v2887 = vlaneseq
        %v2888 = vshrl.u32 %v2887, 7
        %v2889 = vsub.s32 %v2310, %v2888
        %v2890 = vrot.slane %v2773, %v2889
        %v2891 = vlaneseq
        %v2892 = vshrl.u32 %v2891, 7
        %v2893 = vsub.s32 %v2315, %v2892
        %v2894 = vrot.slane %v2775, %v2893
        %v2895 = vsel %vm2320, %v2894, %v2890
        %v2896 = vlaneseq
        %v2897 = vshrl.u32 %v2896, 7
        %v2898 = vsub.s32 %v2310, %v2897
        %v2899 = vrot.slane %v2777, %v2898
        %v2900 = vlaneseq
        %v2901 = vshrl.u32 %v2900, 7
        %v2902 = vsub.s32 %v2315, %v2901
        %v2903 = vrot.slane %v2779, %v2902
        %v2904 = vsel %vm2320, %v2903, %v2899
        %v2905 = vlaneseq
        %v2906 = vshrl.u32 %v2905, 7
        %v2907 = vsub.s32 %v2310, %v2906
        %v2908 = vrot.slane %v2781, %v2907
        %v2909 = vlaneseq
        %v2910 = vshrl.u32 %v2909, 7
        %v2911 = vsub.s32 %v2315, %v2910
        %v2912 = vrot.slane %v2783, %v2911
        %v2913 = vsel %vm2320, %v2912, %v2908
        %v2914 = vlaneseq
        %v2915 = vshrl.u32 %v2914, 7
        %v2916 = vsub.s32 %v2310, %v2915
        %v2917 = vrot.slane %v2785, %v2916
        %v2918 = vlaneseq
        %v2919 = vshrl.u32 %v2918, 7
        %v2920 = vsub.s32 %v2315, %v2919
        %v2921 = vrot.slane %v2787, %v2920
        %v2922 = vsel %vm2320, %v2921, %v2917
        %v2923 = vlaneseq
        %v2924 = vshrl.u32 %v2923, 7
        %v2925 = vsub.s32 %v2310, %v2924
        %v2926 = vrot.slane %v2789, %v2925
        %v2927 = vlaneseq
        %v2928 = vshrl.u32 %v2927, 7
        %v2929 = vsub.s32 %v2315, %v2928
        %v2930 = vrot.slane %v2791, %v2929
        %v2931 = vsel %vm2320, %v2930, %v2926
        %v2932 = vlaneseq
        %v2933 = vshrl.u32 %v2932, 7
        %v2934 = vsub.s32 %v2310, %v2933
        %v2935 = vrot.slane %v2793, %v2934
        %v2936 = vlaneseq
        %v2937 = vshrl.u32 %v2936, 7
        %v2938 = vsub.s32 %v2315, %v2937
        %v2939 = vrot.slane %v2795, %v2938
        %v2940 = vsel %vm2320, %v2939, %v2935
        %v2941 = vlaneseq
        %v2942 = vshrl.u32 %v2941, 7
        %v2943 = vsub.s32 %v2310, %v2942
        %v2944 = vrot.slane %v2797, %v2943
        %v2945 = vlaneseq
        %v2946 = vshrl.u32 %v2945, 7
        %v2947 = vsub.s32 %v2315, %v2946
        %v2948 = vrot.slane %v2799, %v2947
        %v2949 = vsel %vm2320, %v2948, %v2944
        %v2950 = vlaneseq
        %v2951 = vshrl.u32 %v2950, 7
        %v2952 = vsub.s32 %v2310, %v2951
        %v2953 = vrot.slane %v2801, %v2952
        %v2954 = vlaneseq
        %v2955 = vshrl.u32 %v2954, 7
        %v2956 = vsub.s32 %v2315, %v2955
        %v2957 = vrot.slane %v2803, %v2956
        %v2958 = vsel %vm2320, %v2957, %v2953
        %v2959 = vlaneseq
        %v2960 = vshrl.u32 %v2959, 7
        %v2961 = vsub.s32 %v2310, %v2960
        %v2962 = vrot.slane %v2805, %v2961
        %v2963 = vlaneseq
        %v2964 = vshrl.u32 %v2963, 7
        %v2965 = vsub.s32 %v2315, %v2964
        %v2966 = vrot.slane %v2807, %v2965
        %v2967 = vsel %vm2320, %v2966, %v2962
        %v2968 = vlaneseq
        %v2969 = vshrl.u32 %v2968, 7
        %v2970 = vsub.s32 %v2310, %v2969
        %v2971 = vrot.slane %v2809, %v2970
        %v2972 = vlaneseq
        %v2973 = vshrl.u32 %v2972, 7
        %v2974 = vsub.s32 %v2315, %v2973
        %v2975 = vrot.slane %v2811, %v2974
        %v2976 = vsel %vm2320, %v2975, %v2971
        %v2977 = vlaneseq
        %v2978 = vshrl.u32 %v2977, 7
        %v2979 = vsub.s32 %v2310, %v2978
        %v2980 = vrot.slane %v2813, %v2979
        %v2981 = vlaneseq
        %v2982 = vshrl.u32 %v2981, 7
        %v2983 = vsub.s32 %v2315, %v2982
        %v2984 = vrot.slane %v2815, %v2983
        %v2985 = vsel %vm2320, %v2984, %v2980
        %v2986 = vlaneseq
        %v2987 = vshrl.u32 %v2986, 7
        %v2988 = vsub.s32 %v2310, %v2987
        %v2989 = vrot.slane %v2817, %v2988
        %v2990 = vlaneseq
        %v2991 = vshrl.u32 %v2990, 7
        %v2992 = vsub.s32 %v2315, %v2991
        %v2993 = vrot.slane %v2819, %v2992
        %v2994 = vsel %vm2320, %v2993, %v2989
        %v2995 = vlaneseq
        %v2996 = vshrl.u32 %v2995, 7
        %v2997 = vsub.s32 %v2310, %v2996
        %v2998 = vrot.slane %v2821, %v2997
        %v2999 = vlaneseq
        %v3000 = vshrl.u32 %v2999, 7
        %v3001 = vsub.s32 %v2315, %v3000
        %v3002 = vrot.slane %v2823, %v3001
        %v3003 = vsel %vm2320, %v3002, %v2998
        %v3004 = vsel %vm2457, %v2877, %v2868
        %v3005 = vsel %vm2459, %v2886, %v3004
        %v3006 = vsel %vm2461, %v2895, %v3005
        %v3007 = vsel %vm2463, %v2904, %v3006
        %v3008 = vsel %vm2465, %v2913, %v3007
        %v3009 = vsel %vm2467, %v2922, %v3008
        %v3010 = vsel %vm2469, %v2931, %v3009
        %v3011 = vsel %vm2457, %v2949, %v2940
        %v3012 = vsel %vm2459, %v2958, %v3011
        %v3013 = vsel %vm2461, %v2967, %v3012
        %v3014 = vsel %vm2463, %v2976, %v3013
        %v3015 = vsel %vm2465, %v2985, %v3014
        %v3016 = vsel %vm2467, %v2994, %v3015
        %v3017 = vsel %vm2469, %v3003, %v3016
        %v3020 = vadd.f32 %v2826, %v3010
        %v3021 = vadd.f32 %v2827, %v3017
        %vm3022 = vcmask 130048
        %3023 = vst.msk [vmem:[#allocation4] sm:$0xff] %vm3022, %v3020
        %3024 = vst.msk [vmem:[#allocation4 + $0x8] sm:$0xff] %vm3022, %v3021
        %3025 = vst.msk [vmem:[#allocation3] sm:$0xff] %vm3022, %v2480
        %3026 = vst.msk [vmem:[#allocation3 + $0x8] sm:$0xff] %vm3022, %v2481
        %v3027 = vstv %s2210
        %v3028 = vadd.s32 %v2310, %v3027
        %v3029 = vld [vmem:[#allocation5] sm:$0xff]
        %v3030 = vld [vmem:[#allocation5 + $0x8] sm:$0xff]
        %v3031 = vlaneseq
        %v3032 = vshrl.u32 %v3031, 7
        %v3033 = vsub.s32 0, %v3032
        %v3034 = vrot.slane %v2208, %v3033
        %3036 = vbcast.lane.b32.xlu0 %v3034, 256
        %v3037 = vpop.permute.xlu0 %3036
        %s3039 = sor.u32 256, 8
        %3040 = vbcast.lane.b32.xlu0 %v3034, %s3039
        %v3041 = vpop.permute.xlu0 %3040
        %v3042 = vlaneseq
        %v3043 = vshrl.u32 %v3042, 7
        %v3044 = vsub.s32 1, %v3043
        %v3045 = vrot.slane %v2208, %v3044
        %3047 = vbcast.lane.b32.xlu0 %v3045, 256
        %v3048 = vpop.permute.xlu0 %3047
        %s3050 = sor.u32 256, 8
        %3051 = vbcast.lane.b32.xlu0 %v3045, %s3050
        %v3052 = vpop.permute.xlu0 %3051
        %v3053 = vlaneseq
        %v3054 = vshrl.u32 %v3053, 7
        %v3055 = vsub.s32 2, %v3054
        %v3056 = vrot.slane %v2208, %v3055
        %3058 = vbcast.lane.b32.xlu0 %v3056, 256
        %v3059 = vpop.permute.xlu0 %3058
        %s3061 = sor.u32 256, 8
        %3062 = vbcast.lane.b32.xlu0 %v3056, %s3061
        %v3063 = vpop.permute.xlu0 %3062
        %v3064 = vlaneseq
        %v3065 = vshrl.u32 %v3064, 7
        %v3066 = vsub.s32 3, %v3065
        %v3067 = vrot.slane %v2208, %v3066
        %3069 = vbcast.lane.b32.xlu0 %v3067, 256
        %v3070 = vpop.permute.xlu0 %3069
        %s3072 = sor.u32 256, 8
        %3073 = vbcast.lane.b32.xlu0 %v3067, %s3072
        %v3074 = vpop.permute.xlu0 %3073
        %v3075 = vlaneseq
        %v3076 = vshrl.u32 %v3075, 7
        %v3077 = vsub.s32 4, %v3076
        %v3078 = vrot.slane %v2208, %v3077
        %3080 = vbcast.lane.b32.xlu0 %v3078, 256
        %v3081 = vpop.permute.xlu0 %3080
        %s3083 = sor.u32 256, 8
        %3084 = vbcast.lane.b32.xlu0 %v3078, %s3083
        %v3085 = vpop.permute.xlu0 %3084
        %v3086 = vlaneseq
        %v3087 = vshrl.u32 %v3086, 7
        %v3088 = vsub.s32 5, %v3087
        %v3089 = vrot.slane %v2208, %v3088
        %3091 = vbcast.lane.b32.xlu0 %v3089, 256
        %v3092 = vpop.permute.xlu0 %3091
        %s3094 = sor.u32 256, 8
        %3095 = vbcast.lane.b32.xlu0 %v3089, %s3094
        %v3096 = vpop.permute.xlu0 %3095
        %v3097 = vlaneseq
        %v3098 = vshrl.u32 %v3097, 7
        %v3099 = vsub.s32 6, %v3098
        %v3100 = vrot.slane %v2208, %v3099
        %3102 = vbcast.lane.b32.xlu0 %v3100, 256
        %v3103 = vpop.permute.xlu0 %3102
        %s3105 = sor.u32 256, 8
        %3106 = vbcast.lane.b32.xlu0 %v3100, %s3105
        %v3107 = vpop.permute.xlu0 %3106
        %v3108 = vlaneseq
        %v3109 = vshrl.u32 %v3108, 7
        %v3110 = vsub.s32 7, %v3109
        %v3111 = vrot.slane %v2208, %v3110
        %3113 = vbcast.lane.b32.xlu0 %v3111, 256
        %v3114 = vpop.permute.xlu0 %3113
        %s3116 = sor.u32 256, 8
        %3117 = vbcast.lane.b32.xlu0 %v3111, %s3116
        %v3118 = vpop.permute.xlu0 %3117
        %v3119 = vlaneseq
        %v3120 = vshrl.u32 %v3119, 7
        %v3121 = vsub.s32 0, %v3120
        %v3122 = vrot.slane %v2209, %v3121
        %3124 = vbcast.lane.b32.xlu0 %v3122, 256
        %v3125 = vpop.permute.xlu0 %3124
        %s3127 = sor.u32 256, 8
        %3128 = vbcast.lane.b32.xlu0 %v3122, %s3127
        %v3129 = vpop.permute.xlu0 %3128
        %v3130 = vlaneseq
        %v3131 = vshrl.u32 %v3130, 7
        %v3132 = vsub.s32 1, %v3131
        %v3133 = vrot.slane %v2209, %v3132
        %3135 = vbcast.lane.b32.xlu0 %v3133, 256
        %v3136 = vpop.permute.xlu0 %3135
        %s3138 = sor.u32 256, 8
        %3139 = vbcast.lane.b32.xlu0 %v3133, %s3138
        %v3140 = vpop.permute.xlu0 %3139
        %v3141 = vlaneseq
        %v3142 = vshrl.u32 %v3141, 7
        %v3143 = vsub.s32 2, %v3142
        %v3144 = vrot.slane %v2209, %v3143
        %3146 = vbcast.lane.b32.xlu0 %v3144, 256
        %v3147 = vpop.permute.xlu0 %3146
        %s3149 = sor.u32 256, 8
        %3150 = vbcast.lane.b32.xlu0 %v3144, %s3149
        %v3151 = vpop.permute.xlu0 %3150
        %v3152 = vlaneseq
        %v3153 = vshrl.u32 %v3152, 7
        %v3154 = vsub.s32 3, %v3153
        %v3155 = vrot.slane %v2209, %v3154
        %3157 = vbcast.lane.b32.xlu0 %v3155, 256
        %v3158 = vpop.permute.xlu0 %3157
        %s3160 = sor.u32 256, 8
        %3161 = vbcast.lane.b32.xlu0 %v3155, %s3160
        %v3162 = vpop.permute.xlu0 %3161
        %v3163 = vlaneseq
        %v3164 = vshrl.u32 %v3163, 7
        %v3165 = vsub.s32 4, %v3164
        %v3166 = vrot.slane %v2209, %v3165
        %3168 = vbcast.lane.b32.xlu0 %v3166, 256
        %v3169 = vpop.permute.xlu0 %3168
        %s3171 = sor.u32 256, 8
        %3172 = vbcast.lane.b32.xlu0 %v3166, %s3171
        %v3173 = vpop.permute.xlu0 %3172
        %v3174 = vlaneseq
        %v3175 = vshrl.u32 %v3174, 7
        %v3176 = vsub.s32 5, %v3175
        %v3177 = vrot.slane %v2209, %v3176
        %3179 = vbcast.lane.b32.xlu0 %v3177, 256
        %v3180 = vpop.permute.xlu0 %3179
        %s3182 = sor.u32 256, 8
        %3183 = vbcast.lane.b32.xlu0 %v3177, %s3182
        %v3184 = vpop.permute.xlu0 %3183
        %v3185 = vlaneseq
        %v3186 = vshrl.u32 %v3185, 7
        %v3187 = vsub.s32 6, %v3186
        %v3188 = vrot.slane %v2209, %v3187
        %3190 = vbcast.lane.b32.xlu0 %v3188, 256
        %v3191 = vpop.permute.xlu0 %3190
        %s3193 = sor.u32 256, 8
        %3194 = vbcast.lane.b32.xlu0 %v3188, %s3193
        %v3195 = vpop.permute.xlu0 %3194
        %v3196 = vlaneseq
        %v3197 = vshrl.u32 %v3196, 7
        %v3198 = vsub.s32 7, %v3197
        %v3199 = vrot.slane %v2209, %v3198
        %3201 = vbcast.lane.b32.xlu0 %v3199, 256
        %v3202 = vpop.permute.xlu0 %3201
        %s3204 = sor.u32 256, 8
        %3205 = vbcast.lane.b32.xlu0 %v3199, %s3204
        %v3206 = vpop.permute.xlu0 %3205
        %vm3207 = vcmp.eq.s32.totalorder %v3028, %v3037
        %vm3208 = vcmp.eq.s32.totalorder %v3028, %v3041
        %vm3209 = vcmp.eq.s32.totalorder %v3028, %v3048
        %vm3210 = vcmp.eq.s32.totalorder %v3028, %v3052
        %vm3211 = vcmp.eq.s32.totalorder %v3028, %v3059
        %vm3212 = vcmp.eq.s32.totalorder %v3028, %v3063
        %vm3213 = vcmp.eq.s32.totalorder %v3028, %v3070
        %vm3214 = vcmp.eq.s32.totalorder %v3028, %v3074
        %vm3215 = vcmp.eq.s32.totalorder %v3028, %v3081
        %vm3216 = vcmp.eq.s32.totalorder %v3028, %v3085
        %vm3217 = vcmp.eq.s32.totalorder %v3028, %v3092
        %vm3218 = vcmp.eq.s32.totalorder %v3028, %v3096
        %vm3219 = vcmp.eq.s32.totalorder %v3028, %v3103
        %vm3220 = vcmp.eq.s32.totalorder %v3028, %v3107
        %vm3221 = vcmp.eq.s32.totalorder %v3028, %v3114
        %vm3222 = vcmp.eq.s32.totalorder %v3028, %v3118
        %vm3223 = vcmp.eq.s32.totalorder %v3028, %v3125
        %vm3224 = vcmp.eq.s32.totalorder %v3028, %v3129
        %vm3225 = vcmp.eq.s32.totalorder %v3028, %v3136
        %vm3226 = vcmp.eq.s32.totalorder %v3028, %v3140
        %vm3227 = vcmp.eq.s32.totalorder %v3028, %v3147
        %vm3228 = vcmp.eq.s32.totalorder %v3028, %v3151
        %vm3229 = vcmp.eq.s32.totalorder %v3028, %v3158
        %vm3230 = vcmp.eq.s32.totalorder %v3028, %v3162
        %vm3231 = vcmp.eq.s32.totalorder %v3028, %v3169
        %vm3232 = vcmp.eq.s32.totalorder %v3028, %v3173
        %vm3233 = vcmp.eq.s32.totalorder %v3028, %v3180
        %vm3234 = vcmp.eq.s32.totalorder %v3028, %v3184
        %vm3235 = vcmp.eq.s32.totalorder %v3028, %v3191
        %vm3236 = vcmp.eq.s32.totalorder %v3028, %v3195
        %vm3237 = vcmp.eq.s32.totalorder %v3028, %v3202
        %vm3238 = vcmp.eq.s32.totalorder %v3028, %v3206
        %v3239 = vsel %vm3207, %v2082, 0.0
        %v3240 = vsel %vm3208, %v2085, 0.0
        %v3241 = vsel %vm3209, %v2090, 0.0
        %v3242 = vsel %vm3210, %v2093, 0.0
        %v3243 = vsel %vm3211, %v2098, 0.0
        %v3244 = vsel %vm3212, %v2101, 0.0
        %v3245 = vsel %vm3213, %v2106, 0.0
        %v3246 = vsel %vm3214, %v2109, 0.0
        %v3247 = vsel %vm3215, %v2114, 0.0
        %v3248 = vsel %vm3216, %v2117, 0.0
        %v3249 = vsel %vm3217, %v2122, 0.0
        %v3250 = vsel %vm3218, %v2125, 0.0
        %v3251 = vsel %vm3219, %v2130, 0.0
        %v3252 = vsel %vm3220, %v2133, 0.0
        %v3253 = vsel %vm3221, %v2138, 0.0
        %v3254 = vsel %vm3222, %v2141, 0.0
        %v3255 = vsel %vm3223, %v2146, 0.0
        %v3256 = vsel %vm3224, %v2149, 0.0
        %v3257 = vsel %vm3225, %v2154, 0.0
        %v3258 = vsel %vm3226, %v2157, 0.0
        %v3259 = vsel %vm3227, %v2162, 0.0
        %v3260 = vsel %vm3228, %v2165, 0.0
        %v3261 = vsel %vm3229, %v2170, 0.0
        %v3262 = vsel %vm3230, %v2173, 0.0
        %v3263 = vsel %vm3231, %v2178, 0.0
        %v3264 = vsel %vm3232, %v2181, 0.0
        %v3265 = vsel %vm3233, %v2186, 0.0
        %v3266 = vsel %vm3234, %v2189, 0.0
        %v3267 = vsel %vm3235, %v2194, 0.0
        %v3268 = vsel %vm3236, %v2197, 0.0
        %v3269 = vsel %vm3237, %v2202, 0.0
        %v3270 = vsel %vm3238, %v2205, 0.0
        %3271 = vadd.xlane.f32.xlu0 %v3239
        %v3272 = vpop.xlane.xlu0 %3271
        %3273 = vadd.xlane.f32.xlu0 %v3240
        %v3274 = vpop.xlane.xlu0 %3273
        %3275 = vadd.xlane.f32.xlu0 %v3241
        %v3276 = vpop.xlane.xlu0 %3275
        %3277 = vadd.xlane.f32.xlu0 %v3242
        %v3278 = vpop.xlane.xlu0 %3277
        %3279 = vadd.xlane.f32.xlu0 %v3243
        %v3280 = vpop.xlane.xlu0 %3279
        %3281 = vadd.xlane.f32.xlu0 %v3244
        %v3282 = vpop.xlane.xlu0 %3281
        %3283 = vadd.xlane.f32.xlu0 %v3245
        %v3284 = vpop.xlane.xlu0 %3283
        %3285 = vadd.xlane.f32.xlu0 %v3246
        %v3286 = vpop.xlane.xlu0 %3285
        %3287 = vadd.xlane.f32.xlu0 %v3247
        %v3288 = vpop.xlane.xlu0 %3287
        %3289 = vadd.xlane.f32.xlu0 %v3248
        %v3290 = vpop.xlane.xlu0 %3289
        %3291 = vadd.xlane.f32.xlu0 %v3249
        %v3292 = vpop.xlane.xlu0 %3291
        %3293 = vadd.xlane.f32.xlu0 %v3250
        %v3294 = vpop.xlane.xlu0 %3293
        %3295 = vadd.xlane.f32.xlu0 %v3251
        %v3296 = vpop.xlane.xlu0 %3295
        %3297 = vadd.xlane.f32.xlu0 %v3252
        %v3298 = vpop.xlane.xlu0 %3297
        %3299 = vadd.xlane.f32.xlu0 %v3253
        %v3300 = vpop.xlane.xlu0 %3299
        %3301 = vadd.xlane.f32.xlu0 %v3254
        %v3302 = vpop.xlane.xlu0 %3301
        %3303 = vadd.xlane.f32.xlu0 %v3255
        %v3304 = vpop.xlane.xlu0 %3303
        %3305 = vadd.xlane.f32.xlu0 %v3256
        %v3306 = vpop.xlane.xlu0 %3305
        %3307 = vadd.xlane.f32.xlu0 %v3257
        %v3308 = vpop.xlane.xlu0 %3307
        %3309 = vadd.xlane.f32.xlu0 %v3258
        %v3310 = vpop.xlane.xlu0 %3309
        %3311 = vadd.xlane.f32.xlu0 %v3259
        %v3312 = vpop.xlane.xlu0 %3311
        %3313 = vadd.xlane.f32.xlu0 %v3260
        %v3314 = vpop.xlane.xlu0 %3313
        %3315 = vadd.xlane.f32.xlu0 %v3261
        %v3316 = vpop.xlane.xlu0 %3315
        %3317 = vadd.xlane.f32.xlu0 %v3262
        %v3318 = vpop.xlane.xlu0 %3317
        %3319 = vadd.xlane.f32.xlu0 %v3263
        %v3320 = vpop.xlane.xlu0 %3319
        %3321 = vadd.xlane.f32.xlu0 %v3264
        %v3322 = vpop.xlane.xlu0 %3321
        %3323 = vadd.xlane.f32.xlu0 %v3265
        %v3324 = vpop.xlane.xlu0 %3323
        %3325 = vadd.xlane.f32.xlu0 %v3266
        %v3326 = vpop.xlane.xlu0 %3325
        %3327 = vadd.xlane.f32.xlu0 %v3267
        %v3328 = vpop.xlane.xlu0 %3327
        %3329 = vadd.xlane.f32.xlu0 %v3268
        %v3330 = vpop.xlane.xlu0 %3329
        %3331 = vadd.xlane.f32.xlu0 %v3269
        %v3332 = vpop.xlane.xlu0 %3331
        %3333 = vadd.xlane.f32.xlu0 %v3270
        %v3334 = vpop.xlane.xlu0 %3333
        %v3367 = vlaneseq
        %v3368 = vshrl.u32 %v3367, 7
        %v3369 = vsub.s32 %v2310, %v3368
        %v3370 = vrot.slane %v3272, %v3369
        %v3371 = vlaneseq
        %v3372 = vshrl.u32 %v3371, 7
        %v3373 = vsub.s32 %v2315, %v3372
        %v3374 = vrot.slane %v3274, %v3373
        %v3375 = vsel %vm2320, %v3374, %v3370
        %v3376 = vlaneseq
        %v3377 = vshrl.u32 %v3376, 7
        %v3378 = vsub.s32 %v2310, %v3377
        %v3379 = vrot.slane %v3276, %v3378
        %v3380 = vlaneseq
        %v3381 = vshrl.u32 %v3380, 7
        %v3382 = vsub.s32 %v2315, %v3381
        %v3383 = vrot.slane %v3278, %v3382
        %v3384 = vsel %vm2320, %v3383, %v3379
        %v3385 = vlaneseq
        %v3386 = vshrl.u32 %v3385, 7
        %v3387 = vsub.s32 %v2310, %v3386
        %v3388 = vrot.slane %v3280, %v3387
        %v3389 = vlaneseq
        %v3390 = vshrl.u32 %v3389, 7
        %v3391 = vsub.s32 %v2315, %v3390
        %v3392 = vrot.slane %v3282, %v3391
        %v3393 = vsel %vm2320, %v3392, %v3388
        %v3394 = vlaneseq
        %v3395 = vshrl.u32 %v3394, 7
        %v3396 = vsub.s32 %v2310, %v3395
        %v3397 = vrot.slane %v3284, %v3396
        %v3398 = vlaneseq
        %v3399 = vshrl.u32 %v3398, 7
        %v3400 = vsub.s32 %v2315, %v3399
        %v3401 = vrot.slane %v3286, %v3400
        %v3402 = vsel %vm2320, %v3401, %v3397
        %v3403 = vlaneseq
        %v3404 = vshrl.u32 %v3403, 7
        %v3405 = vsub.s32 %v2310, %v3404
        %v3406 = vrot.slane %v3288, %v3405
        %v3407 = vlaneseq
        %v3408 = vshrl.u32 %v3407, 7
        %v3409 = vsub.s32 %v2315, %v3408
        %v3410 = vrot.slane %v3290, %v3409
        %v3411 = vsel %vm2320, %v3410, %v3406
        %v3412 = vlaneseq
        %v3413 = vshrl.u32 %v3412, 7
        %v3414 = vsub.s32 %v2310, %v3413
        %v3415 = vrot.slane %v3292, %v3414
        %v3416 = vlaneseq
        %v3417 = vshrl.u32 %v3416, 7
        %v3418 = vsub.s32 %v2315, %v3417
        %v3419 = vrot.slane %v3294, %v3418
        %v3420 = vsel %vm2320, %v3419, %v3415
        %v3421 = vlaneseq
        %v3422 = vshrl.u32 %v3421, 7
        %v3423 = vsub.s32 %v2310, %v3422
        %v3424 = vrot.slane %v3296, %v3423
        %v3425 = vlaneseq
        %v3426 = vshrl.u32 %v3425, 7
        %v3427 = vsub.s32 %v2315, %v3426
        %v3428 = vrot.slane %v3298, %v3427
        %v3429 = vsel %vm2320, %v3428, %v3424
        %v3430 = vlaneseq
        %v3431 = vshrl.u32 %v3430, 7
        %v3432 = vsub.s32 %v2310, %v3431
        %v3433 = vrot.slane %v3300, %v3432
        %v3434 = vlaneseq
        %v3435 = vshrl.u32 %v3434, 7
        %v3436 = vsub.s32 %v2315, %v3435
        %v3437 = vrot.slane %v3302, %v3436
        %v3438 = vsel %vm2320, %v3437, %v3433
        %v3439 = vlaneseq
        %v3440 = vshrl.u32 %v3439, 7
        %v3441 = vsub.s32 %v2310, %v3440
        %v3442 = vrot.slane %v3304, %v3441
        %v3443 = vlaneseq
        %v3444 = vshrl.u32 %v3443, 7
        %v3445 = vsub.s32 %v2315, %v3444
        %v3446 = vrot.slane %v3306, %v3445
        %v3447 = vsel %vm2320, %v3446, %v3442
        %v3448 = vlaneseq
        %v3449 = vshrl.u32 %v3448, 7
        %v3450 = vsub.s32 %v2310, %v3449
        %v3451 = vrot.slane %v3308, %v3450
        %v3452 = vlaneseq
        %v3453 = vshrl.u32 %v3452, 7
        %v3454 = vsub.s32 %v2315, %v3453
        %v3455 = vrot.slane %v3310, %v3454
        %v3456 = vsel %vm2320, %v3455, %v3451
        %v3457 = vlaneseq
        %v3458 = vshrl.u32 %v3457, 7
        %v3459 = vsub.s32 %v2310, %v3458
        %v3460 = vrot.slane %v3312, %v3459
        %v3461 = vlaneseq
        %v3462 = vshrl.u32 %v3461, 7
        %v3463 = vsub.s32 %v2315, %v3462
        %v3464 = vrot.slane %v3314, %v3463
        %v3465 = vsel %vm2320, %v3464, %v3460
        %v3466 = vlaneseq
        %v3467 = vshrl.u32 %v3466, 7
        %v3468 = vsub.s32 %v2310, %v3467
        %v3469 = vrot.slane %v3316, %v3468
        %v3470 = vlaneseq
        %v3471 = vshrl.u32 %v3470, 7
        %v3472 = vsub.s32 %v2315, %v3471
        %v3473 = vrot.slane %v3318, %v3472
        %v3474 = vsel %vm2320, %v3473, %v3469
        %v3475 = vlaneseq
        %v3476 = vshrl.u32 %v3475, 7
        %v3477 = vsub.s32 %v2310, %v3476
        %v3478 = vrot.slane %v3320, %v3477
        %v3479 = vlaneseq
        %v3480 = vshrl.u32 %v3479, 7
        %v3481 = vsub.s32 %v2315, %v3480
        %v3482 = vrot.slane %v3322, %v3481
        %v3483 = vsel %vm2320, %v3482, %v3478
        %v3484 = vlaneseq
        %v3485 = vshrl.u32 %v3484, 7
        %v3486 = vsub.s32 %v2310, %v3485
        %v3487 = vrot.slane %v3324, %v3486
        %v3488 = vlaneseq
        %v3489 = vshrl.u32 %v3488, 7
        %v3490 = vsub.s32 %v2315, %v3489
        %v3491 = vrot.slane %v3326, %v3490
        %v3492 = vsel %vm2320, %v3491, %v3487
        %v3493 = vlaneseq
        %v3494 = vshrl.u32 %v3493, 7
        %v3495 = vsub.s32 %v2310, %v3494
        %v3496 = vrot.slane %v3328, %v3495
        %v3497 = vlaneseq
        %v3498 = vshrl.u32 %v3497, 7
        %v3499 = vsub.s32 %v2315, %v3498
        %v3500 = vrot.slane %v3330, %v3499
        %v3501 = vsel %vm2320, %v3500, %v3496
        %v3502 = vlaneseq
        %v3503 = vshrl.u32 %v3502, 7
        %v3504 = vsub.s32 %v2310, %v3503
        %v3505 = vrot.slane %v3332, %v3504
        %v3506 = vlaneseq
        %v3507 = vshrl.u32 %v3506, 7
        %v3508 = vsub.s32 %v2315, %v3507
        %v3509 = vrot.slane %v3334, %v3508
        %v3510 = vsel %vm2320, %v3509, %v3505
        %v3511 = vsel %vm2457, %v3384, %v3375
        %v3512 = vsel %vm2459, %v3393, %v3511
        %v3513 = vsel %vm2461, %v3402, %v3512
        %v3514 = vsel %vm2463, %v3411, %v3513
        %v3515 = vsel %vm2465, %v3420, %v3514
        %v3516 = vsel %vm2467, %v3429, %v3515
        %v3517 = vsel %vm2469, %v3438, %v3516
        %v3518 = vsel %vm2457, %v3456, %v3447
        %v3519 = vsel %vm2459, %v3465, %v3518
        %v3520 = vsel %vm2461, %v3474, %v3519
        %v3521 = vsel %vm2463, %v3483, %v3520
        %v3522 = vsel %vm2465, %v3492, %v3521
        %v3523 = vsel %vm2467, %v3501, %v3522
        %v3524 = vsel %vm2469, %v3510, %v3523
        %v3527 = vadd.f32 %v3029, %v3517
        %v3528 = vadd.f32 %v3030, %v3524
        %3529 = vst.msk [vmem:[#allocation5] sm:$0xff] %vm3022, %v3527
        %3530 = vst.msk [vmem:[#allocation5 + $0x8] sm:$0xff] %vm3022, %v3528
        %p3531 = scmp.eq.s32.totalorder %s35, 1
        // Predicated region
        $region81: #{tpu_custom_call.1} parent=59 // pred_check
          %p3532 = pneg %p3531
        $region82: #{tpu_custom_call.1} parent=59 // pred_check_branch
          %3534 = sbr.rel (%p3532) target = $region84
        $region83: #{tpu_custom_call.1} parent=59 // pred_region
          %v3535 = vld [vmem:[#allocation5] sm:$0xff]
          %v3536 = vld [vmem:[#allocation5 + $0x8] sm:$0xff]
          %v3537 = vld [vmem:[#allocation3] sm:$0xff]
          %v3538 = vld [vmem:[#allocation3 + $0x8] sm:$0xff]
          %v3539 = vld [vmem:[#allocation4] sm:$0xff]
          %v3540 = vld [vmem:[#allocation4 + $0x8] sm:$0xff]
          %v3541 = vlog2.pop %v3539
          %v3542 = vmul.f32 %v3541, 0.6931472
          %v3543 = vlog2.pop %v3540
          %v3544 = vmul.f32 %v3543, 0.6931472
          %v3545 = vadd.f32 %v3537, %v3542
          %v3546 = vadd.f32 %v3538, %v3544
          %v3547 = vsub.f32 %v3535, %v3545
          %v3548 = vsub.f32 %v3536, %v3546
          %vm3549 = vcmp.ne.s32.totalorder %v2208, 0
          %vm3550 = vcmp.ne.s32.totalorder %v2209, 0
          %v3551 = vsel %vm3549, %v3547, 0.0
          %v3552 = vsel %vm3550, %v3548, 0.0
          %3553 = vst.msk [vmem:[%s544] sm:$0xff] %vm3022, %v3551
          %3554 = vst.msk [vmem:[%s544 + $0x8] sm:$0xff] %vm3022, %v3552
        $region84: #{tpu_custom_call.1} parent=59 // pred_fallthru
          _
        %s3555 = smul.u32 2, %s34
        %p3556 = scmp.lt.s32.totalorder %s3555, 3
        %s3557 = scalar_select %p3556, %s3555, 3
        %s3558 = smul.addr %s3557, 8
        %s3559 = scalar_lea.vmem %s10, %s3558
        // Predicated region
        $region85: #{tpu_custom_call.1} parent=59 // pred_check
          %p3560 = pneg %p300
        $region86: #{tpu_custom_call.1} parent=59 // pred_check_branch
          %3562 = sbr.rel (%p3560) target = $region88
        $region87: #{tpu_custom_call.1} parent=59 // pred_region
          %s3563 = smul.u32 2, %s34
        $region88: #{tpu_custom_call.1} parent=59 // pred_fallthru
          _
      $region60: #{tpu_custom_call.1} parent=5 // pred_fallthru
        _
      %p3564 = scmp.le.s32.totalorder 2, %s25
      // Predicated region
      $region89: #{tpu_custom_call.1} parent=5 // pred_check
        %p3565 = pneg %p3564
      $region90: #{tpu_custom_call.1} parent=5 // pred_check_branch
        %3567 = sbr.rel (%p3565) target = $region92
      $region91: #{tpu_custom_call.1} parent=5 // pred_region
        %s3568 = ssub.s32 %s25, 2
        // Predicated region
        $region93: #{tpu_custom_call.1} parent=91 // pred_check
          %p3569 = pneg %p306
        $region94: #{tpu_custom_call.1} parent=91 // pred_check_branch
          %3571 = sbr.rel (%p3569) target = $region96
        $region95: #{tpu_custom_call.1} parent=91 // pred_region
          %s3572 = smul.u32 2, %s36
          %p3573 = scmp.lt.s32.totalorder %s3572, 3
          %s3574 = scalar_select %p3573, %s3572, 3
          %s3575 = smul.addr %s3574, 8
          %s3576 = scalar_lea.vmem %s10, %s3575
        $region96: #{tpu_custom_call.1} parent=91 // pred_fallthru
          _
      $region92: #{tpu_custom_call.1} parent=5 // pred_fallthru
        _
    $region6: #{tpu_custom_call.1} parent=1 // loop_footer
      %s29 = sadd.s32 1, %s25
    $region7: #{tpu_custom_call.1} parent=1 // loop_footer_branch
      %24 = sbr.rel target = $region3
    $region8: #{tpu_custom_call.1} parent=1 // loop_exit
      _
    %3577 = vsyncpa [#allocation7], 1
    %s3578 = scalar_lea.sflag [#allocation7], 1
    %3579 = vsyncpa %s3578, 1
    %3580 = vsyncpa [#allocation9], 1
    %s3581 = scalar_lea.sflag [#allocation9], 1
    %3582 = vsyncpa %s3581, 1
    %3583 = vsyncpa [#allocation12], 1
    %s3584 = scalar_lea.sflag [#allocation12], 1
    %3585 = vsyncpa %s3584, 1

</llo_original>
